<compile_context>
chip_gen: v7x
topology: tpu7x:2x2x1
jax: 0.10.0
libtpu: 0.0.40
codegen_flags: <defaults>
</compile_context>

<pallas_src>
import math
import functools

import jax
import jax.numpy as jnp
import numpy as np
from jax.experimental import pallas as pl
from jax.experimental.pallas import tpu as pltpu

# ----------------------------- configuration ------------------------------
IN_FEATURES = 2          # e.g. 2-D coordinates
HIDDEN_FEATURES = 32
HIDDEN_LAYERS = 2        # number of LinearBlock(hidden, hidden) blocks
OUT_FEATURES = 3         # e.g. RGB
NUM_FREQUENCIES = 10
PE_FEATURES = IN_FEATURES * 2 * NUM_FREQUENCIES       # 40
NUM_LAYERS = HIDDEN_LAYERS + 2                        # 4 matmul layers total


def _round_up(v, m):
    return (v + m - 1) // m * m


# Common padded feature width for the packed weight slab (multiple of 8).
MLP_PAD = _round_up(max(PE_FEATURES, HIDDEN_FEATURES, OUT_FEATURES), 8)  # 40
OUT_PAD = _round_up(OUT_FEATURES, 8)                  # 8 -> unmasked sublane store

N_POINTS = 4096          # number of coordinate samples (small demo size)
TILE_N = 1024            # points per grid step (lane axis, multiple of 128)


# ------------------------------ Pallas kernel ------------------------------
def relu_pe_kernel(x_ref, freq_ref, phase_ref, w_ref, b_ref, o_ref,
                   *, in_features, num_layers, out_pad):
    """Fused PosEncoding + MLP forward for one (features, TILE_N) tile.

    x_ref     : (IN, TILE_N)            f32   coordinates, points on lanes
    freq_ref  : (IN, MLP_PAD, 1)        f32   per-input-dim frequency spread
    phase_ref : (MLP_PAD, 1)            f32   0 for sin rows, pi/2 for cos rows
    w_ref     : (L, MLP_PAD, MLP_PAD)   bf16  transposed, zero-padded weights
    b_ref     : (L, MLP_PAD, 1)         f32   zero-padded biases
    o_ref     : (OUT_PAD, TILE_N)       f32   output tile (lane-dense store)
    """
    # ---- fused positional encoding: one sin over a dense (MLP_PAD, TN) tile ----
    z = freq_ref[0] * x_ref[0:1, :]                       # (MLP_PAD,1)*(1,TN)
    for d in range(1, in_features):
        z = z + freq_ref[d] * x_ref[d:d + 1, :]
    h = jnp.sin(z + phase_ref[...])                       # f32 (MLP_PAD, TN)

    # ---- MLP: all layers share the padded (MLP_PAD, MLP_PAD) weight slot ----
    # Padded rows/cols are zero, so padded activations stay exactly 0 through
    # the ReLU chain; only rows [:OUT_FEATURES] of the final result are real.
    for l in range(num_layers):
        acc = jnp.dot(w_ref[l], h.astype(jnp.bfloat16),   # bf16 @ MXU, f32 acc
                      preferred_element_type=jnp.float32)
        acc = acc + b_ref[l]                              # f32 bias add (VPU)
        h = jnp.maximum(acc, 0.0) if l < num_layers - 1 else acc

    o_ref[...] = h[:out_pad, :].astype(o_ref.dtype)       # lane-dense store


# ------------------------------ host wrapper -------------------------------
@functools.partial(jax.jit, static_argnames=("tile_n",))
def relu_pe_forward(x, w_slab, b_slab, freq, phase, *, tile_n=TILE_N):
    """x: (N, IN_FEATURES) f32.  Returns (N, OUT_FEATURES) f32."""
    n, in_f = x.shape
    n_pad = _round_up(n, tile_n)

    x_t = jnp.transpose(x)                                # (IN, N), points on lanes
    if n_pad != n:
        x_t = jnp.pad(x_t, ((0, 0), (0, n_pad - n)))

    num_layers = w_slab.shape[0]
    kernel = functools.partial(
        relu_pe_kernel,
        in_features=in_f,
        num_layers=num_layers,
        out_pad=OUT_PAD,
    )

    out_t = pl.pallas_call(
        kernel,
        out_shape=jax.ShapeDtypeStruct((OUT_PAD, n_pad), jnp.float32),
        grid_spec=pltpu.PrefetchScalarGridSpec(
            num_scalar_prefetch=0,
            grid=(n_pad // tile_n,),
            in_specs=[
                # x: tiled over points (lane axis)
                pl.BlockSpec((in_f, tile_n), lambda i: (0, i)),
                # PE constants + packed params: one full block, constant index
                # map -> fetched once, resident across the whole grid.
                pl.BlockSpec(freq.shape, lambda i: (0, 0, 0)),
                pl.BlockSpec(phase.shape, lambda i: (0, 0)),
                pl.BlockSpec(w_slab.shape, lambda i: (0, 0, 0)),
                pl.BlockSpec(b_slab.shape, lambda i: (0, 0, 0)),
            ],
            out_specs=pl.BlockSpec((OUT_PAD, tile_n), lambda i: (0, i)),
        ),
        compiler_params=pltpu.CompilerParams(
            dimension_semantics=("parallel",)),
    )(x_t, freq, phase, w_slab, b_slab)

    # Drop the padded output rows/cols and return module layout (N, OUT).
    return jnp.transpose(out_t[:OUT_FEATURES, :n])


# --------------------- PE constants & parameter packing ---------------------
def build_pe_constants():
    """Frequency-spread / phase vectors for pe = sin(freq * x_d + phase).

    Feature ordering matches concat_i [sin(2^i*pi*x), cos(2^i*pi*x)]:
      k = i*2*IN + s*IN + d,  s=0 -> sin, s=1 -> cos (phase pi/2).
    """
    freq = np.zeros((IN_FEATURES, MLP_PAD, 1), np.float32)
    phase = np.zeros((MLP_PAD, 1), np.float32)
    for i in range(NUM_FREQUENCIES):
        f = (2.0 ** i) * math.pi
        for s in range(2):
            for d in range(IN_FEATURES):
                k = i * 2 * IN_FEATURES + s * IN_FEATURES + d
                freq[d, k, 0] = f
                phase[k, 0] = s * (math.pi / 2.0)
    return jnp.asarray(freq), jnp.asarray(phase)


def pack_params(params):
    """Pack [w0,b0,...,w3,b3] into transposed, zero-padded slabs.

    w_slab[l] = W_l^T padded to (MLP_PAD, MLP_PAD), stored bf16 (MXU operand).
    b_slab[l] = b_l   padded to (MLP_PAD, 1),       stored f32.
    """
    n_layers = len(params) // 2
    w_slab = np.zeros((n_layers, MLP_PAD, MLP_PAD), np.float32)
    b_slab = np.zeros((n_layers, MLP_PAD, 1), np.float32)
    for l in range(n_layers):
        w = np.asarray(params[2 * l])                 # (fan_in, fan_out)
        b = np.asarray(params[2 * l + 1]).reshape(-1) # (fan_out,)
        fan_in, fan_out = w.shape
        w_slab[l, :fan_out, :fan_in] = w.T
        b_slab[l, :fan_out, 0] = b
    return jnp.asarray(w_slab, jnp.bfloat16), jnp.asarray(b_slab, jnp.float32)


# ------------------------- deterministic parameters ------------------------
def init_params(key):
    """Shapes follow the PyTorch module; weights stored as (fan_in, fan_out)."""
    params = []
    dims = [PE_FEATURES] + [HIDDEN_FEATURES] * (HIDDEN_LAYERS + 1) + [OUT_FEATURES]
    n_layers = len(dims) - 1
    for l in range(n_layers):
        fan_in, fan_out = dims[l], dims[l + 1]
        key, kw, kb = jax.random.split(key, 3)
        if l < n_layers - 1:
            # LinearBlock: kaiming_normal_(fan_in, relu)
            std = math.sqrt(2.0 / fan_in)
            w = std * jax.random.normal(kw, (fan_in, fan_out), jnp.float32)
        else:
            # Final nn.Linear: PyTorch-default uniform-ish
            bound = 1.0 / math.sqrt(fan_in)
            w = jax.random.uniform(kw, (fan_in, fan_out), jnp.float32, -bound, bound)
        bound = 1.0 / math.sqrt(fan_in)
        b = jax.random.uniform(kb, (fan_out,), jnp.float32, -bound, bound)
        params += [w, b]
    return params


# ------------------------------ JAX reference -------------------------------
def relu_pe_reference(x, params):
    """Reference matching the module; dots use bf16 inputs / f32 accumulation,
    mirroring the kernel's intentional bf16-at-the-MXU casting (the only
    deviation from pure-f32 module semantics, O(1e-2) on the outputs)."""
    feats = []
    for i in range(NUM_FREQUENCIES):
        f = (2.0 ** i) * math.pi
        feats.append(jnp.sin(f * x))
        feats.append(jnp.cos(f * x))
    h = jnp.concatenate(feats, axis=-1)
    n_layers = len(params) // 2
    for l in range(n_layers):
        w, b = params[2 * l], params[2 * l + 1]
        acc = jnp.dot(h.astype(jnp.bfloat16), w.astype(jnp.bfloat16),
                      preferred_element_type=jnp.float32) + b
        h = jnp.maximum(acc, 0.0) if l < n_layers - 1 else acc
    return h


# ---------------------------------- main ------------------------------------
if __name__ == "__main__":
    key = jax.random.PRNGKey(0)
    key, kx = jax.random.split(key)
    # coordinates in [-1, 1], shape (N, in_features)
    x = jax.random.uniform(kx, (N_POINTS, IN_FEATURES), jnp.float32, -1.0, 1.0)

    params = init_params(key)
    w_slab, b_slab = pack_params(params)
    freq, phase = build_pe_constants()

    out = relu_pe_forward(x, w_slab, b_slab, freq, phase)
    out = jax.block_until_ready(out)

    ref = jax.block_until_ready(relu_pe_reference(x, params))
    # Tolerance covers bf16 rounding at the dot inputs and cos(t) vs
    # sin(t + pi/2) at large PE arguments; structural bugs would be O(1).
    np.testing.assert_allclose(np.asarray(out), np.asarray(ref),
                               rtol=2e-2, atol=2e-2)
    print("KERNEL_OK")
</pallas_src>

<mosaic_0001>
module attributes {stable_mosaic.version = 11 : i64} {
  func.func @relu_pe_kernel(%arg0: i32, %arg1: memref<2x1024xf32, #tpu.memory_space<vmem>>, %arg2: memref<2x40x1xf32, #tpu.memory_space<vmem>>, %arg3: memref<40x1xf32, #tpu.memory_space<vmem>>, %arg4: memref<4x40x40xbf16, #tpu.memory_space<vmem>>, %arg5: memref<4x40x1xf32, #tpu.memory_space<vmem>>, %arg6: memref<8x1024xf32, #tpu.memory_space<vmem>>) attributes {dimension_semantics = [#tpu.dimension_semantics<parallel>], iteration_bounds = array<i64: 4>, scalar_prefetch = 0 : i64, scratch_operands = 0 : i64, tpu.core_type = #tpu.core_type<tc>, window_params = [{transform_indices = @transform_0, window_bounds = array<i64: 2, 1024>}, {pipeline_mode = #tpu.pipeline_mode<synchronous>, transform_indices = @transform_1, window_bounds = array<i64: 2, 40, 1>}, {pipeline_mode = #tpu.pipeline_mode<synchronous>, transform_indices = @transform_2, window_bounds = array<i64: 40, 1>}, {pipeline_mode = #tpu.pipeline_mode<synchronous>, transform_indices = @transform_3, window_bounds = array<i64: 4, 40, 40>}, {pipeline_mode = #tpu.pipeline_mode<synchronous>, transform_indices = @transform_4, window_bounds = array<i64: 4, 40, 1>}, {transform_indices = @transform_5, window_bounds = array<i64: 8, 1024>}]} {
    %c0 = arith.constant 0 : index
    %c0_0 = arith.constant 0 : index
    %c0_1 = arith.constant 0 : index
    %0 = vector.load %arg2[%c0, %c0_0, %c0_1] : memref<2x40x1xf32, #tpu.memory_space<vmem>>, vector<1x40x1xf32>
    %1 = vector.shape_cast %0 : vector<1x40x1xf32> to vector<40x1xf32>
    %c0_2 = arith.constant 0 : index
    %c0_3 = arith.constant 0 : index
    %2 = vector.load %arg1[%c0_2, %c0_3] : memref<2x1024xf32, #tpu.memory_space<vmem>>, vector<1x1024xf32>
    %3 = vector.broadcast %1 : vector<40x1xf32> to vector<40x1024xf32>
    %4 = vector.broadcast %2 : vector<1x1024xf32> to vector<40x1024xf32>
    %5 = arith.mulf %3, %4 : vector<40x1024xf32>
    %c1 = arith.constant 1 : index
    %c0_4 = arith.constant 0 : index
    %c0_5 = arith.constant 0 : index
    %6 = vector.load %arg2[%c1, %c0_4, %c0_5] : memref<2x40x1xf32, #tpu.memory_space<vmem>>, vector<1x40x1xf32>
    %7 = vector.shape_cast %6 : vector<1x40x1xf32> to vector<40x1xf32>
    %c1_6 = arith.constant 1 : index
    %c0_7 = arith.constant 0 : index
    %8 = vector.load %arg1[%c1_6, %c0_7] : memref<2x1024xf32, #tpu.memory_space<vmem>>, vector<1x1024xf32>
    %9 = vector.broadcast %7 : vector<40x1xf32> to vector<40x1024xf32>
    %10 = vector.broadcast %8 : vector<1x1024xf32> to vector<40x1024xf32>
    %11 = arith.mulf %9, %10 : vector<40x1024xf32>
    %12 = arith.addf %5, %11 : vector<40x1024xf32>
    %c0_8 = arith.constant 0 : index
    %c0_9 = arith.constant 0 : index
    %13 = vector.load %arg3[%c0_8, %c0_9] : memref<40x1xf32, #tpu.memory_space<vmem>>, vector<40x1xf32>
    %14 = vector.broadcast %13 : vector<40x1xf32> to vector<40x1024xf32>
    %15 = arith.addf %12, %14 : vector<40x1024xf32>
    %16 = math.sin %15 : vector<40x1024xf32>
    %c0_10 = arith.constant 0 : index
    %c0_11 = arith.constant 0 : index
    %c0_12 = arith.constant 0 : index
    %17 = vector.load %arg4[%c0_10, %c0_11, %c0_12] : memref<4x40x40xbf16, #tpu.memory_space<vmem>>, vector<1x40x40xbf16>
    %18 = vector.shape_cast %17 : vector<1x40x40xbf16> to vector<40x40xbf16>
    %19 = arith.truncf %16 : vector<40x1024xf32> to vector<40x1024xbf16>
    %cst = arith.constant dense<0.000000e+00> : vector<40x1024xf32>
    %20 = tpu.matmul %18, %19, %cst {dimension_numbers = #tpu.dot_dimension_numbers<[1], [0], [0], [1], [0, 0, 1, 1], [], []>} : vector<40x40xbf16>, vector<40x1024xbf16>, vector<40x1024xf32> -> vector<40x1024xf32>
    %c0_13 = arith.constant 0 : index
    %c0_14 = arith.constant 0 : index
    %c0_15 = arith.constant 0 : index
    %21 = vector.load %arg5[%c0_13, %c0_14, %c0_15] : memref<4x40x1xf32, #tpu.memory_space<vmem>>, vector<1x40x1xf32>
    %22 = vector.shape_cast %21 : vector<1x40x1xf32> to vector<40x1xf32>
    %23 = vector.broadcast %22 : vector<40x1xf32> to vector<40x1024xf32>
    %24 = arith.addf %20, %23 : vector<40x1024xf32>
    %cst_16 = arith.constant 0.000000e+00 : f32
    %25 = vector.broadcast %cst_16 : f32 to vector<40x1024xf32>
    %26 = arith.maximumf %24, %25 : vector<40x1024xf32>
    %c1_17 = arith.constant 1 : index
    %c0_18 = arith.constant 0 : index
    %c0_19 = arith.constant 0 : index
    %27 = vector.load %arg4[%c1_17, %c0_18, %c0_19] : memref<4x40x40xbf16, #tpu.memory_space<vmem>>, vector<1x40x40xbf16>
    %28 = vector.shape_cast %27 : vector<1x40x40xbf16> to vector<40x40xbf16>
    %29 = arith.truncf %26 : vector<40x1024xf32> to vector<40x1024xbf16>
    %cst_20 = arith.constant dense<0.000000e+00> : vector<40x1024xf32>
    %30 = tpu.matmul %28, %29, %cst_20 {dimension_numbers = #tpu.dot_dimension_numbers<[1], [0], [0], [1], [0, 0, 1, 1], [], []>} : vector<40x40xbf16>, vector<40x1024xbf16>, vector<40x1024xf32> -> vector<40x1024xf32>
    %c1_21 = arith.constant 1 : index
    %c0_22 = arith.constant 0 : index
    %c0_23 = arith.constant 0 : index
    %31 = vector.load %arg5[%c1_21, %c0_22, %c0_23] : memref<4x40x1xf32, #tpu.memory_space<vmem>>, vector<1x40x1xf32>
    %32 = vector.shape_cast %31 : vector<1x40x1xf32> to vector<40x1xf32>
    %33 = vector.broadcast %32 : vector<40x1xf32> to vector<40x1024xf32>
    %34 = arith.addf %30, %33 : vector<40x1024xf32>
    %cst_24 = arith.constant 0.000000e+00 : f32
    %35 = vector.broadcast %cst_24 : f32 to vector<40x1024xf32>
    %36 = arith.maximumf %34, %35 : vector<40x1024xf32>
    %c2 = arith.constant 2 : index
    %c0_25 = arith.constant 0 : index
    %c0_26 = arith.constant 0 : index
    %37 = vector.load %arg4[%c2, %c0_25, %c0_26] : memref<4x40x40xbf16, #tpu.memory_space<vmem>>, vector<1x40x40xbf16>
    %38 = vector.shape_cast %37 : vector<1x40x40xbf16> to vector<40x40xbf16>
    %39 = arith.truncf %36 : vector<40x1024xf32> to vector<40x1024xbf16>
    %cst_27 = arith.constant dense<0.000000e+00> : vector<40x1024xf32>
    %40 = tpu.matmul %38, %39, %cst_27 {dimension_numbers = #tpu.dot_dimension_numbers<[1], [0], [0], [1], [0, 0, 1, 1], [], []>} : vector<40x40xbf16>, vector<40x1024xbf16>, vector<40x1024xf32> -> vector<40x1024xf32>
    %c2_28 = arith.constant 2 : index
    %c0_29 = arith.constant 0 : index
    %c0_30 = arith.constant 0 : index
    %41 = vector.load %arg5[%c2_28, %c0_29, %c0_30] : memref<4x40x1xf32, #tpu.memory_space<vmem>>, vector<1x40x1xf32>
    %42 = vector.shape_cast %41 : vector<1x40x1xf32> to vector<40x1xf32>
    %43 = vector.broadcast %42 : vector<40x1xf32> to vector<40x1024xf32>
    %44 = arith.addf %40, %43 : vector<40x1024xf32>
    %cst_31 = arith.constant 0.000000e+00 : f32
    %45 = vector.broadcast %cst_31 : f32 to vector<40x1024xf32>
    %46 = arith.maximumf %44, %45 : vector<40x1024xf32>
    %c3 = arith.constant 3 : index
    %c0_32 = arith.constant 0 : index
    %c0_33 = arith.constant 0 : index
    %47 = vector.load %arg4[%c3, %c0_32, %c0_33] : memref<4x40x40xbf16, #tpu.memory_space<vmem>>, vector<1x40x40xbf16>
    %48 = vector.shape_cast %47 : vector<1x40x40xbf16> to vector<40x40xbf16>
    %49 = arith.truncf %46 : vector<40x1024xf32> to vector<40x1024xbf16>
    %cst_34 = arith.constant dense<0.000000e+00> : vector<40x1024xf32>
    %50 = tpu.matmul %48, %49, %cst_34 {dimension_numbers = #tpu.dot_dimension_numbers<[1], [0], [0], [1], [0, 0, 1, 1], [], []>} : vector<40x40xbf16>, vector<40x1024xbf16>, vector<40x1024xf32> -> vector<40x1024xf32>
    %c3_35 = arith.constant 3 : index
    %c0_36 = arith.constant 0 : index
    %c0_37 = arith.constant 0 : index
    %51 = vector.load %arg5[%c3_35, %c0_36, %c0_37] : memref<4x40x1xf32, #tpu.memory_space<vmem>>, vector<1x40x1xf32>
    %52 = vector.shape_cast %51 : vector<1x40x1xf32> to vector<40x1xf32>
    %53 = vector.broadcast %52 : vector<40x1xf32> to vector<40x1024xf32>
    %54 = arith.addf %50, %53 : vector<40x1024xf32>
    %55 = vector.extract_strided_slice %54 {offsets = [0, 0], sizes = [8, 1024], strides = [1, 1]} : vector<40x1024xf32> to vector<8x1024xf32>
    %c0_38 = arith.constant 0 : index
    %c0_39 = arith.constant 0 : index
    %56 = vector.load %arg6[%c0_38, %c0_39] : memref<8x1024xf32, #tpu.memory_space<vmem>>, vector<8x1024xf32>
    tpu.vector_store %arg6[%c0_38, %c0_39], %55 {strides = array<i32>} : memref<8x1024xf32, #tpu.memory_space<vmem>>, vector<8x1024xf32>,
    return
  }
  func.func @transform_0(%arg0: i32) -> (i32, i32) {
    %c0_i32 = arith.constant 0 : i32
    %c0_i32_0 = arith.constant 0 : i32
    return %c0_i32, %arg0 : i32, i32
  }
  func.func @transform_1(%arg0: i32) -> (i32, i32, i32) {
    %c0_i32 = arith.constant 0 : i32
    %c0_i32_0 = arith.constant 0 : i32
    %c0_i32_1 = arith.constant 0 : i32
    %c0_i32_2 = arith.constant 0 : i32
    return %c0_i32, %c0_i32_0, %c0_i32_1 : i32, i32, i32
  }
  func.func @transform_2(%arg0: i32) -> (i32, i32) {
    %c0_i32 = arith.constant 0 : i32
    %c0_i32_0 = arith.constant 0 : i32
    %c0_i32_1 = arith.constant 0 : i32
    return %c0_i32, %c0_i32_0 : i32, i32
  }
  func.func @transform_3(%arg0: i32) -> (i32, i32, i32) {
    %c0_i32 = arith.constant 0 : i32
    %c0_i32_0 = arith.constant 0 : i32
    %c0_i32_1 = arith.constant 0 : i32
    %c0_i32_2 = arith.constant 0 : i32
    return %c0_i32, %c0_i32_0, %c0_i32_1 : i32, i32, i32
  }
  func.func @transform_4(%arg0: i32) -> (i32, i32, i32) {
    %c0_i32 = arith.constant 0 : i32
    %c0_i32_0 = arith.constant 0 : i32
    %c0_i32_1 = arith.constant 0 : i32
    %c0_i32_2 = arith.constant 0 : i32
    return %c0_i32, %c0_i32_0, %c0_i32_1 : i32, i32, i32
  }
  func.func @transform_5(%arg0: i32) -> (i32, i32) {
    %c0_i32 = arith.constant 0 : i32
    %c0_i32_0 = arith.constant 0 : i32
    return %c0_i32, %arg0 : i32, i32
  }
}

</mosaic_0001>

<llo_original>
// kernel: relu_pe_forward.1
$region0: #{relu_pe_forward.1}
  #allocation0 [shape = 'u32[]', space=smem, size = 0x4, offset = 0x4, fixed_abs, tag = 'smem constant byte address 0x4 - core index']
  #allocation1 [shape = 'u32[144,128]{1,0:T(1,128)}', space=vmem, size = 0x12000, scoped, tag = 'internal scratch']
  %s0 = inlined_call_operand.vmem [shape: f32[2,4096], index: 0, kind: input, shape index: {}]
  %s1 = inlined_call_operand.vmem [shape: f32[2,40,1], index: 1, kind: input, shape index: {}]
  %s2 = inlined_call_operand.vmem [shape: f32[40,1], index: 2, kind: input, shape index: {}]
  %s3 = inlined_call_operand.vmem [shape: bf16[4,40,40], index: 3, kind: input, shape index: {}]
  %s4 = inlined_call_operand.vmem [shape: f32[4,40,1], index: 4, kind: input, shape index: {}]
  %s5 = inlined_call_operand.vmem [shape: f32[8,4096], index: 5, kind: output, shape index: {}]
  %s6 = sld [smem:[#allocation0]]
  $region53: #{relu_pe_forward.1} parent=0
    _
  %s8 = ssub.s32 1, %s6
  %s9 = scalar_select 0, %s8, %s6
  loop: start=0, step=1, limit=6
  $region2: #{relu_pe_forward.1} parent=0 // loop_pre_header
    _
  $region3: #{relu_pe_forward.1} parent=0 // loop_header
    %s11 = sphi 0, %s15
    %p12 = scmp.ge.s32.totalorder %s11, 6
    %s21 = sphi 0, %s23
    %s24 = sphi 0, %s21
    %s25 = sphi 0, %s24
    %s41 = sphi 0, %s25
    %s45 = sphi 0, %s45
    %s47 = sphi 0, %s45
    %s48 = sphi 0, %s47
    %s62 = sphi 0, %s48
    %s66 = sphi 0, %s66
    %s68 = sphi 0, %s66
    %s69 = sphi 0, %s68
    %s83 = sphi 0, %s69
    %s87 = sphi 0, %s87
    %s89 = sphi 0, %s87
    %s90 = sphi 0, %s89
    %s104 = sphi 0, %s90
    %s108 = sphi 0, %s108
    %s110 = sphi 0, %s108
    %s111 = sphi 0, %s110
    %s125 = sphi 0, %s111
    %s131 = sphi 0, %s133
    %s134 = sphi 0, %s131
    %s135 = sphi 0, %s134
    %s151 = sphi 0, %s135
  $region4: #{relu_pe_forward.1} parent=0 // loop_header_branch
    %14 = sbr.rel (%p12) target = $region8
  $region5: #{relu_pe_forward.1} parent=0 // loop_body
    %s16 = ssub.s32 %s11, 1
    %s17 = ssub.s32 %s11, 2
    %s18 = sadd.s32 %s11, 1
    %s19 = ssub.s32 %s11, %s18
    %p20 = scmp.eq.s32.totalorder %s19, 0
    %s22 = sadd.s32 %s21, 1
    %s23 = scalar_select %p20, %s21, %s22
    %p26 = pneg %p20
    %p27 = scmp.eq.s32.totalorder %s11, 3
    %p28 = por %p26, %p27
    %p29 = scmp.ne.s32.totalorder %s21, %s24
    %p30 = scmp.eq.s32.totalorder %s11, 0
    %p31 = por %p29, %p30
    %p32 = scmp.ne.s32.totalorder %s21, %s24
    %p33 = scmp.eq.s32.totalorder %s16, 3
    %p34 = por %p32, %p33
    %p35 = scmp.ne.s32.totalorder %s24, %s25
    %p36 = scmp.eq.s32.totalorder %s16, 0
    %p37 = por %p35, %p36
    %p38 = scmp.ne.s32.totalorder %s24, %s25
    %p39 = scmp.eq.s32.totalorder %s17, 3
    %p40 = por %p38, %p39
    %p42 = scmp.ne.s32.totalorder %s25, %s41
    %p43 = scmp.eq.s32.totalorder %s17, 0
    %p44 = por %p42, %p43
    %s46 = sadd.s32 %s45, 1
    %p49 = scmp.eq.s32.totalorder %s11, 3
    %p50 = scmp.ne.s32.totalorder %s45, %s47
    %p51 = scmp.eq.s32.totalorder %s11, 0
    %p52 = por %p50, %p51
    %p53 = scmp.ne.s32.totalorder %s45, %s47
    %p54 = scmp.eq.s32.totalorder %s16, 3
    %p55 = por %p53, %p54
    %p56 = scmp.ne.s32.totalorder %s47, %s48
    %p57 = scmp.eq.s32.totalorder %s16, 0
    %p58 = por %p56, %p57
    %p59 = scmp.ne.s32.totalorder %s47, %s48
    %p60 = scmp.eq.s32.totalorder %s17, 3
    %p61 = por %p59, %p60
    %p63 = scmp.ne.s32.totalorder %s48, %s62
    %p64 = scmp.eq.s32.totalorder %s17, 0
    %p65 = por %p63, %p64
    %s67 = sadd.s32 %s66, 1
    %p70 = scmp.eq.s32.totalorder %s11, 3
    %p71 = scmp.ne.s32.totalorder %s66, %s68
    %p72 = scmp.eq.s32.totalorder %s11, 0
    %p73 = por %p71, %p72
    %p74 = scmp.ne.s32.totalorder %s66, %s68
    %p75 = scmp.eq.s32.totalorder %s16, 3
    %p76 = por %p74, %p75
    %p77 = scmp.ne.s32.totalorder %s68, %s69
    %p78 = scmp.eq.s32.totalorder %s16, 0
    %p79 = por %p77, %p78
    %p80 = scmp.ne.s32.totalorder %s68, %s69
    %p81 = scmp.eq.s32.totalorder %s17, 3
    %p82 = por %p80, %p81
    %p84 = scmp.ne.s32.totalorder %s69, %s83
    %p85 = scmp.eq.s32.totalorder %s17, 0
    %p86 = por %p84, %p85
    %s88 = sadd.s32 %s87, 1
    %p91 = scmp.eq.s32.totalorder %s11, 3
    %p92 = scmp.ne.s32.totalorder %s87, %s89
    %p93 = scmp.eq.s32.totalorder %s11, 0
    %p94 = por %p92, %p93
    %p95 = scmp.ne.s32.totalorder %s87, %s89
    %p96 = scmp.eq.s32.totalorder %s16, 3
    %p97 = por %p95, %p96
    %p98 = scmp.ne.s32.totalorder %s89, %s90
    %p99 = scmp.eq.s32.totalorder %s16, 0
    %p100 = por %p98, %p99
    %p101 = scmp.ne.s32.totalorder %s89, %s90
    %p102 = scmp.eq.s32.totalorder %s17, 3
    %p103 = por %p101, %p102
    %p105 = scmp.ne.s32.totalorder %s90, %s104
    %p106 = scmp.eq.s32.totalorder %s17, 0
    %p107 = por %p105, %p106
    %s109 = sadd.s32 %s108, 1
    %p112 = scmp.eq.s32.totalorder %s11, 3
    %p113 = scmp.ne.s32.totalorder %s108, %s110
    %p114 = scmp.eq.s32.totalorder %s11, 0
    %p115 = por %p113, %p114
    %p116 = scmp.ne.s32.totalorder %s108, %s110
    %p117 = scmp.eq.s32.totalorder %s16, 3
    %p118 = por %p116, %p117
    %p119 = scmp.ne.s32.totalorder %s110, %s111
    %p120 = scmp.eq.s32.totalorder %s16, 0
    %p121 = por %p119, %p120
    %p122 = scmp.ne.s32.totalorder %s110, %s111
    %p123 = scmp.eq.s32.totalorder %s17, 3
    %p124 = por %p122, %p123
    %p126 = scmp.ne.s32.totalorder %s111, %s125
    %p127 = scmp.eq.s32.totalorder %s17, 0
    %p128 = por %p126, %p127
    %s129 = ssub.s32 %s11, %s18
    %p130 = scmp.eq.s32.totalorder %s129, 0
    %s132 = sadd.s32 %s131, 1
    %s133 = scalar_select %p130, %s131, %s132
    %p136 = pneg %p130
    %p137 = scmp.eq.s32.totalorder %s11, 3
    %p138 = por %p136, %p137
    %p139 = scmp.ne.s32.totalorder %s131, %s134
    %p140 = scmp.eq.s32.totalorder %s11, 0
    %p141 = por %p139, %p140
    %p142 = scmp.ne.s32.totalorder %s131, %s134
    %p143 = scmp.eq.s32.totalorder %s16, 3
    %p144 = por %p142, %p143
    %p145 = scmp.ne.s32.totalorder %s134, %s135
    %p146 = scmp.eq.s32.totalorder %s16, 0
    %p147 = por %p145, %p146
    %p148 = scmp.ne.s32.totalorder %s134, %s135
    %p149 = scmp.eq.s32.totalorder %s17, 3
    %p150 = por %p148, %p149
    %p152 = scmp.ne.s32.totalorder %s135, %s151
    %p153 = scmp.eq.s32.totalorder %s17, 0
    %p154 = por %p152, %p153
    %p155 = scmp.le.s32.totalorder 1, %s11
    %p156 = scmp.lt.s32.totalorder %s11, 5
    %p157 = pnand %p155, %p156
    %p158 = pneg %p157
    // Predicated region
    $region9: #{relu_pe_forward.1} parent=5 // pred_check
      _
    $region10: #{relu_pe_forward.1} parent=5 // pred_check_branch
      %160 = sbr.rel (%p157) target = $region12
    $region11: #{relu_pe_forward.1} parent=5 // pred_region
      %s161 = ssub.s32 %s11, 1
      // Predicated region
      $region13: #{relu_pe_forward.1} parent=11 // pred_check
        %p162 = pneg %p58
      $region14: #{relu_pe_forward.1} parent=11 // pred_check_branch
        %164 = sbr.rel (%p162) target = $region16
      $region15: #{relu_pe_forward.1} parent=11 // pred_region
        _
      $region16: #{relu_pe_forward.1} parent=11 // pred_fallthru
        _
      // Predicated region
      $region17: #{relu_pe_forward.1} parent=11 // pred_check
        %p165 = pneg %p79
      $region18: #{relu_pe_forward.1} parent=11 // pred_check_branch
        %167 = sbr.rel (%p165) target = $region20
      $region19: #{relu_pe_forward.1} parent=11 // pred_region
        _
      $region20: #{relu_pe_forward.1} parent=11 // pred_fallthru
        _
      // Predicated region
      $region21: #{relu_pe_forward.1} parent=11 // pred_check
        %p168 = pneg %p100
      $region22: #{relu_pe_forward.1} parent=11 // pred_check_branch
        %170 = sbr.rel (%p168) target = $region24
      $region23: #{relu_pe_forward.1} parent=11 // pred_region
        _
      $region24: #{relu_pe_forward.1} parent=11 // pred_fallthru
        _
      // Predicated region
      $region25: #{relu_pe_forward.1} parent=11 // pred_check
        %p171 = pneg %p121
      $region26: #{relu_pe_forward.1} parent=11 // pred_check_branch
        %173 = sbr.rel (%p171) target = $region28
      $region27: #{relu_pe_forward.1} parent=11 // pred_region
        _
      $region28: #{relu_pe_forward.1} parent=11 // pred_fallthru
        _
    $region12: #{relu_pe_forward.1} parent=5 // pred_fallthru
      _
    %p174 = scmp.lt.s32.totalorder %s11, 4
    // Predicated region
    $region29: #{relu_pe_forward.1} parent=5 // pred_check
      %p175 = pneg %p174
    $region30: #{relu_pe_forward.1} parent=5 // pred_check_branch
      %177 = sbr.rel (%p175) target = $region32
    $region31: #{relu_pe_forward.1} parent=5 // pred_region
      // Predicated region
      $region33: #{relu_pe_forward.1} parent=31 // pred_check
        %p178 = pneg %p31
      $region34: #{relu_pe_forward.1} parent=31 // pred_check_branch
        %180 = sbr.rel (%p178) target = $region36
      $region35: #{relu_pe_forward.1} parent=31 // pred_region
        %s181 = smul.u32 8, %s11
        %p182 = scmp.lt.s32.totalorder %s181, 31
        %s183 = scalar_select %p182, %s181, 31
        %s184 = smul.addr %s183, 2
        %s185 = scalar_lea.vmem %s0, %s184
        %s186 = smul.u32 8, %s11
      $region36: #{relu_pe_forward.1} parent=31 // pred_fallthru
        _
    $region32: #{relu_pe_forward.1} parent=5 // pred_fallthru
      _
    %p187 = scmp.le.s32.totalorder 1, %s11
    %p188 = scmp.lt.s32.totalorder %s11, 5
    %p189 = pnand %p187, %p188
    %p190 = pneg %p189
    // Predicated region
    $region37: #{relu_pe_forward.1} parent=5 // pred_check
      _
    $region38: #{relu_pe_forward.1} parent=5 // pred_check_branch
      %192 = sbr.rel (%p189) target = $region40
    $region39: #{relu_pe_forward.1} parent=5 // pred_region
      %s193 = ssub.s32 %s11, 1
      %s194 = smul.u32 8, %s16
      %p195 = scmp.lt.s32.totalorder %s194, 31
      %s196 = scalar_select %p195, %s194, 31
      %s197 = smul.addr %s196, 2
      %s198 = scalar_lea.vmem %s0, %s197
      %p199 = pneg %p37
      %p200 = pneg %p34
      %p201 = pneg %p58
      %p202 = pneg %p55
      %p203 = pneg %p79
      %p204 = pneg %p76
      %p205 = pneg %p100
      %p206 = pneg %p97
      %p207 = pneg %p121
      %p208 = pneg %p118
      %p209 = pneg %p147
      %p210 = pneg %p144
      %s211 = smul.u32 8, %s16
      %p212 = scmp.lt.s32.totalorder %s211, 31
      %s213 = scalar_select %p212, %s211, 31
      %s214 = smul.addr %s213, 8
      %s215 = scalar_lea.vmem %s5, %s214
      %s216 = smul.u32 8, %s16
      %p217 = scmp.lt.s32.totalorder %s216, 31
      %s218 = scalar_select %p217, %s216, 31
      %s219 = smul.addr %s218, 2
      %s220 = scalar_lea.vmem %s0, %s219
      %s221 = smul.u32 8, %s16
      %s222 = smul.u32 8, %s16
      %p223 = scmp.lt.s32.totalorder %s222, 31
      %s224 = scalar_select %p223, %s222, 31
      %s225 = smul.addr %s224, 8
      %s226 = scalar_lea.vmem %s5, %s225
      %s227 = smul.u32 8, %s16
      %v229 = vld [vmem:[%s1] sm:$0xff]
      %v230 = vld [vmem:[%s1 + $0x8] sm:$0xff]
      %v231 = vld [vmem:[%s1 + $0x10] sm:$0xff]
      %v232 = vld [vmem:[%s1 + $0x18] sm:$0xff]
      %v233 = vld [vmem:[%s1 + $0x20] sm:$0xff]
      %v234 = vld [vmem:[%s220] ss:$2 sm:$0xff]
      %236 = vset.pattern.permute.xlu0 0
      %237 = vperm.xlu0 %236, %v229
      %v238 = vpop.permute.xlu0 %237
      %241 = vset.pattern.permute.xlu0 0
      %242 = vperm.xlu0 %241, %v230
      %v243 = vpop.permute.xlu0 %242
      %246 = vset.pattern.permute.xlu0 0
      %247 = vperm.xlu0 %246, %v231
      %v248 = vpop.permute.xlu0 %247
      %251 = vset.pattern.permute.xlu0 0
      %252 = vperm.xlu0 %251, %v232
      %v253 = vpop.permute.xlu0 %252
      %256 = vset.pattern.permute.xlu0 0
      %257 = vperm.xlu0 %256, %v233
      %v258 = vpop.permute.xlu0 %257
      %v261 = vlaneseq
      %v262 = vshrl.u32 %v261, 7
      %v263 = vsub.s32 0, %v262
      %v264 = vrot.slane %v234, %v263
      %v265 = vlaneseq
      %v266 = vshrl.u32 %v265, 7
      %v267 = vsub.s32 1, %v266
      %v268 = vrot.slane %v234, %v267
      %v269 = vlaneseq
      %v270 = vshrl.u32 %v269, 7
      %v271 = vsub.s32 2, %v270
      %v272 = vrot.slane %v234, %v271
      %v273 = vlaneseq
      %v274 = vshrl.u32 %v273, 7
      %v275 = vsub.s32 3, %v274
      %v276 = vrot.slane %v234, %v275
      %v277 = vlaneseq
      %v278 = vshrl.u32 %v277, 7
      %v279 = vsub.s32 4, %v278
      %v280 = vrot.slane %v234, %v279
      %v281 = vlaneseq
      %v282 = vshrl.u32 %v281, 7
      %v283 = vsub.s32 5, %v282
      %v284 = vrot.slane %v234, %v283
      %v285 = vlaneseq
      %v286 = vshrl.u32 %v285, 7
      %v287 = vsub.s32 6, %v286
      %v288 = vrot.slane %v234, %v287
      %v289 = vlaneseq
      %v290 = vshrl.u32 %v289, 7
      %v291 = vsub.s32 7, %v290
      %v292 = vrot.slane %v234, %v291
      %v301 = vmul.f32 %v238, %v264
      %v302 = vmul.f32 %v238, %v268
      %v303 = vmul.f32 %v238, %v272
      %v304 = vmul.f32 %v238, %v276
      %v305 = vmul.f32 %v238, %v280
      %v306 = vmul.f32 %v238, %v284
      %v307 = vmul.f32 %v238, %v288
      %v308 = vmul.f32 %v238, %v292
      %v309 = vmul.f32 %v243, %v264
      %v310 = vmul.f32 %v243, %v268
      %v311 = vmul.f32 %v243, %v272
      %v312 = vmul.f32 %v243, %v276
      %v313 = vmul.f32 %v243, %v280
      %v314 = vmul.f32 %v243, %v284
      %v315 = vmul.f32 %v243, %v288
      %v316 = vmul.f32 %v243, %v292
      %v317 = vmul.f32 %v248, %v264
      %v318 = vmul.f32 %v248, %v268
      %v319 = vmul.f32 %v248, %v272
      %v320 = vmul.f32 %v248, %v276
      %v321 = vmul.f32 %v248, %v280
      %v322 = vmul.f32 %v248, %v284
      %v323 = vmul.f32 %v248, %v288
      %v324 = vmul.f32 %v248, %v292
      %v325 = vmul.f32 %v253, %v264
      %v326 = vmul.f32 %v253, %v268
      %v327 = vmul.f32 %v253, %v272
      %v328 = vmul.f32 %v253, %v276
      %v329 = vmul.f32 %v253, %v280
      %v330 = vmul.f32 %v253, %v284
      %v331 = vmul.f32 %v253, %v288
      %v332 = vmul.f32 %v253, %v292
      %v333 = vmul.f32 %v258, %v264
      %v334 = vmul.f32 %v258, %v268
      %v335 = vmul.f32 %v258, %v272
      %v336 = vmul.f32 %v258, %v276
      %v337 = vmul.f32 %v258, %v280
      %v338 = vmul.f32 %v258, %v284
      %v339 = vmul.f32 %v258, %v288
      %v340 = vmul.f32 %v258, %v292
      %s341 = scalar_lea.vmem %s1, 40
      %v342 = vld [vmem:[%s341] sm:$0xff]
      %v343 = vld [vmem:[%s341 + $0x8] sm:$0xff]
      %v344 = vld [vmem:[%s341 + $0x10] sm:$0xff]
      %v345 = vld [vmem:[%s341 + $0x18] sm:$0xff]
      %v346 = vld [vmem:[%s341 + $0x20] sm:$0xff]
      %s347 = scalar_lea.vmem %s220, 1
      %v348 = vld [vmem:[%s347] ss:$2 sm:$0xff]
      %350 = vset.pattern.permute.xlu0 0
      %351 = vperm.xlu0 %350, %v342
      %v352 = vpop.permute.xlu0 %351
      %355 = vset.pattern.permute.xlu0 0
      %356 = vperm.xlu0 %355, %v343
      %v357 = vpop.permute.xlu0 %356
      %360 = vset.pattern.permute.xlu0 0
      %361 = vperm.xlu0 %360, %v344
      %v362 = vpop.permute.xlu0 %361
      %365 = vset.pattern.permute.xlu0 0
      %366 = vperm.xlu0 %365, %v345
      %v367 = vpop.permute.xlu0 %366
      %370 = vset.pattern.permute.xlu0 0
      %371 = vperm.xlu0 %370, %v346
      %v372 = vpop.permute.xlu0 %371
      %v375 = vlaneseq
      %v376 = vshrl.u32 %v375, 7
      %v377 = vsub.s32 0, %v376
      %v378 = vrot.slane %v348, %v377
      %v379 = vlaneseq
      %v380 = vshrl.u32 %v379, 7
      %v381 = vsub.s32 1, %v380
      %v382 = vrot.slane %v348, %v381
      %v383 = vlaneseq
      %v384 = vshrl.u32 %v383, 7
      %v385 = vsub.s32 2, %v384
      %v386 = vrot.slane %v348, %v385
      %v387 = vlaneseq
      %v388 = vshrl.u32 %v387, 7
      %v389 = vsub.s32 3, %v388
      %v390 = vrot.slane %v348, %v389
      %v391 = vlaneseq
      %v392 = vshrl.u32 %v391, 7
      %v393 = vsub.s32 4, %v392
      %v394 = vrot.slane %v348, %v393
      %v395 = vlaneseq
      %v396 = vshrl.u32 %v395, 7
      %v397 = vsub.s32 5, %v396
      %v398 = vrot.slane %v348, %v397
      %v399 = vlaneseq
      %v400 = vshrl.u32 %v399, 7
      %v401 = vsub.s32 6, %v400
      %v402 = vrot.slane %v348, %v401
      %v403 = vlaneseq
      %v404 = vshrl.u32 %v403, 7
      %v405 = vsub.s32 7, %v404
      %v406 = vrot.slane %v348, %v405
      %v415 = vmul.f32 %v352, %v378
      %v416 = vmul.f32 %v352, %v382
      %v417 = vmul.f32 %v352, %v386
      %v418 = vmul.f32 %v352, %v390
      %v419 = vmul.f32 %v352, %v394
      %v420 = vmul.f32 %v352, %v398
      %v421 = vmul.f32 %v352, %v402
      %v422 = vmul.f32 %v352, %v406
      %v423 = vmul.f32 %v357, %v378
      %v424 = vmul.f32 %v357, %v382
      %v425 = vmul.f32 %v357, %v386
      %v426 = vmul.f32 %v357, %v390
      %v427 = vmul.f32 %v357, %v394
      %v428 = vmul.f32 %v357, %v398
      %v429 = vmul.f32 %v357, %v402
      %v430 = vmul.f32 %v357, %v406
      %v431 = vmul.f32 %v362, %v378
      %v432 = vmul.f32 %v362, %v382
      %v433 = vmul.f32 %v362, %v386
      %v434 = vmul.f32 %v362, %v390
      %v435 = vmul.f32 %v362, %v394
      %v436 = vmul.f32 %v362, %v398
      %v437 = vmul.f32 %v362, %v402
      %v438 = vmul.f32 %v362, %v406
      %v439 = vmul.f32 %v367, %v378
      %v440 = vmul.f32 %v367, %v382
      %v441 = vmul.f32 %v367, %v386
      %v442 = vmul.f32 %v367, %v390
      %v443 = vmul.f32 %v367, %v394
      %v444 = vmul.f32 %v367, %v398
      %v445 = vmul.f32 %v367, %v402
      %v446 = vmul.f32 %v367, %v406
      %v447 = vmul.f32 %v372, %v378
      %v448 = vmul.f32 %v372, %v382
      %v449 = vmul.f32 %v372, %v386
      %v450 = vmul.f32 %v372, %v390
      %v451 = vmul.f32 %v372, %v394
      %v452 = vmul.f32 %v372, %v398
      %v453 = vmul.f32 %v372, %v402
      %v454 = vmul.f32 %v372, %v406
      %v455 = vadd.f32 %v301, %v415
      %v456 = vadd.f32 %v302, %v416
      %v457 = vadd.f32 %v303, %v417
      %v458 = vadd.f32 %v304, %v418
      %v459 = vadd.f32 %v305, %v419
      %v460 = vadd.f32 %v306, %v420
      %v461 = vadd.f32 %v307, %v421
      %v462 = vadd.f32 %v308, %v422
      %v463 = vadd.f32 %v309, %v423
      %v464 = vadd.f32 %v310, %v424
      %v465 = vadd.f32 %v311, %v425
      %v466 = vadd.f32 %v312, %v426
      %v467 = vadd.f32 %v313, %v427
      %v468 = vadd.f32 %v314, %v428
      %v469 = vadd.f32 %v315, %v429
      %v470 = vadd.f32 %v316, %v430
      %v471 = vadd.f32 %v317, %v431
      %v472 = vadd.f32 %v318, %v432
      %v473 = vadd.f32 %v319, %v433
      %v474 = vadd.f32 %v320, %v434
      %v475 = vadd.f32 %v321, %v435
      %v476 = vadd.f32 %v322, %v436
      %v477 = vadd.f32 %v323, %v437
      %v478 = vadd.f32 %v324, %v438
      %v479 = vadd.f32 %v325, %v439
      %v480 = vadd.f32 %v326, %v440
      %v481 = vadd.f32 %v327, %v441
      %v482 = vadd.f32 %v328, %v442
      %v483 = vadd.f32 %v329, %v443
      %v484 = vadd.f32 %v330, %v444
      %v485 = vadd.f32 %v331, %v445
      %v486 = vadd.f32 %v332, %v446
      %v487 = vadd.f32 %v333, %v447
      %v488 = vadd.f32 %v334, %v448
      %v489 = vadd.f32 %v335, %v449
      %v490 = vadd.f32 %v336, %v450
      %v491 = vadd.f32 %v337, %v451
      %v492 = vadd.f32 %v338, %v452
      %v493 = vadd.f32 %v339, %v453
      %v494 = vadd.f32 %v340, %v454
      %v495 = vld [vmem:[%s2] sm:$0xff]
      %v496 = vld [vmem:[%s2 + $0x8] sm:$0xff]
      %v497 = vld [vmem:[%s2 + $0x10] sm:$0xff]
      %v498 = vld [vmem:[%s2 + $0x18] sm:$0xff]
      %v499 = vld [vmem:[%s2 + $0x20] sm:$0xff]
      %501 = vset.pattern.permute.xlu0 0
      %502 = vperm.xlu0 %501, %v495
      %v503 = vpop.permute.xlu0 %502
      %506 = vset.pattern.permute.xlu0 0
      %507 = vperm.xlu0 %506, %v496
      %v508 = vpop.permute.xlu0 %507
      %511 = vset.pattern.permute.xlu0 0
      %512 = vperm.xlu0 %511, %v497
      %v513 = vpop.permute.xlu0 %512
      %516 = vset.pattern.permute.xlu0 0
      %517 = vperm.xlu0 %516, %v498
      %v518 = vpop.permute.xlu0 %517
      %521 = vset.pattern.permute.xlu0 0
      %522 = vperm.xlu0 %521, %v499
      %v523 = vpop.permute.xlu0 %522
      %v525 = vadd.f32 %v455, %v503
      %v526 = vadd.f32 %v456, %v503
      %v527 = vadd.f32 %v457, %v503
      %v528 = vadd.f32 %v458, %v503
      %v529 = vadd.f32 %v459, %v503
      %v530 = vadd.f32 %v460, %v503
      %v531 = vadd.f32 %v461, %v503
      %v532 = vadd.f32 %v462, %v503
      %v533 = vadd.f32 %v463, %v508
      %v534 = vadd.f32 %v464, %v508
      %v535 = vadd.f32 %v465, %v508
      %v536 = vadd.f32 %v466, %v508
      %v537 = vadd.f32 %v467, %v508
      %v538 = vadd.f32 %v468, %v508
      %v539 = vadd.f32 %v469, %v508
      %v540 = vadd.f32 %v470, %v508
      %v541 = vadd.f32 %v471, %v513
      %v542 = vadd.f32 %v472, %v513
      %v543 = vadd.f32 %v473, %v513
      %v544 = vadd.f32 %v474, %v513
      %v545 = vadd.f32 %v475, %v513
      %v546 = vadd.f32 %v476, %v513
      %v547 = vadd.f32 %v477, %v513
      %v548 = vadd.f32 %v478, %v513
      %v549 = vadd.f32 %v479, %v518
      %v550 = vadd.f32 %v480, %v518
      %v551 = vadd.f32 %v481, %v518
      %v552 = vadd.f32 %v482, %v518
      %v553 = vadd.f32 %v483, %v518
      %v554 = vadd.f32 %v484, %v518
      %v555 = vadd.f32 %v485, %v518
      %v556 = vadd.f32 %v486, %v518
      %v557 = vadd.f32 %v487, %v523
      %v558 = vadd.f32 %v488, %v523
      %v559 = vadd.f32 %v489, %v523
      %v560 = vadd.f32 %v490, %v523
      %v561 = vadd.f32 %v491, %v523
      %v562 = vadd.f32 %v492, %v523
      %v563 = vadd.f32 %v493, %v523
      %v564 = vadd.f32 %v494, %v523
      %v565 = vand.u32 2147483647, %v525
      %vm566 = vcmp.le.f32.partialorder %v565, 0.7853982
      %vm567 = vcmp.lt.s32.totalorder %v525, 0
      %v568 = vand.u32 %v525, 2139095040
      %v569 = vshrl.u32 %v568, 23
      %v570 = vsub.s32 %v569, 127
      %v571 = vand.u32 2147483647, %v525
      %v572 = vand.u32 %v571, 8388607
      %v573 = vor.u32 %v572, 8388608
      %v574 = vsub.s32 0, %v573
      %v575 = vadd.s32 %v570, 1
      %vm576 = vcmp.gt.s32.totalorder %v575, 0
      %v577 = vsel %vm576, %v575, 0
      %v578 = vshrl.u32 %v577, 5
      %v579 = vand.u32 %v577, 31
      %v580 = vsub.s32 32, %v579
      %v581 = vshrl.u32 683565275, %v580
      %v582 = vshll.u32 683565275, %v579
      %v583 = vshrl.u32 2475754826, %v580
      %v584 = vor.u32 %v582, %v583
      %v585 = vshll.u32 2475754826, %v579
      %v586 = vshrl.u32 2131351028, %v580
      %v587 = vor.u32 %v585, %v586
      %v588 = vshll.u32 2131351028, %v579
      %v589 = vshrl.u32 2102212464, %v580
      %v590 = vor.u32 %v588, %v589
      %v591 = vshll.u32 2102212464, %v579
      %v592 = vshrl.u32 920167782, %v580
      %v593 = vor.u32 %v591, %v592
      %v594 = vshll.u32 920167782, %v579
      %v595 = vshrl.u32 1326507024, %v580
      %v596 = vor.u32 %v594, %v595
      %vm597 = vcmp.lt.s32.totalorder %v578, 1
      %vm598 = vcmp.lt.s32.totalorder %v578, 2
      %vm599 = vcmp.lt.s32.totalorder %v578, 3
      %vm600 = vcmp.lt.s32.totalorder %v578, 4
      %v601 = vsel %vm597, %v581, %v584
      %v602 = vsel %vm600, %v590, 2102212464
      %v603 = vsel %vm599, %v587, %v602
      %v604 = vsel %vm598, %v601, %v603
      %v605 = vsel %vm597, %v584, %v587
      %v606 = vsel %vm600, %v593, 920167782
      %v607 = vsel %vm599, %v590, %v606
      %v608 = vsel %vm598, %v605, %v607
      %v609 = vsel %vm597, %v587, %v590
      %v610 = vsel %vm600, %v596, 1326507024
      %v611 = vsel %vm599, %v593, %v610
      %v612 = vsel %vm598, %v609, %v611
      %v613 = vshll.u32 %v573, 8
      %v614 = vmul.u32.u64.compose %v613, %v612
      %v615 = vextract.low.u32 %v614
      %v616 = vextract.high.u32 %v614
      %v617 = vmul.u32.u64.compose %v613, %v608
      %v618 = vextract.low.u32 %v617
      %v619 = vextract.high.u32 %v617
      %v620 = vmul.u32 %v613, %v604
      %v621 = vadd.s32 %v616, %v618
      %vm622 = vc.u32 %v616, %v618
      %v623 = vadd.s32 %v619, 1
      %v624 = vsel %vm622, %v623, %v619
      %v625 = vadd.s32 %v620, %v624
      %v626 = vadd.s32 %v625, 536870912
      %v627 = vshrl.u32 %v626, 30
      %v628 = vshll.u32 %v627, 30
      %v629 = vsub.s32 %v625, %v628
      %vm630 = vcmp.lt.s32.totalorder %v629, 0
      %v631 = vsub.s32 0, %v629
      %v632 = vsel %vm630, %v631, %v629
      %v633 = vclz %v632
      %v634 = vsub.s32 %v633, 2
      %vm635 = vcmp.gt.s32.totalorder 0, %v634
      %v636 = vsel %vm635, 0, %v634
      %v637 = vsub.s32 32, %v636
      %v638 = vshll.u32 %v629, %v636
      %v639 = vshrl.u32 %v621, %v637
      %v640 = vor.u32 %v638, %v639
      %v641 = vsub.s32 4294967266, %v636
      %v642 = vadd.s32 %v641, 127
      %v643 = vshll.u32 %v642, 23
      %v644 = vor.u32 4788187, %v643
      %v645 = vand.u32 2147483647, %v644
      %v647 = vcvt.s32.f32 %v640
      %v648 = vmul.f32 %v647, %v645
      %v649 = vxor.u32 %v648, 2147483648
      %v650 = vsel %vm567, %v649, %v648
      %v651 = vsub.s32 4, %v627
      %v652 = vsel %vm567, %v651, %v627
      %v653 = vsel %vm566, %v525, %v650
      %v654 = vsel %vm566, 0, %v652
      %v655 = vcosq.f32.pop %v653
      %v656 = vsinq.f32.pop %v653
      %vm657 = vweird.f32 %v525
      %v658 = vadd.s32 %v654, 3
      %v659 = vand.u32 %v658, 3
      %vm660 = vcmp.lt.s32.totalorder %v659, 2
      %vm661 = vcmp.eq.s32.totalorder %v659, 0
      %v662 = vxor.u32 %v656, 2147483648
      %v663 = vsel %vm661, %v655, %v662
      %vm664 = vcmp.eq.s32.totalorder %v659, 2
      %v665 = vxor.u32 %v655, 2147483648
      %v666 = vsel %vm664, %v665, %v656
      %v667 = vsel %vm660, %v663, %v666
      %v668 = vsel %vm657, nan, %v667
      %v669 = vand.u32 2147483647, %v526
      %vm670 = vcmp.le.f32.partialorder %v669, 0.7853982
      %vm671 = vcmp.lt.s32.totalorder %v526, 0
      %v672 = vand.u32 %v526, 2139095040
      %v673 = vshrl.u32 %v672, 23
      %v674 = vsub.s32 %v673, 127
      %v675 = vand.u32 2147483647, %v526
      %v676 = vand.u32 %v675, 8388607
      %v677 = vor.u32 %v676, 8388608
      %v678 = vsub.s32 0, %v677
      %v679 = vadd.s32 %v674, 1
      %vm680 = vcmp.gt.s32.totalorder %v679, 0
      %v681 = vsel %vm680, %v679, 0
      %v682 = vshrl.u32 %v681, 5
      %v683 = vand.u32 %v681, 31
      %v684 = vsub.s32 32, %v683
      %v685 = vshrl.u32 683565275, %v684
      %v686 = vshll.u32 683565275, %v683
      %v687 = vshrl.u32 2475754826, %v684
      %v688 = vor.u32 %v686, %v687
      %v689 = vshll.u32 2475754826, %v683
      %v690 = vshrl.u32 2131351028, %v684
      %v691 = vor.u32 %v689, %v690
      %v692 = vshll.u32 2131351028, %v683
      %v693 = vshrl.u32 2102212464, %v684
      %v694 = vor.u32 %v692, %v693
      %v695 = vshll.u32 2102212464, %v683
      %v696 = vshrl.u32 920167782, %v684
      %v697 = vor.u32 %v695, %v696
      %v698 = vshll.u32 920167782, %v683
      %v699 = vshrl.u32 1326507024, %v684
      %v700 = vor.u32 %v698, %v699
      %vm701 = vcmp.lt.s32.totalorder %v682, 1
      %vm702 = vcmp.lt.s32.totalorder %v682, 2
      %vm703 = vcmp.lt.s32.totalorder %v682, 3
      %vm704 = vcmp.lt.s32.totalorder %v682, 4
      %v705 = vsel %vm701, %v685, %v688
      %v706 = vsel %vm704, %v694, 2102212464
      %v707 = vsel %vm703, %v691, %v706
      %v708 = vsel %vm702, %v705, %v707
      %v709 = vsel %vm701, %v688, %v691
      %v710 = vsel %vm704, %v697, 920167782
      %v711 = vsel %vm703, %v694, %v710
      %v712 = vsel %vm702, %v709, %v711
      %v713 = vsel %vm701, %v691, %v694
      %v714 = vsel %vm704, %v700, 1326507024
      %v715 = vsel %vm703, %v697, %v714
      %v716 = vsel %vm702, %v713, %v715
      %v717 = vshll.u32 %v677, 8
      %v718 = vmul.u32.u64.compose %v717, %v716
      %v719 = vextract.low.u32 %v718
      %v720 = vextract.high.u32 %v718
      %v721 = vmul.u32.u64.compose %v717, %v712
      %v722 = vextract.low.u32 %v721
      %v723 = vextract.high.u32 %v721
      %v724 = vmul.u32 %v717, %v708
      %v725 = vadd.s32 %v720, %v722
      %vm726 = vc.u32 %v720, %v722
      %v727 = vadd.s32 %v723, 1
      %v728 = vsel %vm726, %v727, %v723
      %v729 = vadd.s32 %v724, %v728
      %v730 = vadd.s32 %v729, 536870912
      %v731 = vshrl.u32 %v730, 30
      %v732 = vshll.u32 %v731, 30
      %v733 = vsub.s32 %v729, %v732
      %vm734 = vcmp.lt.s32.totalorder %v733, 0
      %v735 = vsub.s32 0, %v733
      %v736 = vsel %vm734, %v735, %v733
      %v737 = vclz %v736
      %v738 = vsub.s32 %v737, 2
      %vm739 = vcmp.gt.s32.totalorder 0, %v738
      %v740 = vsel %vm739, 0, %v738
      %v741 = vsub.s32 32, %v740
      %v742 = vshll.u32 %v733, %v740
      %v743 = vshrl.u32 %v725, %v741
      %v744 = vor.u32 %v742, %v743
      %v745 = vsub.s32 4294967266, %v740
      %v746 = vadd.s32 %v745, 127
      %v747 = vshll.u32 %v746, 23
      %v748 = vor.u32 4788187, %v747
      %v749 = vand.u32 2147483647, %v748
      %v751 = vcvt.s32.f32 %v744
      %v752 = vmul.f32 %v751, %v749
      %v753 = vxor.u32 %v752, 2147483648
      %v754 = vsel %vm671, %v753, %v752
      %v755 = vsub.s32 4, %v731
      %v756 = vsel %vm671, %v755, %v731
      %v757 = vsel %vm670, %v526, %v754
      %v758 = vsel %vm670, 0, %v756
      %v759 = vcosq.f32.pop %v757
      %v760 = vsinq.f32.pop %v757
      %vm761 = vweird.f32 %v526
      %v762 = vadd.s32 %v758, 3
      %v763 = vand.u32 %v762, 3
      %vm764 = vcmp.lt.s32.totalorder %v763, 2
      %vm765 = vcmp.eq.s32.totalorder %v763, 0
      %v766 = vxor.u32 %v760, 2147483648
      %v767 = vsel %vm765, %v759, %v766
      %vm768 = vcmp.eq.s32.totalorder %v763, 2
      %v769 = vxor.u32 %v759, 2147483648
      %v770 = vsel %vm768, %v769, %v760
      %v771 = vsel %vm764, %v767, %v770
      %v772 = vsel %vm761, nan, %v771
      %v773 = vand.u32 2147483647, %v527
      %vm774 = vcmp.le.f32.partialorder %v773, 0.7853982
      %vm775 = vcmp.lt.s32.totalorder %v527, 0
      %v776 = vand.u32 %v527, 2139095040
      %v777 = vshrl.u32 %v776, 23
      %v778 = vsub.s32 %v777, 127
      %v779 = vand.u32 2147483647, %v527
      %v780 = vand.u32 %v779, 8388607
      %v781 = vor.u32 %v780, 8388608
      %v782 = vsub.s32 0, %v781
      %v783 = vadd.s32 %v778, 1
      %vm784 = vcmp.gt.s32.totalorder %v783, 0
      %v785 = vsel %vm784, %v783, 0
      %v786 = vshrl.u32 %v785, 5
      %v787 = vand.u32 %v785, 31
      %v788 = vsub.s32 32, %v787
      %v789 = vshrl.u32 683565275, %v788
      %v790 = vshll.u32 683565275, %v787
      %v791 = vshrl.u32 2475754826, %v788
      %v792 = vor.u32 %v790, %v791
      %v793 = vshll.u32 2475754826, %v787
      %v794 = vshrl.u32 2131351028, %v788
      %v795 = vor.u32 %v793, %v794
      %v796 = vshll.u32 2131351028, %v787
      %v797 = vshrl.u32 2102212464, %v788
      %v798 = vor.u32 %v796, %v797
      %v799 = vshll.u32 2102212464, %v787
      %v800 = vshrl.u32 920167782, %v788
      %v801 = vor.u32 %v799, %v800
      %v802 = vshll.u32 920167782, %v787
      %v803 = vshrl.u32 1326507024, %v788
      %v804 = vor.u32 %v802, %v803
      %vm805 = vcmp.lt.s32.totalorder %v786, 1
      %vm806 = vcmp.lt.s32.totalorder %v786, 2
      %vm807 = vcmp.lt.s32.totalorder %v786, 3
      %vm808 = vcmp.lt.s32.totalorder %v786, 4
      %v809 = vsel %vm805, %v789, %v792
      %v810 = vsel %vm808, %v798, 2102212464
      %v811 = vsel %vm807, %v795, %v810
      %v812 = vsel %vm806, %v809, %v811
      %v813 = vsel %vm805, %v792, %v795
      %v814 = vsel %vm808, %v801, 920167782
      %v815 = vsel %vm807, %v798, %v814
      %v816 = vsel %vm806, %v813, %v815
      %v817 = vsel %vm805, %v795, %v798
      %v818 = vsel %vm808, %v804, 1326507024
      %v819 = vsel %vm807, %v801, %v818
      %v820 = vsel %vm806, %v817, %v819
      %v821 = vshll.u32 %v781, 8
      %v822 = vmul.u32.u64.compose %v821, %v820
      %v823 = vextract.low.u32 %v822
      %v824 = vextract.high.u32 %v822
      %v825 = vmul.u32.u64.compose %v821, %v816
      %v826 = vextract.low.u32 %v825
      %v827 = vextract.high.u32 %v825
      %v828 = vmul.u32 %v821, %v812
      %v829 = vadd.s32 %v824, %v826
      %vm830 = vc.u32 %v824, %v826
      %v831 = vadd.s32 %v827, 1
      %v832 = vsel %vm830, %v831, %v827
      %v833 = vadd.s32 %v828, %v832
      %v834 = vadd.s32 %v833, 536870912
      %v835 = vshrl.u32 %v834, 30
      %v836 = vshll.u32 %v835, 30
      %v837 = vsub.s32 %v833, %v836
      %vm838 = vcmp.lt.s32.totalorder %v837, 0
      %v839 = vsub.s32 0, %v837
      %v840 = vsel %vm838, %v839, %v837
      %v841 = vclz %v840
      %v842 = vsub.s32 %v841, 2
      %vm843 = vcmp.gt.s32.totalorder 0, %v842
      %v844 = vsel %vm843, 0, %v842
      %v845 = vsub.s32 32, %v844
      %v846 = vshll.u32 %v837, %v844
      %v847 = vshrl.u32 %v829, %v845
      %v848 = vor.u32 %v846, %v847
      %v849 = vsub.s32 4294967266, %v844
      %v850 = vadd.s32 %v849, 127
      %v851 = vshll.u32 %v850, 23
      %v852 = vor.u32 4788187, %v851
      %v853 = vand.u32 2147483647, %v852
      %v855 = vcvt.s32.f32 %v848
      %v856 = vmul.f32 %v855, %v853
      %v857 = vxor.u32 %v856, 2147483648
      %v858 = vsel %vm775, %v857, %v856
      %v859 = vsub.s32 4, %v835
      %v860 = vsel %vm775, %v859, %v835
      %v861 = vsel %vm774, %v527, %v858
      %v862 = vsel %vm774, 0, %v860
      %v863 = vcosq.f32.pop %v861
      %v864 = vsinq.f32.pop %v861
      %vm865 = vweird.f32 %v527
      %v866 = vadd.s32 %v862, 3
      %v867 = vand.u32 %v866, 3
      %vm868 = vcmp.lt.s32.totalorder %v867, 2
      %vm869 = vcmp.eq.s32.totalorder %v867, 0
      %v870 = vxor.u32 %v864, 2147483648
      %v871 = vsel %vm869, %v863, %v870
      %vm872 = vcmp.eq.s32.totalorder %v867, 2
      %v873 = vxor.u32 %v863, 2147483648
      %v874 = vsel %vm872, %v873, %v864
      %v875 = vsel %vm868, %v871, %v874
      %v876 = vsel %vm865, nan, %v875
      %v877 = vand.u32 2147483647, %v528
      %vm878 = vcmp.le.f32.partialorder %v877, 0.7853982
      %vm879 = vcmp.lt.s32.totalorder %v528, 0
      %v880 = vand.u32 %v528, 2139095040
      %v881 = vshrl.u32 %v880, 23
      %v882 = vsub.s32 %v881, 127
      %v883 = vand.u32 2147483647, %v528
      %v884 = vand.u32 %v883, 8388607
      %v885 = vor.u32 %v884, 8388608
      %v886 = vsub.s32 0, %v885
      %v887 = vadd.s32 %v882, 1
      %vm888 = vcmp.gt.s32.totalorder %v887, 0
      %v889 = vsel %vm888, %v887, 0
      %v890 = vshrl.u32 %v889, 5
      %v891 = vand.u32 %v889, 31
      %v892 = vsub.s32 32, %v891
      %v893 = vshrl.u32 683565275, %v892
      %v894 = vshll.u32 683565275, %v891
      %v895 = vshrl.u32 2475754826, %v892
      %v896 = vor.u32 %v894, %v895
      %v897 = vshll.u32 2475754826, %v891
      %v898 = vshrl.u32 2131351028, %v892
      %v899 = vor.u32 %v897, %v898
      %v900 = vshll.u32 2131351028, %v891
      %v901 = vshrl.u32 2102212464, %v892
      %v902 = vor.u32 %v900, %v901
      %v903 = vshll.u32 2102212464, %v891
      %v904 = vshrl.u32 920167782, %v892
      %v905 = vor.u32 %v903, %v904
      %v906 = vshll.u32 920167782, %v891
      %v907 = vshrl.u32 1326507024, %v892
      %v908 = vor.u32 %v906, %v907
      %vm909 = vcmp.lt.s32.totalorder %v890, 1
      %vm910 = vcmp.lt.s32.totalorder %v890, 2
      %vm911 = vcmp.lt.s32.totalorder %v890, 3
      %vm912 = vcmp.lt.s32.totalorder %v890, 4
      %v913 = vsel %vm909, %v893, %v896
      %v914 = vsel %vm912, %v902, 2102212464
      %v915 = vsel %vm911, %v899, %v914
      %v916 = vsel %vm910, %v913, %v915
      %v917 = vsel %vm909, %v896, %v899
      %v918 = vsel %vm912, %v905, 920167782
      %v919 = vsel %vm911, %v902, %v918
      %v920 = vsel %vm910, %v917, %v919
      %v921 = vsel %vm909, %v899, %v902
      %v922 = vsel %vm912, %v908, 1326507024
      %v923 = vsel %vm911, %v905, %v922
      %v924 = vsel %vm910, %v921, %v923
      %v925 = vshll.u32 %v885, 8
      %v926 = vmul.u32.u64.compose %v925, %v924
      %v927 = vextract.low.u32 %v926
      %v928 = vextract.high.u32 %v926
      %v929 = vmul.u32.u64.compose %v925, %v920
      %v930 = vextract.low.u32 %v929
      %v931 = vextract.high.u32 %v929
      %v932 = vmul.u32 %v925, %v916
      %v933 = vadd.s32 %v928, %v930
      %vm934 = vc.u32 %v928, %v930
      %v935 = vadd.s32 %v931, 1
      %v936 = vsel %vm934, %v935, %v931
      %v937 = vadd.s32 %v932, %v936
      %v938 = vadd.s32 %v937, 536870912
      %v939 = vshrl.u32 %v938, 30
      %v940 = vshll.u32 %v939, 30
      %v941 = vsub.s32 %v937, %v940
      %vm942 = vcmp.lt.s32.totalorder %v941, 0
      %v943 = vsub.s32 0, %v941
      %v944 = vsel %vm942, %v943, %v941
      %v945 = vclz %v944
      %v946 = vsub.s32 %v945, 2
      %vm947 = vcmp.gt.s32.totalorder 0, %v946
      %v948 = vsel %vm947, 0, %v946
      %v949 = vsub.s32 32, %v948
      %v950 = vshll.u32 %v941, %v948
      %v951 = vshrl.u32 %v933, %v949
      %v952 = vor.u32 %v950, %v951
      %v953 = vsub.s32 4294967266, %v948
      %v954 = vadd.s32 %v953, 127
      %v955 = vshll.u32 %v954, 23
      %v956 = vor.u32 4788187, %v955
      %v957 = vand.u32 2147483647, %v956
      %v959 = vcvt.s32.f32 %v952
      %v960 = vmul.f32 %v959, %v957
      %v961 = vxor.u32 %v960, 2147483648
      %v962 = vsel %vm879, %v961, %v960
      %v963 = vsub.s32 4, %v939
      %v964 = vsel %vm879, %v963, %v939
      %v965 = vsel %vm878, %v528, %v962
      %v966 = vsel %vm878, 0, %v964
      %v967 = vcosq.f32.pop %v965
      %v968 = vsinq.f32.pop %v965
      %vm969 = vweird.f32 %v528
      %v970 = vadd.s32 %v966, 3
      %v971 = vand.u32 %v970, 3
      %vm972 = vcmp.lt.s32.totalorder %v971, 2
      %vm973 = vcmp.eq.s32.totalorder %v971, 0
      %v974 = vxor.u32 %v968, 2147483648
      %v975 = vsel %vm973, %v967, %v974
      %vm976 = vcmp.eq.s32.totalorder %v971, 2
      %v977 = vxor.u32 %v967, 2147483648
      %v978 = vsel %vm976, %v977, %v968
      %v979 = vsel %vm972, %v975, %v978
      %v980 = vsel %vm969, nan, %v979
      %v981 = vand.u32 2147483647, %v529
      %vm982 = vcmp.le.f32.partialorder %v981, 0.7853982
      %vm983 = vcmp.lt.s32.totalorder %v529, 0
      %v984 = vand.u32 %v529, 2139095040
      %v985 = vshrl.u32 %v984, 23
      %v986 = vsub.s32 %v985, 127
      %v987 = vand.u32 2147483647, %v529
      %v988 = vand.u32 %v987, 8388607
      %v989 = vor.u32 %v988, 8388608
      %v990 = vsub.s32 0, %v989
      %v991 = vadd.s32 %v986, 1
      %vm992 = vcmp.gt.s32.totalorder %v991, 0
      %v993 = vsel %vm992, %v991, 0
      %v994 = vshrl.u32 %v993, 5
      %v995 = vand.u32 %v993, 31
      %v996 = vsub.s32 32, %v995
      %v997 = vshrl.u32 683565275, %v996
      %v998 = vshll.u32 683565275, %v995
      %v999 = vshrl.u32 2475754826, %v996
      %v1000 = vor.u32 %v998, %v999
      %v1001 = vshll.u32 2475754826, %v995
      %v1002 = vshrl.u32 2131351028, %v996
      %v1003 = vor.u32 %v1001, %v1002
      %v1004 = vshll.u32 2131351028, %v995
      %v1005 = vshrl.u32 2102212464, %v996
      %v1006 = vor.u32 %v1004, %v1005
      %v1007 = vshll.u32 2102212464, %v995
      %v1008 = vshrl.u32 920167782, %v996
      %v1009 = vor.u32 %v1007, %v1008
      %v1010 = vshll.u32 920167782, %v995
      %v1011 = vshrl.u32 1326507024, %v996
      %v1012 = vor.u32 %v1010, %v1011
      %vm1013 = vcmp.lt.s32.totalorder %v994, 1
      %vm1014 = vcmp.lt.s32.totalorder %v994, 2
      %vm1015 = vcmp.lt.s32.totalorder %v994, 3
      %vm1016 = vcmp.lt.s32.totalorder %v994, 4
      %v1017 = vsel %vm1013, %v997, %v1000
      %v1018 = vsel %vm1016, %v1006, 2102212464
      %v1019 = vsel %vm1015, %v1003, %v1018
      %v1020 = vsel %vm1014, %v1017, %v1019
      %v1021 = vsel %vm1013, %v1000, %v1003
      %v1022 = vsel %vm1016, %v1009, 920167782
      %v1023 = vsel %vm1015, %v1006, %v1022
      %v1024 = vsel %vm1014, %v1021, %v1023
      %v1025 = vsel %vm1013, %v1003, %v1006
      %v1026 = vsel %vm1016, %v1012, 1326507024
      %v1027 = vsel %vm1015, %v1009, %v1026
      %v1028 = vsel %vm1014, %v1025, %v1027
      %v1029 = vshll.u32 %v989, 8
      %v1030 = vmul.u32.u64.compose %v1029, %v1028
      %v1031 = vextract.low.u32 %v1030
      %v1032 = vextract.high.u32 %v1030
      %v1033 = vmul.u32.u64.compose %v1029, %v1024
      %v1034 = vextract.low.u32 %v1033
      %v1035 = vextract.high.u32 %v1033
      %v1036 = vmul.u32 %v1029, %v1020
      %v1037 = vadd.s32 %v1032, %v1034
      %vm1038 = vc.u32 %v1032, %v1034
      %v1039 = vadd.s32 %v1035, 1
      %v1040 = vsel %vm1038, %v1039, %v1035
      %v1041 = vadd.s32 %v1036, %v1040
      %v1042 = vadd.s32 %v1041, 536870912
      %v1043 = vshrl.u32 %v1042, 30
      %v1044 = vshll.u32 %v1043, 30
      %v1045 = vsub.s32 %v1041, %v1044
      %vm1046 = vcmp.lt.s32.totalorder %v1045, 0
      %v1047 = vsub.s32 0, %v1045
      %v1048 = vsel %vm1046, %v1047, %v1045
      %v1049 = vclz %v1048
      %v1050 = vsub.s32 %v1049, 2
      %vm1051 = vcmp.gt.s32.totalorder 0, %v1050
      %v1052 = vsel %vm1051, 0, %v1050
      %v1053 = vsub.s32 32, %v1052
      %v1054 = vshll.u32 %v1045, %v1052
      %v1055 = vshrl.u32 %v1037, %v1053
      %v1056 = vor.u32 %v1054, %v1055
      %v1057 = vsub.s32 4294967266, %v1052
      %v1058 = vadd.s32 %v1057, 127
      %v1059 = vshll.u32 %v1058, 23
      %v1060 = vor.u32 4788187, %v1059
      %v1061 = vand.u32 2147483647, %v1060
      %v1063 = vcvt.s32.f32 %v1056
      %v1064 = vmul.f32 %v1063, %v1061
      %v1065 = vxor.u32 %v1064, 2147483648
      %v1066 = vsel %vm983, %v1065, %v1064
      %v1067 = vsub.s32 4, %v1043
      %v1068 = vsel %vm983, %v1067, %v1043
      %v1069 = vsel %vm982, %v529, %v1066
      %v1070 = vsel %vm982, 0, %v1068
      %v1071 = vcosq.f32.pop %v1069
      %v1072 = vsinq.f32.pop %v1069
      %vm1073 = vweird.f32 %v529
      %v1074 = vadd.s32 %v1070, 3
      %v1075 = vand.u32 %v1074, 3
      %vm1076 = vcmp.lt.s32.totalorder %v1075, 2
      %vm1077 = vcmp.eq.s32.totalorder %v1075, 0
      %v1078 = vxor.u32 %v1072, 2147483648
      %v1079 = vsel %vm1077, %v1071, %v1078
      %vm1080 = vcmp.eq.s32.totalorder %v1075, 2
      %v1081 = vxor.u32 %v1071, 2147483648
      %v1082 = vsel %vm1080, %v1081, %v1072
      %v1083 = vsel %vm1076, %v1079, %v1082
      %v1084 = vsel %vm1073, nan, %v1083
      %v1085 = vand.u32 2147483647, %v530
      %vm1086 = vcmp.le.f32.partialorder %v1085, 0.7853982
      %vm1087 = vcmp.lt.s32.totalorder %v530, 0
      %v1088 = vand.u32 %v530, 2139095040
      %v1089 = vshrl.u32 %v1088, 23
      %v1090 = vsub.s32 %v1089, 127
      %v1091 = vand.u32 2147483647, %v530
      %v1092 = vand.u32 %v1091, 8388607
      %v1093 = vor.u32 %v1092, 8388608
      %v1094 = vsub.s32 0, %v1093
      %v1095 = vadd.s32 %v1090, 1
      %vm1096 = vcmp.gt.s32.totalorder %v1095, 0
      %v1097 = vsel %vm1096, %v1095, 0
      %v1098 = vshrl.u32 %v1097, 5
      %v1099 = vand.u32 %v1097, 31
      %v1100 = vsub.s32 32, %v1099
      %v1101 = vshrl.u32 683565275, %v1100
      %v1102 = vshll.u32 683565275, %v1099
      %v1103 = vshrl.u32 2475754826, %v1100
      %v1104 = vor.u32 %v1102, %v1103
      %v1105 = vshll.u32 2475754826, %v1099
      %v1106 = vshrl.u32 2131351028, %v1100
      %v1107 = vor.u32 %v1105, %v1106
      %v1108 = vshll.u32 2131351028, %v1099
      %v1109 = vshrl.u32 2102212464, %v1100
      %v1110 = vor.u32 %v1108, %v1109
      %v1111 = vshll.u32 2102212464, %v1099
      %v1112 = vshrl.u32 920167782, %v1100
      %v1113 = vor.u32 %v1111, %v1112
      %v1114 = vshll.u32 920167782, %v1099
      %v1115 = vshrl.u32 1326507024, %v1100
      %v1116 = vor.u32 %v1114, %v1115
      %vm1117 = vcmp.lt.s32.totalorder %v1098, 1
      %vm1118 = vcmp.lt.s32.totalorder %v1098, 2
      %vm1119 = vcmp.lt.s32.totalorder %v1098, 3
      %vm1120 = vcmp.lt.s32.totalorder %v1098, 4
      %v1121 = vsel %vm1117, %v1101, %v1104
      %v1122 = vsel %vm1120, %v1110, 2102212464
      %v1123 = vsel %vm1119, %v1107, %v1122
      %v1124 = vsel %vm1118, %v1121, %v1123
      %v1125 = vsel %vm1117, %v1104, %v1107
      %v1126 = vsel %vm1120, %v1113, 920167782
      %v1127 = vsel %vm1119, %v1110, %v1126
      %v1128 = vsel %vm1118, %v1125, %v1127
      %v1129 = vsel %vm1117, %v1107, %v1110
      %v1130 = vsel %vm1120, %v1116, 1326507024
      %v1131 = vsel %vm1119, %v1113, %v1130
      %v1132 = vsel %vm1118, %v1129, %v1131
      %v1133 = vshll.u32 %v1093, 8
      %v1134 = vmul.u32.u64.compose %v1133, %v1132
      %v1135 = vextract.low.u32 %v1134
      %v1136 = vextract.high.u32 %v1134
      %v1137 = vmul.u32.u64.compose %v1133, %v1128
      %v1138 = vextract.low.u32 %v1137
      %v1139 = vextract.high.u32 %v1137
      %v1140 = vmul.u32 %v1133, %v1124
      %v1141 = vadd.s32 %v1136, %v1138
      %vm1142 = vc.u32 %v1136, %v1138
      %v1143 = vadd.s32 %v1139, 1
      %v1144 = vsel %vm1142, %v1143, %v1139
      %v1145 = vadd.s32 %v1140, %v1144
      %v1146 = vadd.s32 %v1145, 536870912
      %v1147 = vshrl.u32 %v1146, 30
      %v1148 = vshll.u32 %v1147, 30
      %v1149 = vsub.s32 %v1145, %v1148
      %vm1150 = vcmp.lt.s32.totalorder %v1149, 0
      %v1151 = vsub.s32 0, %v1149
      %v1152 = vsel %vm1150, %v1151, %v1149
      %v1153 = vclz %v1152
      %v1154 = vsub.s32 %v1153, 2
      %vm1155 = vcmp.gt.s32.totalorder 0, %v1154
      %v1156 = vsel %vm1155, 0, %v1154
      %v1157 = vsub.s32 32, %v1156
      %v1158 = vshll.u32 %v1149, %v1156
      %v1159 = vshrl.u32 %v1141, %v1157
      %v1160 = vor.u32 %v1158, %v1159
      %v1161 = vsub.s32 4294967266, %v1156
      %v1162 = vadd.s32 %v1161, 127
      %v1163 = vshll.u32 %v1162, 23
      %v1164 = vor.u32 4788187, %v1163
      %v1165 = vand.u32 2147483647, %v1164
      %v1167 = vcvt.s32.f32 %v1160
      %v1168 = vmul.f32 %v1167, %v1165
      %v1169 = vxor.u32 %v1168, 2147483648
      %v1170 = vsel %vm1087, %v1169, %v1168
      %v1171 = vsub.s32 4, %v1147
      %v1172 = vsel %vm1087, %v1171, %v1147
      %v1173 = vsel %vm1086, %v530, %v1170
      %v1174 = vsel %vm1086, 0, %v1172
      %v1175 = vcosq.f32.pop %v1173
      %v1176 = vsinq.f32.pop %v1173
      %vm1177 = vweird.f32 %v530
      %v1178 = vadd.s32 %v1174, 3
      %v1179 = vand.u32 %v1178, 3
      %vm1180 = vcmp.lt.s32.totalorder %v1179, 2
      %vm1181 = vcmp.eq.s32.totalorder %v1179, 0
      %v1182 = vxor.u32 %v1176, 2147483648
      %v1183 = vsel %vm1181, %v1175, %v1182
      %vm1184 = vcmp.eq.s32.totalorder %v1179, 2
      %v1185 = vxor.u32 %v1175, 2147483648
      %v1186 = vsel %vm1184, %v1185, %v1176
      %v1187 = vsel %vm1180, %v1183, %v1186
      %v1188 = vsel %vm1177, nan, %v1187
      %v1189 = vand.u32 2147483647, %v531
      %vm1190 = vcmp.le.f32.partialorder %v1189, 0.7853982
      %vm1191 = vcmp.lt.s32.totalorder %v531, 0
      %v1192 = vand.u32 %v531, 2139095040
      %v1193 = vshrl.u32 %v1192, 23
      %v1194 = vsub.s32 %v1193, 127
      %v1195 = vand.u32 2147483647, %v531
      %v1196 = vand.u32 %v1195, 8388607
      %v1197 = vor.u32 %v1196, 8388608
      %v1198 = vsub.s32 0, %v1197
      %v1199 = vadd.s32 %v1194, 1
      %vm1200 = vcmp.gt.s32.totalorder %v1199, 0
      %v1201 = vsel %vm1200, %v1199, 0
      %v1202 = vshrl.u32 %v1201, 5
      %v1203 = vand.u32 %v1201, 31
      %v1204 = vsub.s32 32, %v1203
      %v1205 = vshrl.u32 683565275, %v1204
      %v1206 = vshll.u32 683565275, %v1203
      %v1207 = vshrl.u32 2475754826, %v1204
      %v1208 = vor.u32 %v1206, %v1207
      %v1209 = vshll.u32 2475754826, %v1203
      %v1210 = vshrl.u32 2131351028, %v1204
      %v1211 = vor.u32 %v1209, %v1210
      %v1212 = vshll.u32 2131351028, %v1203
      %v1213 = vshrl.u32 2102212464, %v1204
      %v1214 = vor.u32 %v1212, %v1213
      %v1215 = vshll.u32 2102212464, %v1203
      %v1216 = vshrl.u32 920167782, %v1204
      %v1217 = vor.u32 %v1215, %v1216
      %v1218 = vshll.u32 920167782, %v1203
      %v1219 = vshrl.u32 1326507024, %v1204
      %v1220 = vor.u32 %v1218, %v1219
      %vm1221 = vcmp.lt.s32.totalorder %v1202, 1
      %vm1222 = vcmp.lt.s32.totalorder %v1202, 2
      %vm1223 = vcmp.lt.s32.totalorder %v1202, 3
      %vm1224 = vcmp.lt.s32.totalorder %v1202, 4
      %v1225 = vsel %vm1221, %v1205, %v1208
      %v1226 = vsel %vm1224, %v1214, 2102212464
      %v1227 = vsel %vm1223, %v1211, %v1226
      %v1228 = vsel %vm1222, %v1225, %v1227
      %v1229 = vsel %vm1221, %v1208, %v1211
      %v1230 = vsel %vm1224, %v1217, 920167782
      %v1231 = vsel %vm1223, %v1214, %v1230
      %v1232 = vsel %vm1222, %v1229, %v1231
      %v1233 = vsel %vm1221, %v1211, %v1214
      %v1234 = vsel %vm1224, %v1220, 1326507024
      %v1235 = vsel %vm1223, %v1217, %v1234
      %v1236 = vsel %vm1222, %v1233, %v1235
      %v1237 = vshll.u32 %v1197, 8
      %v1238 = vmul.u32.u64.compose %v1237, %v1236
      %v1239 = vextract.low.u32 %v1238
      %v1240 = vextract.high.u32 %v1238
      %v1241 = vmul.u32.u64.compose %v1237, %v1232
      %v1242 = vextract.low.u32 %v1241
      %v1243 = vextract.high.u32 %v1241
      %v1244 = vmul.u32 %v1237, %v1228
      %v1245 = vadd.s32 %v1240, %v1242
      %vm1246 = vc.u32 %v1240, %v1242
      %v1247 = vadd.s32 %v1243, 1
      %v1248 = vsel %vm1246, %v1247, %v1243
      %v1249 = vadd.s32 %v1244, %v1248
      %v1250 = vadd.s32 %v1249, 536870912
      %v1251 = vshrl.u32 %v1250, 30
      %v1252 = vshll.u32 %v1251, 30
      %v1253 = vsub.s32 %v1249, %v1252
      %vm1254 = vcmp.lt.s32.totalorder %v1253, 0
      %v1255 = vsub.s32 0, %v1253
      %v1256 = vsel %vm1254, %v1255, %v1253
      %v1257 = vclz %v1256
      %v1258 = vsub.s32 %v1257, 2
      %vm1259 = vcmp.gt.s32.totalorder 0, %v1258
      %v1260 = vsel %vm1259, 0, %v1258
      %v1261 = vsub.s32 32, %v1260
      %v1262 = vshll.u32 %v1253, %v1260
      %v1263 = vshrl.u32 %v1245, %v1261
      %v1264 = vor.u32 %v1262, %v1263
      %v1265 = vsub.s32 4294967266, %v1260
      %v1266 = vadd.s32 %v1265, 127
      %v1267 = vshll.u32 %v1266, 23
      %v1268 = vor.u32 4788187, %v1267
      %v1269 = vand.u32 2147483647, %v1268
      %v1271 = vcvt.s32.f32 %v1264
      %v1272 = vmul.f32 %v1271, %v1269
      %v1273 = vxor.u32 %v1272, 2147483648
      %v1274 = vsel %vm1191, %v1273, %v1272
      %v1275 = vsub.s32 4, %v1251
      %v1276 = vsel %vm1191, %v1275, %v1251
      %v1277 = vsel %vm1190, %v531, %v1274
      %v1278 = vsel %vm1190, 0, %v1276
      %v1279 = vcosq.f32.pop %v1277
      %v1280 = vsinq.f32.pop %v1277
      %vm1281 = vweird.f32 %v531
      %v1282 = vadd.s32 %v1278, 3
      %v1283 = vand.u32 %v1282, 3
      %vm1284 = vcmp.lt.s32.totalorder %v1283, 2
      %vm1285 = vcmp.eq.s32.totalorder %v1283, 0
      %v1286 = vxor.u32 %v1280, 2147483648
      %v1287 = vsel %vm1285, %v1279, %v1286
      %vm1288 = vcmp.eq.s32.totalorder %v1283, 2
      %v1289 = vxor.u32 %v1279, 2147483648
      %v1290 = vsel %vm1288, %v1289, %v1280
      %v1291 = vsel %vm1284, %v1287, %v1290
      %v1292 = vsel %vm1281, nan, %v1291
      %v1293 = vand.u32 2147483647, %v532
      %vm1294 = vcmp.le.f32.partialorder %v1293, 0.7853982
      %vm1295 = vcmp.lt.s32.totalorder %v532, 0
      %v1296 = vand.u32 %v532, 2139095040
      %v1297 = vshrl.u32 %v1296, 23
      %v1298 = vsub.s32 %v1297, 127
      %v1299 = vand.u32 2147483647, %v532
      %v1300 = vand.u32 %v1299, 8388607
      %v1301 = vor.u32 %v1300, 8388608
      %v1302 = vsub.s32 0, %v1301
      %v1303 = vadd.s32 %v1298, 1
      %vm1304 = vcmp.gt.s32.totalorder %v1303, 0
      %v1305 = vsel %vm1304, %v1303, 0
      %v1306 = vshrl.u32 %v1305, 5
      %v1307 = vand.u32 %v1305, 31
      %v1308 = vsub.s32 32, %v1307
      %v1309 = vshrl.u32 683565275, %v1308
      %v1310 = vshll.u32 683565275, %v1307
      %v1311 = vshrl.u32 2475754826, %v1308
      %v1312 = vor.u32 %v1310, %v1311
      %v1313 = vshll.u32 2475754826, %v1307
      %v1314 = vshrl.u32 2131351028, %v1308
      %v1315 = vor.u32 %v1313, %v1314
      %v1316 = vshll.u32 2131351028, %v1307
      %v1317 = vshrl.u32 2102212464, %v1308
      %v1318 = vor.u32 %v1316, %v1317
      %v1319 = vshll.u32 2102212464, %v1307
      %v1320 = vshrl.u32 920167782, %v1308
      %v1321 = vor.u32 %v1319, %v1320
      %v1322 = vshll.u32 920167782, %v1307
      %v1323 = vshrl.u32 1326507024, %v1308
      %v1324 = vor.u32 %v1322, %v1323
      %vm1325 = vcmp.lt.s32.totalorder %v1306, 1
      %vm1326 = vcmp.lt.s32.totalorder %v1306, 2
      %vm1327 = vcmp.lt.s32.totalorder %v1306, 3
      %vm1328 = vcmp.lt.s32.totalorder %v1306, 4
      %v1329 = vsel %vm1325, %v1309, %v1312
      %v1330 = vsel %vm1328, %v1318, 2102212464
      %v1331 = vsel %vm1327, %v1315, %v1330
      %v1332 = vsel %vm1326, %v1329, %v1331
      %v1333 = vsel %vm1325, %v1312, %v1315
      %v1334 = vsel %vm1328, %v1321, 920167782
      %v1335 = vsel %vm1327, %v1318, %v1334
      %v1336 = vsel %vm1326, %v1333, %v1335
      %v1337 = vsel %vm1325, %v1315, %v1318
      %v1338 = vsel %vm1328, %v1324, 1326507024
      %v1339 = vsel %vm1327, %v1321, %v1338
      %v1340 = vsel %vm1326, %v1337, %v1339
      %v1341 = vshll.u32 %v1301, 8
      %v1342 = vmul.u32.u64.compose %v1341, %v1340
      %v1343 = vextract.low.u32 %v1342
      %v1344 = vextract.high.u32 %v1342
      %v1345 = vmul.u32.u64.compose %v1341, %v1336
      %v1346 = vextract.low.u32 %v1345
      %v1347 = vextract.high.u32 %v1345
      %v1348 = vmul.u32 %v1341, %v1332
      %v1349 = vadd.s32 %v1344, %v1346
      %vm1350 = vc.u32 %v1344, %v1346
      %v1351 = vadd.s32 %v1347, 1
      %v1352 = vsel %vm1350, %v1351, %v1347
      %v1353 = vadd.s32 %v1348, %v1352
      %v1354 = vadd.s32 %v1353, 536870912
      %v1355 = vshrl.u32 %v1354, 30
      %v1356 = vshll.u32 %v1355, 30
      %v1357 = vsub.s32 %v1353, %v1356
      %vm1358 = vcmp.lt.s32.totalorder %v1357, 0
      %v1359 = vsub.s32 0, %v1357
      %v1360 = vsel %vm1358, %v1359, %v1357
      %v1361 = vclz %v1360
      %v1362 = vsub.s32 %v1361, 2
      %vm1363 = vcmp.gt.s32.totalorder 0, %v1362
      %v1364 = vsel %vm1363, 0, %v1362
      %v1365 = vsub.s32 32, %v1364
      %v1366 = vshll.u32 %v1357, %v1364
      %v1367 = vshrl.u32 %v1349, %v1365
      %v1368 = vor.u32 %v1366, %v1367
      %v1369 = vsub.s32 4294967266, %v1364
      %v1370 = vadd.s32 %v1369, 127
      %v1371 = vshll.u32 %v1370, 23
      %v1372 = vor.u32 4788187, %v1371
      %v1373 = vand.u32 2147483647, %v1372
      %v1375 = vcvt.s32.f32 %v1368
      %v1376 = vmul.f32 %v1375, %v1373
      %v1377 = vxor.u32 %v1376, 2147483648
      %v1378 = vsel %vm1295, %v1377, %v1376
      %v1379 = vsub.s32 4, %v1355
      %v1380 = vsel %vm1295, %v1379, %v1355
      %v1381 = vsel %vm1294, %v532, %v1378
      %v1382 = vsel %vm1294, 0, %v1380
      %v1383 = vcosq.f32.pop %v1381
      %v1384 = vsinq.f32.pop %v1381
      %vm1385 = vweird.f32 %v532
      %v1386 = vadd.s32 %v1382, 3
      %v1387 = vand.u32 %v1386, 3
      %vm1388 = vcmp.lt.s32.totalorder %v1387, 2
      %vm1389 = vcmp.eq.s32.totalorder %v1387, 0
      %v1390 = vxor.u32 %v1384, 2147483648
      %v1391 = vsel %vm1389, %v1383, %v1390
      %vm1392 = vcmp.eq.s32.totalorder %v1387, 2
      %v1393 = vxor.u32 %v1383, 2147483648
      %v1394 = vsel %vm1392, %v1393, %v1384
      %v1395 = vsel %vm1388, %v1391, %v1394
      %v1396 = vsel %vm1385, nan, %v1395
      %v1397 = vand.u32 2147483647, %v533
      %vm1398 = vcmp.le.f32.partialorder %v1397, 0.7853982
      %vm1399 = vcmp.lt.s32.totalorder %v533, 0
      %v1400 = vand.u32 %v533, 2139095040
      %v1401 = vshrl.u32 %v1400, 23
      %v1402 = vsub.s32 %v1401, 127
      %v1403 = vand.u32 2147483647, %v533
      %v1404 = vand.u32 %v1403, 8388607
      %v1405 = vor.u32 %v1404, 8388608
      %v1406 = vsub.s32 0, %v1405
      %v1407 = vadd.s32 %v1402, 1
      %vm1408 = vcmp.gt.s32.totalorder %v1407, 0
      %v1409 = vsel %vm1408, %v1407, 0
      %v1410 = vshrl.u32 %v1409, 5
      %v1411 = vand.u32 %v1409, 31
      %v1412 = vsub.s32 32, %v1411
      %v1413 = vshrl.u32 683565275, %v1412
      %v1414 = vshll.u32 683565275, %v1411
      %v1415 = vshrl.u32 2475754826, %v1412
      %v1416 = vor.u32 %v1414, %v1415
      %v1417 = vshll.u32 2475754826, %v1411
      %v1418 = vshrl.u32 2131351028, %v1412
      %v1419 = vor.u32 %v1417, %v1418
      %v1420 = vshll.u32 2131351028, %v1411
      %v1421 = vshrl.u32 2102212464, %v1412
      %v1422 = vor.u32 %v1420, %v1421
      %v1423 = vshll.u32 2102212464, %v1411
      %v1424 = vshrl.u32 920167782, %v1412
      %v1425 = vor.u32 %v1423, %v1424
      %v1426 = vshll.u32 920167782, %v1411
      %v1427 = vshrl.u32 1326507024, %v1412
      %v1428 = vor.u32 %v1426, %v1427
      %vm1429 = vcmp.lt.s32.totalorder %v1410, 1
      %vm1430 = vcmp.lt.s32.totalorder %v1410, 2
      %vm1431 = vcmp.lt.s32.totalorder %v1410, 3
      %vm1432 = vcmp.lt.s32.totalorder %v1410, 4
      %v1433 = vsel %vm1429, %v1413, %v1416
      %v1434 = vsel %vm1432, %v1422, 2102212464
      %v1435 = vsel %vm1431, %v1419, %v1434
      %v1436 = vsel %vm1430, %v1433, %v1435
      %v1437 = vsel %vm1429, %v1416, %v1419
      %v1438 = vsel %vm1432, %v1425, 920167782
      %v1439 = vsel %vm1431, %v1422, %v1438
      %v1440 = vsel %vm1430, %v1437, %v1439
      %v1441 = vsel %vm1429, %v1419, %v1422
      %v1442 = vsel %vm1432, %v1428, 1326507024
      %v1443 = vsel %vm1431, %v1425, %v1442
      %v1444 = vsel %vm1430, %v1441, %v1443
      %v1445 = vshll.u32 %v1405, 8
      %v1446 = vmul.u32.u64.compose %v1445, %v1444
      %v1447 = vextract.low.u32 %v1446
      %v1448 = vextract.high.u32 %v1446
      %v1449 = vmul.u32.u64.compose %v1445, %v1440
      %v1450 = vextract.low.u32 %v1449
      %v1451 = vextract.high.u32 %v1449
      %v1452 = vmul.u32 %v1445, %v1436
      %v1453 = vadd.s32 %v1448, %v1450
      %vm1454 = vc.u32 %v1448, %v1450
      %v1455 = vadd.s32 %v1451, 1
      %v1456 = vsel %vm1454, %v1455, %v1451
      %v1457 = vadd.s32 %v1452, %v1456
      %v1458 = vadd.s32 %v1457, 536870912
      %v1459 = vshrl.u32 %v1458, 30
      %v1460 = vshll.u32 %v1459, 30
      %v1461 = vsub.s32 %v1457, %v1460
      %vm1462 = vcmp.lt.s32.totalorder %v1461, 0
      %v1463 = vsub.s32 0, %v1461
      %v1464 = vsel %vm1462, %v1463, %v1461
      %v1465 = vclz %v1464
      %v1466 = vsub.s32 %v1465, 2
      %vm1467 = vcmp.gt.s32.totalorder 0, %v1466
      %v1468 = vsel %vm1467, 0, %v1466
      %v1469 = vsub.s32 32, %v1468
      %v1470 = vshll.u32 %v1461, %v1468
      %v1471 = vshrl.u32 %v1453, %v1469
      %v1472 = vor.u32 %v1470, %v1471
      %v1473 = vsub.s32 4294967266, %v1468
      %v1474 = vadd.s32 %v1473, 127
      %v1475 = vshll.u32 %v1474, 23
      %v1476 = vor.u32 4788187, %v1475
      %v1477 = vand.u32 2147483647, %v1476
      %v1479 = vcvt.s32.f32 %v1472
      %v1480 = vmul.f32 %v1479, %v1477
      %v1481 = vxor.u32 %v1480, 2147483648
      %v1482 = vsel %vm1399, %v1481, %v1480
      %v1483 = vsub.s32 4, %v1459
      %v1484 = vsel %vm1399, %v1483, %v1459
      %v1485 = vsel %vm1398, %v533, %v1482
      %v1486 = vsel %vm1398, 0, %v1484
      %v1487 = vcosq.f32.pop %v1485
      %v1488 = vsinq.f32.pop %v1485
      %vm1489 = vweird.f32 %v533
      %v1490 = vadd.s32 %v1486, 3
      %v1491 = vand.u32 %v1490, 3
      %vm1492 = vcmp.lt.s32.totalorder %v1491, 2
      %vm1493 = vcmp.eq.s32.totalorder %v1491, 0
      %v1494 = vxor.u32 %v1488, 2147483648
      %v1495 = vsel %vm1493, %v1487, %v1494
      %vm1496 = vcmp.eq.s32.totalorder %v1491, 2
      %v1497 = vxor.u32 %v1487, 2147483648
      %v1498 = vsel %vm1496, %v1497, %v1488
      %v1499 = vsel %vm1492, %v1495, %v1498
      %v1500 = vsel %vm1489, nan, %v1499
      %v1501 = vand.u32 2147483647, %v534
      %vm1502 = vcmp.le.f32.partialorder %v1501, 0.7853982
      %vm1503 = vcmp.lt.s32.totalorder %v534, 0
      %v1504 = vand.u32 %v534, 2139095040
      %v1505 = vshrl.u32 %v1504, 23
      %v1506 = vsub.s32 %v1505, 127
      %v1507 = vand.u32 2147483647, %v534
      %v1508 = vand.u32 %v1507, 8388607
      %v1509 = vor.u32 %v1508, 8388608
      %v1510 = vsub.s32 0, %v1509
      %v1511 = vadd.s32 %v1506, 1
      %vm1512 = vcmp.gt.s32.totalorder %v1511, 0
      %v1513 = vsel %vm1512, %v1511, 0
      %v1514 = vshrl.u32 %v1513, 5
      %v1515 = vand.u32 %v1513, 31
      %v1516 = vsub.s32 32, %v1515
      %v1517 = vshrl.u32 683565275, %v1516
      %v1518 = vshll.u32 683565275, %v1515
      %v1519 = vshrl.u32 2475754826, %v1516
      %v1520 = vor.u32 %v1518, %v1519
      %v1521 = vshll.u32 2475754826, %v1515
      %v1522 = vshrl.u32 2131351028, %v1516
      %v1523 = vor.u32 %v1521, %v1522
      %v1524 = vshll.u32 2131351028, %v1515
      %v1525 = vshrl.u32 2102212464, %v1516
      %v1526 = vor.u32 %v1524, %v1525
      %v1527 = vshll.u32 2102212464, %v1515
      %v1528 = vshrl.u32 920167782, %v1516
      %v1529 = vor.u32 %v1527, %v1528
      %v1530 = vshll.u32 920167782, %v1515
      %v1531 = vshrl.u32 1326507024, %v1516
      %v1532 = vor.u32 %v1530, %v1531
      %vm1533 = vcmp.lt.s32.totalorder %v1514, 1
      %vm1534 = vcmp.lt.s32.totalorder %v1514, 2
      %vm1535 = vcmp.lt.s32.totalorder %v1514, 3
      %vm1536 = vcmp.lt.s32.totalorder %v1514, 4
      %v1537 = vsel %vm1533, %v1517, %v1520
      %v1538 = vsel %vm1536, %v1526, 2102212464
      %v1539 = vsel %vm1535, %v1523, %v1538
      %v1540 = vsel %vm1534, %v1537, %v1539
      %v1541 = vsel %vm1533, %v1520, %v1523
      %v1542 = vsel %vm1536, %v1529, 920167782
      %v1543 = vsel %vm1535, %v1526, %v1542
      %v1544 = vsel %vm1534, %v1541, %v1543
      %v1545 = vsel %vm1533, %v1523, %v1526
      %v1546 = vsel %vm1536, %v1532, 1326507024
      %v1547 = vsel %vm1535, %v1529, %v1546
      %v1548 = vsel %vm1534, %v1545, %v1547
      %v1549 = vshll.u32 %v1509, 8
      %v1550 = vmul.u32.u64.compose %v1549, %v1548
      %v1551 = vextract.low.u32 %v1550
      %v1552 = vextract.high.u32 %v1550
      %v1553 = vmul.u32.u64.compose %v1549, %v1544
      %v1554 = vextract.low.u32 %v1553
      %v1555 = vextract.high.u32 %v1553
      %v1556 = vmul.u32 %v1549, %v1540
      %v1557 = vadd.s32 %v1552, %v1554
      %vm1558 = vc.u32 %v1552, %v1554
      %v1559 = vadd.s32 %v1555, 1
      %v1560 = vsel %vm1558, %v1559, %v1555
      %v1561 = vadd.s32 %v1556, %v1560
      %v1562 = vadd.s32 %v1561, 536870912
      %v1563 = vshrl.u32 %v1562, 30
      %v1564 = vshll.u32 %v1563, 30
      %v1565 = vsub.s32 %v1561, %v1564
      %vm1566 = vcmp.lt.s32.totalorder %v1565, 0
      %v1567 = vsub.s32 0, %v1565
      %v1568 = vsel %vm1566, %v1567, %v1565
      %v1569 = vclz %v1568
      %v1570 = vsub.s32 %v1569, 2
      %vm1571 = vcmp.gt.s32.totalorder 0, %v1570
      %v1572 = vsel %vm1571, 0, %v1570
      %v1573 = vsub.s32 32, %v1572
      %v1574 = vshll.u32 %v1565, %v1572
      %v1575 = vshrl.u32 %v1557, %v1573
      %v1576 = vor.u32 %v1574, %v1575
      %v1577 = vsub.s32 4294967266, %v1572
      %v1578 = vadd.s32 %v1577, 127
      %v1579 = vshll.u32 %v1578, 23
      %v1580 = vor.u32 4788187, %v1579
      %v1581 = vand.u32 2147483647, %v1580
      %v1583 = vcvt.s32.f32 %v1576
      %v1584 = vmul.f32 %v1583, %v1581
      %v1585 = vxor.u32 %v1584, 2147483648
      %v1586 = vsel %vm1503, %v1585, %v1584
      %v1587 = vsub.s32 4, %v1563
      %v1588 = vsel %vm1503, %v1587, %v1563
      %v1589 = vsel %vm1502, %v534, %v1586
      %v1590 = vsel %vm1502, 0, %v1588
      %v1591 = vcosq.f32.pop %v1589
      %v1592 = vsinq.f32.pop %v1589
      %vm1593 = vweird.f32 %v534
      %v1594 = vadd.s32 %v1590, 3
      %v1595 = vand.u32 %v1594, 3
      %vm1596 = vcmp.lt.s32.totalorder %v1595, 2
      %vm1597 = vcmp.eq.s32.totalorder %v1595, 0
      %v1598 = vxor.u32 %v1592, 2147483648
      %v1599 = vsel %vm1597, %v1591, %v1598
      %vm1600 = vcmp.eq.s32.totalorder %v1595, 2
      %v1601 = vxor.u32 %v1591, 2147483648
      %v1602 = vsel %vm1600, %v1601, %v1592
      %v1603 = vsel %vm1596, %v1599, %v1602
      %v1604 = vsel %vm1593, nan, %v1603
      %v1605 = vand.u32 2147483647, %v535
      %vm1606 = vcmp.le.f32.partialorder %v1605, 0.7853982
      %vm1607 = vcmp.lt.s32.totalorder %v535, 0
      %v1608 = vand.u32 %v535, 2139095040
      %v1609 = vshrl.u32 %v1608, 23
      %v1610 = vsub.s32 %v1609, 127
      %v1611 = vand.u32 2147483647, %v535
      %v1612 = vand.u32 %v1611, 8388607
      %v1613 = vor.u32 %v1612, 8388608
      %v1614 = vsub.s32 0, %v1613
      %v1615 = vadd.s32 %v1610, 1
      %vm1616 = vcmp.gt.s32.totalorder %v1615, 0
      %v1617 = vsel %vm1616, %v1615, 0
      %v1618 = vshrl.u32 %v1617, 5
      %v1619 = vand.u32 %v1617, 31
      %v1620 = vsub.s32 32, %v1619
      %v1621 = vshrl.u32 683565275, %v1620
      %v1622 = vshll.u32 683565275, %v1619
      %v1623 = vshrl.u32 2475754826, %v1620
      %v1624 = vor.u32 %v1622, %v1623
      %v1625 = vshll.u32 2475754826, %v1619
      %v1626 = vshrl.u32 2131351028, %v1620
      %v1627 = vor.u32 %v1625, %v1626
      %v1628 = vshll.u32 2131351028, %v1619
      %v1629 = vshrl.u32 2102212464, %v1620
      %v1630 = vor.u32 %v1628, %v1629
      %v1631 = vshll.u32 2102212464, %v1619
      %v1632 = vshrl.u32 920167782, %v1620
      %v1633 = vor.u32 %v1631, %v1632
      %v1634 = vshll.u32 920167782, %v1619
      %v1635 = vshrl.u32 1326507024, %v1620
      %v1636 = vor.u32 %v1634, %v1635
      %vm1637 = vcmp.lt.s32.totalorder %v1618, 1
      %vm1638 = vcmp.lt.s32.totalorder %v1618, 2
      %vm1639 = vcmp.lt.s32.totalorder %v1618, 3
      %vm1640 = vcmp.lt.s32.totalorder %v1618, 4
      %v1641 = vsel %vm1637, %v1621, %v1624
      %v1642 = vsel %vm1640, %v1630, 2102212464
      %v1643 = vsel %vm1639, %v1627, %v1642
      %v1644 = vsel %vm1638, %v1641, %v1643
      %v1645 = vsel %vm1637, %v1624, %v1627
      %v1646 = vsel %vm1640, %v1633, 920167782
      %v1647 = vsel %vm1639, %v1630, %v1646
      %v1648 = vsel %vm1638, %v1645, %v1647
      %v1649 = vsel %vm1637, %v1627, %v1630
      %v1650 = vsel %vm1640, %v1636, 1326507024
      %v1651 = vsel %vm1639, %v1633, %v1650
      %v1652 = vsel %vm1638, %v1649, %v1651
      %v1653 = vshll.u32 %v1613, 8
      %v1654 = vmul.u32.u64.compose %v1653, %v1652
      %v1655 = vextract.low.u32 %v1654
      %v1656 = vextract.high.u32 %v1654
      %v1657 = vmul.u32.u64.compose %v1653, %v1648
      %v1658 = vextract.low.u32 %v1657
      %v1659 = vextract.high.u32 %v1657
      %v1660 = vmul.u32 %v1653, %v1644
      %v1661 = vadd.s32 %v1656, %v1658
      %vm1662 = vc.u32 %v1656, %v1658
      %v1663 = vadd.s32 %v1659, 1
      %v1664 = vsel %vm1662, %v1663, %v1659
      %v1665 = vadd.s32 %v1660, %v1664
      %v1666 = vadd.s32 %v1665, 536870912
      %v1667 = vshrl.u32 %v1666, 30
      %v1668 = vshll.u32 %v1667, 30
      %v1669 = vsub.s32 %v1665, %v1668
      %vm1670 = vcmp.lt.s32.totalorder %v1669, 0
      %v1671 = vsub.s32 0, %v1669
      %v1672 = vsel %vm1670, %v1671, %v1669
      %v1673 = vclz %v1672
      %v1674 = vsub.s32 %v1673, 2
      %vm1675 = vcmp.gt.s32.totalorder 0, %v1674
      %v1676 = vsel %vm1675, 0, %v1674
      %v1677 = vsub.s32 32, %v1676
      %v1678 = vshll.u32 %v1669, %v1676
      %v1679 = vshrl.u32 %v1661, %v1677
      %v1680 = vor.u32 %v1678, %v1679
      %v1681 = vsub.s32 4294967266, %v1676
      %v1682 = vadd.s32 %v1681, 127
      %v1683 = vshll.u32 %v1682, 23
      %v1684 = vor.u32 4788187, %v1683
      %v1685 = vand.u32 2147483647, %v1684
      %v1687 = vcvt.s32.f32 %v1680
      %v1688 = vmul.f32 %v1687, %v1685
      %v1689 = vxor.u32 %v1688, 2147483648
      %v1690 = vsel %vm1607, %v1689, %v1688
      %v1691 = vsub.s32 4, %v1667
      %v1692 = vsel %vm1607, %v1691, %v1667
      %v1693 = vsel %vm1606, %v535, %v1690
      %v1694 = vsel %vm1606, 0, %v1692
      %v1695 = vcosq.f32.pop %v1693
      %v1696 = vsinq.f32.pop %v1693
      %vm1697 = vweird.f32 %v535
      %v1698 = vadd.s32 %v1694, 3
      %v1699 = vand.u32 %v1698, 3
      %vm1700 = vcmp.lt.s32.totalorder %v1699, 2
      %vm1701 = vcmp.eq.s32.totalorder %v1699, 0
      %v1702 = vxor.u32 %v1696, 2147483648
      %v1703 = vsel %vm1701, %v1695, %v1702
      %vm1704 = vcmp.eq.s32.totalorder %v1699, 2
      %v1705 = vxor.u32 %v1695, 2147483648
      %v1706 = vsel %vm1704, %v1705, %v1696
      %v1707 = vsel %vm1700, %v1703, %v1706
      %v1708 = vsel %vm1697, nan, %v1707
      %v1709 = vand.u32 2147483647, %v536
      %vm1710 = vcmp.le.f32.partialorder %v1709, 0.7853982
      %vm1711 = vcmp.lt.s32.totalorder %v536, 0
      %v1712 = vand.u32 %v536, 2139095040
      %v1713 = vshrl.u32 %v1712, 23
      %v1714 = vsub.s32 %v1713, 127
      %v1715 = vand.u32 2147483647, %v536
      %v1716 = vand.u32 %v1715, 8388607
      %v1717 = vor.u32 %v1716, 8388608
      %v1718 = vsub.s32 0, %v1717
      %v1719 = vadd.s32 %v1714, 1
      %vm1720 = vcmp.gt.s32.totalorder %v1719, 0
      %v1721 = vsel %vm1720, %v1719, 0
      %v1722 = vshrl.u32 %v1721, 5
      %v1723 = vand.u32 %v1721, 31
      %v1724 = vsub.s32 32, %v1723
      %v1725 = vshrl.u32 683565275, %v1724
      %v1726 = vshll.u32 683565275, %v1723
      %v1727 = vshrl.u32 2475754826, %v1724
      %v1728 = vor.u32 %v1726, %v1727
      %v1729 = vshll.u32 2475754826, %v1723
      %v1730 = vshrl.u32 2131351028, %v1724
      %v1731 = vor.u32 %v1729, %v1730
      %v1732 = vshll.u32 2131351028, %v1723
      %v1733 = vshrl.u32 2102212464, %v1724
      %v1734 = vor.u32 %v1732, %v1733
      %v1735 = vshll.u32 2102212464, %v1723
      %v1736 = vshrl.u32 920167782, %v1724
      %v1737 = vor.u32 %v1735, %v1736
      %v1738 = vshll.u32 920167782, %v1723
      %v1739 = vshrl.u32 1326507024, %v1724
      %v1740 = vor.u32 %v1738, %v1739
      %vm1741 = vcmp.lt.s32.totalorder %v1722, 1
      %vm1742 = vcmp.lt.s32.totalorder %v1722, 2
      %vm1743 = vcmp.lt.s32.totalorder %v1722, 3
      %vm1744 = vcmp.lt.s32.totalorder %v1722, 4
      %v1745 = vsel %vm1741, %v1725, %v1728
      %v1746 = vsel %vm1744, %v1734, 2102212464
      %v1747 = vsel %vm1743, %v1731, %v1746
      %v1748 = vsel %vm1742, %v1745, %v1747
      %v1749 = vsel %vm1741, %v1728, %v1731
      %v1750 = vsel %vm1744, %v1737, 920167782
      %v1751 = vsel %vm1743, %v1734, %v1750
      %v1752 = vsel %vm1742, %v1749, %v1751
      %v1753 = vsel %vm1741, %v1731, %v1734
      %v1754 = vsel %vm1744, %v1740, 1326507024
      %v1755 = vsel %vm1743, %v1737, %v1754
      %v1756 = vsel %vm1742, %v1753, %v1755
      %v1757 = vshll.u32 %v1717, 8
      %v1758 = vmul.u32.u64.compose %v1757, %v1756
      %v1759 = vextract.low.u32 %v1758
      %v1760 = vextract.high.u32 %v1758
      %v1761 = vmul.u32.u64.compose %v1757, %v1752
      %v1762 = vextract.low.u32 %v1761
      %v1763 = vextract.high.u32 %v1761
      %v1764 = vmul.u32 %v1757, %v1748
      %v1765 = vadd.s32 %v1760, %v1762
      %vm1766 = vc.u32 %v1760, %v1762
      %v1767 = vadd.s32 %v1763, 1
      %v1768 = vsel %vm1766, %v1767, %v1763
      %v1769 = vadd.s32 %v1764, %v1768
      %v1770 = vadd.s32 %v1769, 536870912
      %v1771 = vshrl.u32 %v1770, 30
      %v1772 = vshll.u32 %v1771, 30
      %v1773 = vsub.s32 %v1769, %v1772
      %vm1774 = vcmp.lt.s32.totalorder %v1773, 0
      %v1775 = vsub.s32 0, %v1773
      %v1776 = vsel %vm1774, %v1775, %v1773
      %v1777 = vclz %v1776
      %v1778 = vsub.s32 %v1777, 2
      %vm1779 = vcmp.gt.s32.totalorder 0, %v1778
      %v1780 = vsel %vm1779, 0, %v1778
      %v1781 = vsub.s32 32, %v1780
      %v1782 = vshll.u32 %v1773, %v1780
      %v1783 = vshrl.u32 %v1765, %v1781
      %v1784 = vor.u32 %v1782, %v1783
      %v1785 = vsub.s32 4294967266, %v1780
      %v1786 = vadd.s32 %v1785, 127
      %v1787 = vshll.u32 %v1786, 23
      %v1788 = vor.u32 4788187, %v1787
      %v1789 = vand.u32 2147483647, %v1788
      %v1791 = vcvt.s32.f32 %v1784
      %v1792 = vmul.f32 %v1791, %v1789
      %v1793 = vxor.u32 %v1792, 2147483648
      %v1794 = vsel %vm1711, %v1793, %v1792
      %v1795 = vsub.s32 4, %v1771
      %v1796 = vsel %vm1711, %v1795, %v1771
      %v1797 = vsel %vm1710, %v536, %v1794
      %v1798 = vsel %vm1710, 0, %v1796
      %v1799 = vcosq.f32.pop %v1797
      %v1800 = vsinq.f32.pop %v1797
      %vm1801 = vweird.f32 %v536
      %v1802 = vadd.s32 %v1798, 3
      %v1803 = vand.u32 %v1802, 3
      %vm1804 = vcmp.lt.s32.totalorder %v1803, 2
      %vm1805 = vcmp.eq.s32.totalorder %v1803, 0
      %v1806 = vxor.u32 %v1800, 2147483648
      %v1807 = vsel %vm1805, %v1799, %v1806
      %vm1808 = vcmp.eq.s32.totalorder %v1803, 2
      %v1809 = vxor.u32 %v1799, 2147483648
      %v1810 = vsel %vm1808, %v1809, %v1800
      %v1811 = vsel %vm1804, %v1807, %v1810
      %v1812 = vsel %vm1801, nan, %v1811
      %v1813 = vand.u32 2147483647, %v537
      %vm1814 = vcmp.le.f32.partialorder %v1813, 0.7853982
      %vm1815 = vcmp.lt.s32.totalorder %v537, 0
      %v1816 = vand.u32 %v537, 2139095040
      %v1817 = vshrl.u32 %v1816, 23
      %v1818 = vsub.s32 %v1817, 127
      %v1819 = vand.u32 2147483647, %v537
      %v1820 = vand.u32 %v1819, 8388607
      %v1821 = vor.u32 %v1820, 8388608
      %v1822 = vsub.s32 0, %v1821
      %v1823 = vadd.s32 %v1818, 1
      %vm1824 = vcmp.gt.s32.totalorder %v1823, 0
      %v1825 = vsel %vm1824, %v1823, 0
      %v1826 = vshrl.u32 %v1825, 5
      %v1827 = vand.u32 %v1825, 31
      %v1828 = vsub.s32 32, %v1827
      %v1829 = vshrl.u32 683565275, %v1828
      %v1830 = vshll.u32 683565275, %v1827
      %v1831 = vshrl.u32 2475754826, %v1828
      %v1832 = vor.u32 %v1830, %v1831
      %v1833 = vshll.u32 2475754826, %v1827
      %v1834 = vshrl.u32 2131351028, %v1828
      %v1835 = vor.u32 %v1833, %v1834
      %v1836 = vshll.u32 2131351028, %v1827
      %v1837 = vshrl.u32 2102212464, %v1828
      %v1838 = vor.u32 %v1836, %v1837
      %v1839 = vshll.u32 2102212464, %v1827
      %v1840 = vshrl.u32 920167782, %v1828
      %v1841 = vor.u32 %v1839, %v1840
      %v1842 = vshll.u32 920167782, %v1827
      %v1843 = vshrl.u32 1326507024, %v1828
      %v1844 = vor.u32 %v1842, %v1843
      %vm1845 = vcmp.lt.s32.totalorder %v1826, 1
      %vm1846 = vcmp.lt.s32.totalorder %v1826, 2
      %vm1847 = vcmp.lt.s32.totalorder %v1826, 3
      %vm1848 = vcmp.lt.s32.totalorder %v1826, 4
      %v1849 = vsel %vm1845, %v1829, %v1832
      %v1850 = vsel %vm1848, %v1838, 2102212464
      %v1851 = vsel %vm1847, %v1835, %v1850
      %v1852 = vsel %vm1846, %v1849, %v1851
      %v1853 = vsel %vm1845, %v1832, %v1835
      %v1854 = vsel %vm1848, %v1841, 920167782
      %v1855 = vsel %vm1847, %v1838, %v1854
      %v1856 = vsel %vm1846, %v1853, %v1855
      %v1857 = vsel %vm1845, %v1835, %v1838
      %v1858 = vsel %vm1848, %v1844, 1326507024
      %v1859 = vsel %vm1847, %v1841, %v1858
      %v1860 = vsel %vm1846, %v1857, %v1859
      %v1861 = vshll.u32 %v1821, 8
      %v1862 = vmul.u32.u64.compose %v1861, %v1860
      %v1863 = vextract.low.u32 %v1862
      %v1864 = vextract.high.u32 %v1862
      %v1865 = vmul.u32.u64.compose %v1861, %v1856
      %v1866 = vextract.low.u32 %v1865
      %v1867 = vextract.high.u32 %v1865
      %v1868 = vmul.u32 %v1861, %v1852
      %v1869 = vadd.s32 %v1864, %v1866
      %vm1870 = vc.u32 %v1864, %v1866
      %v1871 = vadd.s32 %v1867, 1
      %v1872 = vsel %vm1870, %v1871, %v1867
      %v1873 = vadd.s32 %v1868, %v1872
      %v1874 = vadd.s32 %v1873, 536870912
      %v1875 = vshrl.u32 %v1874, 30
      %v1876 = vshll.u32 %v1875, 30
      %v1877 = vsub.s32 %v1873, %v1876
      %vm1878 = vcmp.lt.s32.totalorder %v1877, 0
      %v1879 = vsub.s32 0, %v1877
      %v1880 = vsel %vm1878, %v1879, %v1877
      %v1881 = vclz %v1880
      %v1882 = vsub.s32 %v1881, 2
      %vm1883 = vcmp.gt.s32.totalorder 0, %v1882
      %v1884 = vsel %vm1883, 0, %v1882
      %v1885 = vsub.s32 32, %v1884
      %v1886 = vshll.u32 %v1877, %v1884
      %v1887 = vshrl.u32 %v1869, %v1885
      %v1888 = vor.u32 %v1886, %v1887
      %v1889 = vsub.s32 4294967266, %v1884
      %v1890 = vadd.s32 %v1889, 127
      %v1891 = vshll.u32 %v1890, 23
      %v1892 = vor.u32 4788187, %v1891
      %v1893 = vand.u32 2147483647, %v1892
      %v1895 = vcvt.s32.f32 %v1888
      %v1896 = vmul.f32 %v1895, %v1893
      %v1897 = vxor.u32 %v1896, 2147483648
      %v1898 = vsel %vm1815, %v1897, %v1896
      %v1899 = vsub.s32 4, %v1875
      %v1900 = vsel %vm1815, %v1899, %v1875
      %v1901 = vsel %vm1814, %v537, %v1898
      %v1902 = vsel %vm1814, 0, %v1900
      %v1903 = vcosq.f32.pop %v1901
      %v1904 = vsinq.f32.pop %v1901
      %vm1905 = vweird.f32 %v537
      %v1906 = vadd.s32 %v1902, 3
      %v1907 = vand.u32 %v1906, 3
      %vm1908 = vcmp.lt.s32.totalorder %v1907, 2
      %vm1909 = vcmp.eq.s32.totalorder %v1907, 0
      %v1910 = vxor.u32 %v1904, 2147483648
      %v1911 = vsel %vm1909, %v1903, %v1910
      %vm1912 = vcmp.eq.s32.totalorder %v1907, 2
      %v1913 = vxor.u32 %v1903, 2147483648
      %v1914 = vsel %vm1912, %v1913, %v1904
      %v1915 = vsel %vm1908, %v1911, %v1914
      %v1916 = vsel %vm1905, nan, %v1915
      %v1917 = vand.u32 2147483647, %v538
      %vm1918 = vcmp.le.f32.partialorder %v1917, 0.7853982
      %vm1919 = vcmp.lt.s32.totalorder %v538, 0
      %v1920 = vand.u32 %v538, 2139095040
      %v1921 = vshrl.u32 %v1920, 23
      %v1922 = vsub.s32 %v1921, 127
      %v1923 = vand.u32 2147483647, %v538
      %v1924 = vand.u32 %v1923, 8388607
      %v1925 = vor.u32 %v1924, 8388608
      %v1926 = vsub.s32 0, %v1925
      %v1927 = vadd.s32 %v1922, 1
      %vm1928 = vcmp.gt.s32.totalorder %v1927, 0
      %v1929 = vsel %vm1928, %v1927, 0
      %v1930 = vshrl.u32 %v1929, 5
      %v1931 = vand.u32 %v1929, 31
      %v1932 = vsub.s32 32, %v1931
      %v1933 = vshrl.u32 683565275, %v1932
      %v1934 = vshll.u32 683565275, %v1931
      %v1935 = vshrl.u32 2475754826, %v1932
      %v1936 = vor.u32 %v1934, %v1935
      %v1937 = vshll.u32 2475754826, %v1931
      %v1938 = vshrl.u32 2131351028, %v1932
      %v1939 = vor.u32 %v1937, %v1938
      %v1940 = vshll.u32 2131351028, %v1931
      %v1941 = vshrl.u32 2102212464, %v1932
      %v1942 = vor.u32 %v1940, %v1941
      %v1943 = vshll.u32 2102212464, %v1931
      %v1944 = vshrl.u32 920167782, %v1932
      %v1945 = vor.u32 %v1943, %v1944
      %v1946 = vshll.u32 920167782, %v1931
      %v1947 = vshrl.u32 1326507024, %v1932
      %v1948 = vor.u32 %v1946, %v1947
      %vm1949 = vcmp.lt.s32.totalorder %v1930, 1
      %vm1950 = vcmp.lt.s32.totalorder %v1930, 2
      %vm1951 = vcmp.lt.s32.totalorder %v1930, 3
      %vm1952 = vcmp.lt.s32.totalorder %v1930, 4
      %v1953 = vsel %vm1949, %v1933, %v1936
      %v1954 = vsel %vm1952, %v1942, 2102212464
      %v1955 = vsel %vm1951, %v1939, %v1954
      %v1956 = vsel %vm1950, %v1953, %v1955
      %v1957 = vsel %vm1949, %v1936, %v1939
      %v1958 = vsel %vm1952, %v1945, 920167782
      %v1959 = vsel %vm1951, %v1942, %v1958
      %v1960 = vsel %vm1950, %v1957, %v1959
      %v1961 = vsel %vm1949, %v1939, %v1942
      %v1962 = vsel %vm1952, %v1948, 1326507024
      %v1963 = vsel %vm1951, %v1945, %v1962
      %v1964 = vsel %vm1950, %v1961, %v1963
      %v1965 = vshll.u32 %v1925, 8
      %v1966 = vmul.u32.u64.compose %v1965, %v1964
      %v1967 = vextract.low.u32 %v1966
      %v1968 = vextract.high.u32 %v1966
      %v1969 = vmul.u32.u64.compose %v1965, %v1960
      %v1970 = vextract.low.u32 %v1969
      %v1971 = vextract.high.u32 %v1969
      %v1972 = vmul.u32 %v1965, %v1956
      %v1973 = vadd.s32 %v1968, %v1970
      %vm1974 = vc.u32 %v1968, %v1970
      %v1975 = vadd.s32 %v1971, 1
      %v1976 = vsel %vm1974, %v1975, %v1971
      %v1977 = vadd.s32 %v1972, %v1976
      %v1978 = vadd.s32 %v1977, 536870912
      %v1979 = vshrl.u32 %v1978, 30
      %v1980 = vshll.u32 %v1979, 30
      %v1981 = vsub.s32 %v1977, %v1980
      %vm1982 = vcmp.lt.s32.totalorder %v1981, 0
      %v1983 = vsub.s32 0, %v1981
      %v1984 = vsel %vm1982, %v1983, %v1981
      %v1985 = vclz %v1984
      %v1986 = vsub.s32 %v1985, 2
      %vm1987 = vcmp.gt.s32.totalorder 0, %v1986
      %v1988 = vsel %vm1987, 0, %v1986
      %v1989 = vsub.s32 32, %v1988
      %v1990 = vshll.u32 %v1981, %v1988
      %v1991 = vshrl.u32 %v1973, %v1989
      %v1992 = vor.u32 %v1990, %v1991
      %v1993 = vsub.s32 4294967266, %v1988
      %v1994 = vadd.s32 %v1993, 127
      %v1995 = vshll.u32 %v1994, 23
      %v1996 = vor.u32 4788187, %v1995
      %v1997 = vand.u32 2147483647, %v1996
      %v1999 = vcvt.s32.f32 %v1992
      %v2000 = vmul.f32 %v1999, %v1997
      %v2001 = vxor.u32 %v2000, 2147483648
      %v2002 = vsel %vm1919, %v2001, %v2000
      %v2003 = vsub.s32 4, %v1979
      %v2004 = vsel %vm1919, %v2003, %v1979
      %v2005 = vsel %vm1918, %v538, %v2002
      %v2006 = vsel %vm1918, 0, %v2004
      %v2007 = vcosq.f32.pop %v2005
      %v2008 = vsinq.f32.pop %v2005
      %vm2009 = vweird.f32 %v538
      %v2010 = vadd.s32 %v2006, 3
      %v2011 = vand.u32 %v2010, 3
      %vm2012 = vcmp.lt.s32.totalorder %v2011, 2
      %vm2013 = vcmp.eq.s32.totalorder %v2011, 0
      %v2014 = vxor.u32 %v2008, 2147483648
      %v2015 = vsel %vm2013, %v2007, %v2014
      %vm2016 = vcmp.eq.s32.totalorder %v2011, 2
      %v2017 = vxor.u32 %v2007, 2147483648
      %v2018 = vsel %vm2016, %v2017, %v2008
      %v2019 = vsel %vm2012, %v2015, %v2018
      %v2020 = vsel %vm2009, nan, %v2019
      %v2021 = vand.u32 2147483647, %v539
      %vm2022 = vcmp.le.f32.partialorder %v2021, 0.7853982
      %vm2023 = vcmp.lt.s32.totalorder %v539, 0
      %v2024 = vand.u32 %v539, 2139095040
      %v2025 = vshrl.u32 %v2024, 23
      %v2026 = vsub.s32 %v2025, 127
      %v2027 = vand.u32 2147483647, %v539
      %v2028 = vand.u32 %v2027, 8388607
      %v2029 = vor.u32 %v2028, 8388608
      %v2030 = vsub.s32 0, %v2029
      %v2031 = vadd.s32 %v2026, 1
      %vm2032 = vcmp.gt.s32.totalorder %v2031, 0
      %v2033 = vsel %vm2032, %v2031, 0
      %v2034 = vshrl.u32 %v2033, 5
      %v2035 = vand.u32 %v2033, 31
      %v2036 = vsub.s32 32, %v2035
      %v2037 = vshrl.u32 683565275, %v2036
      %v2038 = vshll.u32 683565275, %v2035
      %v2039 = vshrl.u32 2475754826, %v2036
      %v2040 = vor.u32 %v2038, %v2039
      %v2041 = vshll.u32 2475754826, %v2035
      %v2042 = vshrl.u32 2131351028, %v2036
      %v2043 = vor.u32 %v2041, %v2042
      %v2044 = vshll.u32 2131351028, %v2035
      %v2045 = vshrl.u32 2102212464, %v2036
      %v2046 = vor.u32 %v2044, %v2045
      %v2047 = vshll.u32 2102212464, %v2035
      %v2048 = vshrl.u32 920167782, %v2036
      %v2049 = vor.u32 %v2047, %v2048
      %v2050 = vshll.u32 920167782, %v2035
      %v2051 = vshrl.u32 1326507024, %v2036
      %v2052 = vor.u32 %v2050, %v2051
      %vm2053 = vcmp.lt.s32.totalorder %v2034, 1
      %vm2054 = vcmp.lt.s32.totalorder %v2034, 2
      %vm2055 = vcmp.lt.s32.totalorder %v2034, 3
      %vm2056 = vcmp.lt.s32.totalorder %v2034, 4
      %v2057 = vsel %vm2053, %v2037, %v2040
      %v2058 = vsel %vm2056, %v2046, 2102212464
      %v2059 = vsel %vm2055, %v2043, %v2058
      %v2060 = vsel %vm2054, %v2057, %v2059
      %v2061 = vsel %vm2053, %v2040, %v2043
      %v2062 = vsel %vm2056, %v2049, 920167782
      %v2063 = vsel %vm2055, %v2046, %v2062
      %v2064 = vsel %vm2054, %v2061, %v2063
      %v2065 = vsel %vm2053, %v2043, %v2046
      %v2066 = vsel %vm2056, %v2052, 1326507024
      %v2067 = vsel %vm2055, %v2049, %v2066
      %v2068 = vsel %vm2054, %v2065, %v2067
      %v2069 = vshll.u32 %v2029, 8
      %v2070 = vmul.u32.u64.compose %v2069, %v2068
      %v2071 = vextract.low.u32 %v2070
      %v2072 = vextract.high.u32 %v2070
      %v2073 = vmul.u32.u64.compose %v2069, %v2064
      %v2074 = vextract.low.u32 %v2073
      %v2075 = vextract.high.u32 %v2073
      %v2076 = vmul.u32 %v2069, %v2060
      %v2077 = vadd.s32 %v2072, %v2074
      %vm2078 = vc.u32 %v2072, %v2074
      %v2079 = vadd.s32 %v2075, 1
      %v2080 = vsel %vm2078, %v2079, %v2075
      %v2081 = vadd.s32 %v2076, %v2080
      %v2082 = vadd.s32 %v2081, 536870912
      %v2083 = vshrl.u32 %v2082, 30
      %v2084 = vshll.u32 %v2083, 30
      %v2085 = vsub.s32 %v2081, %v2084
      %vm2086 = vcmp.lt.s32.totalorder %v2085, 0
      %v2087 = vsub.s32 0, %v2085
      %v2088 = vsel %vm2086, %v2087, %v2085
      %v2089 = vclz %v2088
      %v2090 = vsub.s32 %v2089, 2
      %vm2091 = vcmp.gt.s32.totalorder 0, %v2090
      %v2092 = vsel %vm2091, 0, %v2090
      %v2093 = vsub.s32 32, %v2092
      %v2094 = vshll.u32 %v2085, %v2092
      %v2095 = vshrl.u32 %v2077, %v2093
      %v2096 = vor.u32 %v2094, %v2095
      %v2097 = vsub.s32 4294967266, %v2092
      %v2098 = vadd.s32 %v2097, 127
      %v2099 = vshll.u32 %v2098, 23
      %v2100 = vor.u32 4788187, %v2099
      %v2101 = vand.u32 2147483647, %v2100
      %v2103 = vcvt.s32.f32 %v2096
      %v2104 = vmul.f32 %v2103, %v2101
      %v2105 = vxor.u32 %v2104, 2147483648
      %v2106 = vsel %vm2023, %v2105, %v2104
      %v2107 = vsub.s32 4, %v2083
      %v2108 = vsel %vm2023, %v2107, %v2083
      %v2109 = vsel %vm2022, %v539, %v2106
      %v2110 = vsel %vm2022, 0, %v2108
      %v2111 = vcosq.f32.pop %v2109
      %v2112 = vsinq.f32.pop %v2109
      %vm2113 = vweird.f32 %v539
      %v2114 = vadd.s32 %v2110, 3
      %v2115 = vand.u32 %v2114, 3
      %vm2116 = vcmp.lt.s32.totalorder %v2115, 2
      %vm2117 = vcmp.eq.s32.totalorder %v2115, 0
      %v2118 = vxor.u32 %v2112, 2147483648
      %v2119 = vsel %vm2117, %v2111, %v2118
      %vm2120 = vcmp.eq.s32.totalorder %v2115, 2
      %v2121 = vxor.u32 %v2111, 2147483648
      %v2122 = vsel %vm2120, %v2121, %v2112
      %v2123 = vsel %vm2116, %v2119, %v2122
      %v2124 = vsel %vm2113, nan, %v2123
      %v2125 = vand.u32 2147483647, %v540
      %vm2126 = vcmp.le.f32.partialorder %v2125, 0.7853982
      %vm2127 = vcmp.lt.s32.totalorder %v540, 0
      %v2128 = vand.u32 %v540, 2139095040
      %v2129 = vshrl.u32 %v2128, 23
      %v2130 = vsub.s32 %v2129, 127
      %v2131 = vand.u32 2147483647, %v540
      %v2132 = vand.u32 %v2131, 8388607
      %v2133 = vor.u32 %v2132, 8388608
      %v2134 = vsub.s32 0, %v2133
      %v2135 = vadd.s32 %v2130, 1
      %vm2136 = vcmp.gt.s32.totalorder %v2135, 0
      %v2137 = vsel %vm2136, %v2135, 0
      %v2138 = vshrl.u32 %v2137, 5
      %v2139 = vand.u32 %v2137, 31
      %v2140 = vsub.s32 32, %v2139
      %v2141 = vshrl.u32 683565275, %v2140
      %v2142 = vshll.u32 683565275, %v2139
      %v2143 = vshrl.u32 2475754826, %v2140
      %v2144 = vor.u32 %v2142, %v2143
      %v2145 = vshll.u32 2475754826, %v2139
      %v2146 = vshrl.u32 2131351028, %v2140
      %v2147 = vor.u32 %v2145, %v2146
      %v2148 = vshll.u32 2131351028, %v2139
      %v2149 = vshrl.u32 2102212464, %v2140
      %v2150 = vor.u32 %v2148, %v2149
      %v2151 = vshll.u32 2102212464, %v2139
      %v2152 = vshrl.u32 920167782, %v2140
      %v2153 = vor.u32 %v2151, %v2152
      %v2154 = vshll.u32 920167782, %v2139
      %v2155 = vshrl.u32 1326507024, %v2140
      %v2156 = vor.u32 %v2154, %v2155
      %vm2157 = vcmp.lt.s32.totalorder %v2138, 1
      %vm2158 = vcmp.lt.s32.totalorder %v2138, 2
      %vm2159 = vcmp.lt.s32.totalorder %v2138, 3
      %vm2160 = vcmp.lt.s32.totalorder %v2138, 4
      %v2161 = vsel %vm2157, %v2141, %v2144
      %v2162 = vsel %vm2160, %v2150, 2102212464
      %v2163 = vsel %vm2159, %v2147, %v2162
      %v2164 = vsel %vm2158, %v2161, %v2163
      %v2165 = vsel %vm2157, %v2144, %v2147
      %v2166 = vsel %vm2160, %v2153, 920167782
      %v2167 = vsel %vm2159, %v2150, %v2166
      %v2168 = vsel %vm2158, %v2165, %v2167
      %v2169 = vsel %vm2157, %v2147, %v2150
      %v2170 = vsel %vm2160, %v2156, 1326507024
      %v2171 = vsel %vm2159, %v2153, %v2170
      %v2172 = vsel %vm2158, %v2169, %v2171
      %v2173 = vshll.u32 %v2133, 8
      %v2174 = vmul.u32.u64.compose %v2173, %v2172
      %v2175 = vextract.low.u32 %v2174
      %v2176 = vextract.high.u32 %v2174
      %v2177 = vmul.u32.u64.compose %v2173, %v2168
      %v2178 = vextract.low.u32 %v2177
      %v2179 = vextract.high.u32 %v2177
      %v2180 = vmul.u32 %v2173, %v2164
      %v2181 = vadd.s32 %v2176, %v2178
      %vm2182 = vc.u32 %v2176, %v2178
      %v2183 = vadd.s32 %v2179, 1
      %v2184 = vsel %vm2182, %v2183, %v2179
      %v2185 = vadd.s32 %v2180, %v2184
      %v2186 = vadd.s32 %v2185, 536870912
      %v2187 = vshrl.u32 %v2186, 30
      %v2188 = vshll.u32 %v2187, 30
      %v2189 = vsub.s32 %v2185, %v2188
      %vm2190 = vcmp.lt.s32.totalorder %v2189, 0
      %v2191 = vsub.s32 0, %v2189
      %v2192 = vsel %vm2190, %v2191, %v2189
      %v2193 = vclz %v2192
      %v2194 = vsub.s32 %v2193, 2
      %vm2195 = vcmp.gt.s32.totalorder 0, %v2194
      %v2196 = vsel %vm2195, 0, %v2194
      %v2197 = vsub.s32 32, %v2196
      %v2198 = vshll.u32 %v2189, %v2196
      %v2199 = vshrl.u32 %v2181, %v2197
      %v2200 = vor.u32 %v2198, %v2199
      %v2201 = vsub.s32 4294967266, %v2196
      %v2202 = vadd.s32 %v2201, 127
      %v2203 = vshll.u32 %v2202, 23
      %v2204 = vor.u32 4788187, %v2203
      %v2205 = vand.u32 2147483647, %v2204
      %v2207 = vcvt.s32.f32 %v2200
      %v2208 = vmul.f32 %v2207, %v2205
      %v2209 = vxor.u32 %v2208, 2147483648
      %v2210 = vsel %vm2127, %v2209, %v2208
      %v2211 = vsub.s32 4, %v2187
      %v2212 = vsel %vm2127, %v2211, %v2187
      %v2213 = vsel %vm2126, %v540, %v2210
      %v2214 = vsel %vm2126, 0, %v2212
      %v2215 = vcosq.f32.pop %v2213
      %v2216 = vsinq.f32.pop %v2213
      %vm2217 = vweird.f32 %v540
      %v2218 = vadd.s32 %v2214, 3
      %v2219 = vand.u32 %v2218, 3
      %vm2220 = vcmp.lt.s32.totalorder %v2219, 2
      %vm2221 = vcmp.eq.s32.totalorder %v2219, 0
      %v2222 = vxor.u32 %v2216, 2147483648
      %v2223 = vsel %vm2221, %v2215, %v2222
      %vm2224 = vcmp.eq.s32.totalorder %v2219, 2
      %v2225 = vxor.u32 %v2215, 2147483648
      %v2226 = vsel %vm2224, %v2225, %v2216
      %v2227 = vsel %vm2220, %v2223, %v2226
      %v2228 = vsel %vm2217, nan, %v2227
      %v2229 = vand.u32 2147483647, %v541
      %vm2230 = vcmp.le.f32.partialorder %v2229, 0.7853982
      %vm2231 = vcmp.lt.s32.totalorder %v541, 0
      %v2232 = vand.u32 %v541, 2139095040
      %v2233 = vshrl.u32 %v2232, 23
      %v2234 = vsub.s32 %v2233, 127
      %v2235 = vand.u32 2147483647, %v541
      %v2236 = vand.u32 %v2235, 8388607
      %v2237 = vor.u32 %v2236, 8388608
      %v2238 = vsub.s32 0, %v2237
      %v2239 = vadd.s32 %v2234, 1
      %vm2240 = vcmp.gt.s32.totalorder %v2239, 0
      %v2241 = vsel %vm2240, %v2239, 0
      %v2242 = vshrl.u32 %v2241, 5
      %v2243 = vand.u32 %v2241, 31
      %v2244 = vsub.s32 32, %v2243
      %v2245 = vshrl.u32 683565275, %v2244
      %v2246 = vshll.u32 683565275, %v2243
      %v2247 = vshrl.u32 2475754826, %v2244
      %v2248 = vor.u32 %v2246, %v2247
      %v2249 = vshll.u32 2475754826, %v2243
      %v2250 = vshrl.u32 2131351028, %v2244
      %v2251 = vor.u32 %v2249, %v2250
      %v2252 = vshll.u32 2131351028, %v2243
      %v2253 = vshrl.u32 2102212464, %v2244
      %v2254 = vor.u32 %v2252, %v2253
      %v2255 = vshll.u32 2102212464, %v2243
      %v2256 = vshrl.u32 920167782, %v2244
      %v2257 = vor.u32 %v2255, %v2256
      %v2258 = vshll.u32 920167782, %v2243
      %v2259 = vshrl.u32 1326507024, %v2244
      %v2260 = vor.u32 %v2258, %v2259
      %vm2261 = vcmp.lt.s32.totalorder %v2242, 1
      %vm2262 = vcmp.lt.s32.totalorder %v2242, 2
      %vm2263 = vcmp.lt.s32.totalorder %v2242, 3
      %vm2264 = vcmp.lt.s32.totalorder %v2242, 4
      %v2265 = vsel %vm2261, %v2245, %v2248
      %v2266 = vsel %vm2264, %v2254, 2102212464
      %v2267 = vsel %vm2263, %v2251, %v2266
      %v2268 = vsel %vm2262, %v2265, %v2267
      %v2269 = vsel %vm2261, %v2248, %v2251
      %v2270 = vsel %vm2264, %v2257, 920167782
      %v2271 = vsel %vm2263, %v2254, %v2270
      %v2272 = vsel %vm2262, %v2269, %v2271
      %v2273 = vsel %vm2261, %v2251, %v2254
      %v2274 = vsel %vm2264, %v2260, 1326507024
      %v2275 = vsel %vm2263, %v2257, %v2274
      %v2276 = vsel %vm2262, %v2273, %v2275
      %v2277 = vshll.u32 %v2237, 8
      %v2278 = vmul.u32.u64.compose %v2277, %v2276
      %v2279 = vextract.low.u32 %v2278
      %v2280 = vextract.high.u32 %v2278
      %v2281 = vmul.u32.u64.compose %v2277, %v2272
      %v2282 = vextract.low.u32 %v2281
      %v2283 = vextract.high.u32 %v2281
      %v2284 = vmul.u32 %v2277, %v2268
      %v2285 = vadd.s32 %v2280, %v2282
      %vm2286 = vc.u32 %v2280, %v2282
      %v2287 = vadd.s32 %v2283, 1
      %v2288 = vsel %vm2286, %v2287, %v2283
      %v2289 = vadd.s32 %v2284, %v2288
      %v2290 = vadd.s32 %v2289, 536870912
      %v2291 = vshrl.u32 %v2290, 30
      %v2292 = vshll.u32 %v2291, 30
      %v2293 = vsub.s32 %v2289, %v2292
      %vm2294 = vcmp.lt.s32.totalorder %v2293, 0
      %v2295 = vsub.s32 0, %v2293
      %v2296 = vsel %vm2294, %v2295, %v2293
      %v2297 = vclz %v2296
      %v2298 = vsub.s32 %v2297, 2
      %vm2299 = vcmp.gt.s32.totalorder 0, %v2298
      %v2300 = vsel %vm2299, 0, %v2298
      %v2301 = vsub.s32 32, %v2300
      %v2302 = vshll.u32 %v2293, %v2300
      %v2303 = vshrl.u32 %v2285, %v2301
      %v2304 = vor.u32 %v2302, %v2303
      %v2305 = vsub.s32 4294967266, %v2300
      %v2306 = vadd.s32 %v2305, 127
      %v2307 = vshll.u32 %v2306, 23
      %v2308 = vor.u32 4788187, %v2307
      %v2309 = vand.u32 2147483647, %v2308
      %v2311 = vcvt.s32.f32 %v2304
      %v2312 = vmul.f32 %v2311, %v2309
      %v2313 = vxor.u32 %v2312, 2147483648
      %v2314 = vsel %vm2231, %v2313, %v2312
      %v2315 = vsub.s32 4, %v2291
      %v2316 = vsel %vm2231, %v2315, %v2291
      %v2317 = vsel %vm2230, %v541, %v2314
      %v2318 = vsel %vm2230, 0, %v2316
      %v2319 = vcosq.f32.pop %v2317
      %v2320 = vsinq.f32.pop %v2317
      %vm2321 = vweird.f32 %v541
      %v2322 = vadd.s32 %v2318, 3
      %v2323 = vand.u32 %v2322, 3
      %vm2324 = vcmp.lt.s32.totalorder %v2323, 2
      %vm2325 = vcmp.eq.s32.totalorder %v2323, 0
      %v2326 = vxor.u32 %v2320, 2147483648
      %v2327 = vsel %vm2325, %v2319, %v2326
      %vm2328 = vcmp.eq.s32.totalorder %v2323, 2
      %v2329 = vxor.u32 %v2319, 2147483648
      %v2330 = vsel %vm2328, %v2329, %v2320
      %v2331 = vsel %vm2324, %v2327, %v2330
      %v2332 = vsel %vm2321, nan, %v2331
      %v2333 = vand.u32 2147483647, %v542
      %vm2334 = vcmp.le.f32.partialorder %v2333, 0.7853982
      %vm2335 = vcmp.lt.s32.totalorder %v542, 0
      %v2336 = vand.u32 %v542, 2139095040
      %v2337 = vshrl.u32 %v2336, 23
      %v2338 = vsub.s32 %v2337, 127
      %v2339 = vand.u32 2147483647, %v542
      %v2340 = vand.u32 %v2339, 8388607
      %v2341 = vor.u32 %v2340, 8388608
      %v2342 = vsub.s32 0, %v2341
      %v2343 = vadd.s32 %v2338, 1
      %vm2344 = vcmp.gt.s32.totalorder %v2343, 0
      %v2345 = vsel %vm2344, %v2343, 0
      %v2346 = vshrl.u32 %v2345, 5
      %v2347 = vand.u32 %v2345, 31
      %v2348 = vsub.s32 32, %v2347
      %v2349 = vshrl.u32 683565275, %v2348
      %v2350 = vshll.u32 683565275, %v2347
      %v2351 = vshrl.u32 2475754826, %v2348
      %v2352 = vor.u32 %v2350, %v2351
      %v2353 = vshll.u32 2475754826, %v2347
      %v2354 = vshrl.u32 2131351028, %v2348
      %v2355 = vor.u32 %v2353, %v2354
      %v2356 = vshll.u32 2131351028, %v2347
      %v2357 = vshrl.u32 2102212464, %v2348
      %v2358 = vor.u32 %v2356, %v2357
      %v2359 = vshll.u32 2102212464, %v2347
      %v2360 = vshrl.u32 920167782, %v2348
      %v2361 = vor.u32 %v2359, %v2360
      %v2362 = vshll.u32 920167782, %v2347
      %v2363 = vshrl.u32 1326507024, %v2348
      %v2364 = vor.u32 %v2362, %v2363
      %vm2365 = vcmp.lt.s32.totalorder %v2346, 1
      %vm2366 = vcmp.lt.s32.totalorder %v2346, 2
      %vm2367 = vcmp.lt.s32.totalorder %v2346, 3
      %vm2368 = vcmp.lt.s32.totalorder %v2346, 4
      %v2369 = vsel %vm2365, %v2349, %v2352
      %v2370 = vsel %vm2368, %v2358, 2102212464
      %v2371 = vsel %vm2367, %v2355, %v2370
      %v2372 = vsel %vm2366, %v2369, %v2371
      %v2373 = vsel %vm2365, %v2352, %v2355
      %v2374 = vsel %vm2368, %v2361, 920167782
      %v2375 = vsel %vm2367, %v2358, %v2374
      %v2376 = vsel %vm2366, %v2373, %v2375
      %v2377 = vsel %vm2365, %v2355, %v2358
      %v2378 = vsel %vm2368, %v2364, 1326507024
      %v2379 = vsel %vm2367, %v2361, %v2378
      %v2380 = vsel %vm2366, %v2377, %v2379
      %v2381 = vshll.u32 %v2341, 8
      %v2382 = vmul.u32.u64.compose %v2381, %v2380
      %v2383 = vextract.low.u32 %v2382
      %v2384 = vextract.high.u32 %v2382
      %v2385 = vmul.u32.u64.compose %v2381, %v2376
      %v2386 = vextract.low.u32 %v2385
      %v2387 = vextract.high.u32 %v2385
      %v2388 = vmul.u32 %v2381, %v2372
      %v2389 = vadd.s32 %v2384, %v2386
      %vm2390 = vc.u32 %v2384, %v2386
      %v2391 = vadd.s32 %v2387, 1
      %v2392 = vsel %vm2390, %v2391, %v2387
      %v2393 = vadd.s32 %v2388, %v2392
      %v2394 = vadd.s32 %v2393, 536870912
      %v2395 = vshrl.u32 %v2394, 30
      %v2396 = vshll.u32 %v2395, 30
      %v2397 = vsub.s32 %v2393, %v2396
      %vm2398 = vcmp.lt.s32.totalorder %v2397, 0
      %v2399 = vsub.s32 0, %v2397
      %v2400 = vsel %vm2398, %v2399, %v2397
      %v2401 = vclz %v2400
      %v2402 = vsub.s32 %v2401, 2
      %vm2403 = vcmp.gt.s32.totalorder 0, %v2402
      %v2404 = vsel %vm2403, 0, %v2402
      %v2405 = vsub.s32 32, %v2404
      %v2406 = vshll.u32 %v2397, %v2404
      %v2407 = vshrl.u32 %v2389, %v2405
      %v2408 = vor.u32 %v2406, %v2407
      %v2409 = vsub.s32 4294967266, %v2404
      %v2410 = vadd.s32 %v2409, 127
      %v2411 = vshll.u32 %v2410, 23
      %v2412 = vor.u32 4788187, %v2411
      %v2413 = vand.u32 2147483647, %v2412
      %v2415 = vcvt.s32.f32 %v2408
      %v2416 = vmul.f32 %v2415, %v2413
      %v2417 = vxor.u32 %v2416, 2147483648
      %v2418 = vsel %vm2335, %v2417, %v2416
      %v2419 = vsub.s32 4, %v2395
      %v2420 = vsel %vm2335, %v2419, %v2395
      %v2421 = vsel %vm2334, %v542, %v2418
      %v2422 = vsel %vm2334, 0, %v2420
      %v2423 = vcosq.f32.pop %v2421
      %v2424 = vsinq.f32.pop %v2421
      %vm2425 = vweird.f32 %v542
      %v2426 = vadd.s32 %v2422, 3
      %v2427 = vand.u32 %v2426, 3
      %vm2428 = vcmp.lt.s32.totalorder %v2427, 2
      %vm2429 = vcmp.eq.s32.totalorder %v2427, 0
      %v2430 = vxor.u32 %v2424, 2147483648
      %v2431 = vsel %vm2429, %v2423, %v2430
      %vm2432 = vcmp.eq.s32.totalorder %v2427, 2
      %v2433 = vxor.u32 %v2423, 2147483648
      %v2434 = vsel %vm2432, %v2433, %v2424
      %v2435 = vsel %vm2428, %v2431, %v2434
      %v2436 = vsel %vm2425, nan, %v2435
      %v2437 = vand.u32 2147483647, %v543
      %vm2438 = vcmp.le.f32.partialorder %v2437, 0.7853982
      %vm2439 = vcmp.lt.s32.totalorder %v543, 0
      %v2440 = vand.u32 %v543, 2139095040
      %v2441 = vshrl.u32 %v2440, 23
      %v2442 = vsub.s32 %v2441, 127
      %v2443 = vand.u32 2147483647, %v543
      %v2444 = vand.u32 %v2443, 8388607
      %v2445 = vor.u32 %v2444, 8388608
      %v2446 = vsub.s32 0, %v2445
      %v2447 = vadd.s32 %v2442, 1
      %vm2448 = vcmp.gt.s32.totalorder %v2447, 0
      %v2449 = vsel %vm2448, %v2447, 0
      %v2450 = vshrl.u32 %v2449, 5
      %v2451 = vand.u32 %v2449, 31
      %v2452 = vsub.s32 32, %v2451
      %v2453 = vshrl.u32 683565275, %v2452
      %v2454 = vshll.u32 683565275, %v2451
      %v2455 = vshrl.u32 2475754826, %v2452
      %v2456 = vor.u32 %v2454, %v2455
      %v2457 = vshll.u32 2475754826, %v2451
      %v2458 = vshrl.u32 2131351028, %v2452
      %v2459 = vor.u32 %v2457, %v2458
      %v2460 = vshll.u32 2131351028, %v2451
      %v2461 = vshrl.u32 2102212464, %v2452
      %v2462 = vor.u32 %v2460, %v2461
      %v2463 = vshll.u32 2102212464, %v2451
      %v2464 = vshrl.u32 920167782, %v2452
      %v2465 = vor.u32 %v2463, %v2464
      %v2466 = vshll.u32 920167782, %v2451
      %v2467 = vshrl.u32 1326507024, %v2452
      %v2468 = vor.u32 %v2466, %v2467
      %vm2469 = vcmp.lt.s32.totalorder %v2450, 1
      %vm2470 = vcmp.lt.s32.totalorder %v2450, 2
      %vm2471 = vcmp.lt.s32.totalorder %v2450, 3
      %vm2472 = vcmp.lt.s32.totalorder %v2450, 4
      %v2473 = vsel %vm2469, %v2453, %v2456
      %v2474 = vsel %vm2472, %v2462, 2102212464
      %v2475 = vsel %vm2471, %v2459, %v2474
      %v2476 = vsel %vm2470, %v2473, %v2475
      %v2477 = vsel %vm2469, %v2456, %v2459
      %v2478 = vsel %vm2472, %v2465, 920167782
      %v2479 = vsel %vm2471, %v2462, %v2478
      %v2480 = vsel %vm2470, %v2477, %v2479
      %v2481 = vsel %vm2469, %v2459, %v2462
      %v2482 = vsel %vm2472, %v2468, 1326507024
      %v2483 = vsel %vm2471, %v2465, %v2482
      %v2484 = vsel %vm2470, %v2481, %v2483
      %v2485 = vshll.u32 %v2445, 8
      %v2486 = vmul.u32.u64.compose %v2485, %v2484
      %v2487 = vextract.low.u32 %v2486
      %v2488 = vextract.high.u32 %v2486
      %v2489 = vmul.u32.u64.compose %v2485, %v2480
      %v2490 = vextract.low.u32 %v2489
      %v2491 = vextract.high.u32 %v2489
      %v2492 = vmul.u32 %v2485, %v2476
      %v2493 = vadd.s32 %v2488, %v2490
      %vm2494 = vc.u32 %v2488, %v2490
      %v2495 = vadd.s32 %v2491, 1
      %v2496 = vsel %vm2494, %v2495, %v2491
      %v2497 = vadd.s32 %v2492, %v2496
      %v2498 = vadd.s32 %v2497, 536870912
      %v2499 = vshrl.u32 %v2498, 30
      %v2500 = vshll.u32 %v2499, 30
      %v2501 = vsub.s32 %v2497, %v2500
      %vm2502 = vcmp.lt.s32.totalorder %v2501, 0
      %v2503 = vsub.s32 0, %v2501
      %v2504 = vsel %vm2502, %v2503, %v2501
      %v2505 = vclz %v2504
      %v2506 = vsub.s32 %v2505, 2
      %vm2507 = vcmp.gt.s32.totalorder 0, %v2506
      %v2508 = vsel %vm2507, 0, %v2506
      %v2509 = vsub.s32 32, %v2508
      %v2510 = vshll.u32 %v2501, %v2508
      %v2511 = vshrl.u32 %v2493, %v2509
      %v2512 = vor.u32 %v2510, %v2511
      %v2513 = vsub.s32 4294967266, %v2508
      %v2514 = vadd.s32 %v2513, 127
      %v2515 = vshll.u32 %v2514, 23
      %v2516 = vor.u32 4788187, %v2515
      %v2517 = vand.u32 2147483647, %v2516
      %v2519 = vcvt.s32.f32 %v2512
      %v2520 = vmul.f32 %v2519, %v2517
      %v2521 = vxor.u32 %v2520, 2147483648
      %v2522 = vsel %vm2439, %v2521, %v2520
      %v2523 = vsub.s32 4, %v2499
      %v2524 = vsel %vm2439, %v2523, %v2499
      %v2525 = vsel %vm2438, %v543, %v2522
      %v2526 = vsel %vm2438, 0, %v2524
      %v2527 = vcosq.f32.pop %v2525
      %v2528 = vsinq.f32.pop %v2525
      %vm2529 = vweird.f32 %v543
      %v2530 = vadd.s32 %v2526, 3
      %v2531 = vand.u32 %v2530, 3
      %vm2532 = vcmp.lt.s32.totalorder %v2531, 2
      %vm2533 = vcmp.eq.s32.totalorder %v2531, 0
      %v2534 = vxor.u32 %v2528, 2147483648
      %v2535 = vsel %vm2533, %v2527, %v2534
      %vm2536 = vcmp.eq.s32.totalorder %v2531, 2
      %v2537 = vxor.u32 %v2527, 2147483648
      %v2538 = vsel %vm2536, %v2537, %v2528
      %v2539 = vsel %vm2532, %v2535, %v2538
      %v2540 = vsel %vm2529, nan, %v2539
      %v2541 = vand.u32 2147483647, %v544
      %vm2542 = vcmp.le.f32.partialorder %v2541, 0.7853982
      %vm2543 = vcmp.lt.s32.totalorder %v544, 0
      %v2544 = vand.u32 %v544, 2139095040
      %v2545 = vshrl.u32 %v2544, 23
      %v2546 = vsub.s32 %v2545, 127
      %v2547 = vand.u32 2147483647, %v544
      %v2548 = vand.u32 %v2547, 8388607
      %v2549 = vor.u32 %v2548, 8388608
      %v2550 = vsub.s32 0, %v2549
      %v2551 = vadd.s32 %v2546, 1
      %vm2552 = vcmp.gt.s32.totalorder %v2551, 0
      %v2553 = vsel %vm2552, %v2551, 0
      %v2554 = vshrl.u32 %v2553, 5
      %v2555 = vand.u32 %v2553, 31
      %v2556 = vsub.s32 32, %v2555
      %v2557 = vshrl.u32 683565275, %v2556
      %v2558 = vshll.u32 683565275, %v2555
      %v2559 = vshrl.u32 2475754826, %v2556
      %v2560 = vor.u32 %v2558, %v2559
      %v2561 = vshll.u32 2475754826, %v2555
      %v2562 = vshrl.u32 2131351028, %v2556
      %v2563 = vor.u32 %v2561, %v2562
      %v2564 = vshll.u32 2131351028, %v2555
      %v2565 = vshrl.u32 2102212464, %v2556
      %v2566 = vor.u32 %v2564, %v2565
      %v2567 = vshll.u32 2102212464, %v2555
      %v2568 = vshrl.u32 920167782, %v2556
      %v2569 = vor.u32 %v2567, %v2568
      %v2570 = vshll.u32 920167782, %v2555
      %v2571 = vshrl.u32 1326507024, %v2556
      %v2572 = vor.u32 %v2570, %v2571
      %vm2573 = vcmp.lt.s32.totalorder %v2554, 1
      %vm2574 = vcmp.lt.s32.totalorder %v2554, 2
      %vm2575 = vcmp.lt.s32.totalorder %v2554, 3
      %vm2576 = vcmp.lt.s32.totalorder %v2554, 4
      %v2577 = vsel %vm2573, %v2557, %v2560
      %v2578 = vsel %vm2576, %v2566, 2102212464
      %v2579 = vsel %vm2575, %v2563, %v2578
      %v2580 = vsel %vm2574, %v2577, %v2579
      %v2581 = vsel %vm2573, %v2560, %v2563
      %v2582 = vsel %vm2576, %v2569, 920167782
      %v2583 = vsel %vm2575, %v2566, %v2582
      %v2584 = vsel %vm2574, %v2581, %v2583
      %v2585 = vsel %vm2573, %v2563, %v2566
      %v2586 = vsel %vm2576, %v2572, 1326507024
      %v2587 = vsel %vm2575, %v2569, %v2586
      %v2588 = vsel %vm2574, %v2585, %v2587
      %v2589 = vshll.u32 %v2549, 8
      %v2590 = vmul.u32.u64.compose %v2589, %v2588
      %v2591 = vextract.low.u32 %v2590
      %v2592 = vextract.high.u32 %v2590
      %v2593 = vmul.u32.u64.compose %v2589, %v2584
      %v2594 = vextract.low.u32 %v2593
      %v2595 = vextract.high.u32 %v2593
      %v2596 = vmul.u32 %v2589, %v2580
      %v2597 = vadd.s32 %v2592, %v2594
      %vm2598 = vc.u32 %v2592, %v2594
      %v2599 = vadd.s32 %v2595, 1
      %v2600 = vsel %vm2598, %v2599, %v2595
      %v2601 = vadd.s32 %v2596, %v2600
      %v2602 = vadd.s32 %v2601, 536870912
      %v2603 = vshrl.u32 %v2602, 30
      %v2604 = vshll.u32 %v2603, 30
      %v2605 = vsub.s32 %v2601, %v2604
      %vm2606 = vcmp.lt.s32.totalorder %v2605, 0
      %v2607 = vsub.s32 0, %v2605
      %v2608 = vsel %vm2606, %v2607, %v2605
      %v2609 = vclz %v2608
      %v2610 = vsub.s32 %v2609, 2
      %vm2611 = vcmp.gt.s32.totalorder 0, %v2610
      %v2612 = vsel %vm2611, 0, %v2610
      %v2613 = vsub.s32 32, %v2612
      %v2614 = vshll.u32 %v2605, %v2612
      %v2615 = vshrl.u32 %v2597, %v2613
      %v2616 = vor.u32 %v2614, %v2615
      %v2617 = vsub.s32 4294967266, %v2612
      %v2618 = vadd.s32 %v2617, 127
      %v2619 = vshll.u32 %v2618, 23
      %v2620 = vor.u32 4788187, %v2619
      %v2621 = vand.u32 2147483647, %v2620
      %v2623 = vcvt.s32.f32 %v2616
      %v2624 = vmul.f32 %v2623, %v2621
      %v2625 = vxor.u32 %v2624, 2147483648
      %v2626 = vsel %vm2543, %v2625, %v2624
      %v2627 = vsub.s32 4, %v2603
      %v2628 = vsel %vm2543, %v2627, %v2603
      %v2629 = vsel %vm2542, %v544, %v2626
      %v2630 = vsel %vm2542, 0, %v2628
      %v2631 = vcosq.f32.pop %v2629
      %v2632 = vsinq.f32.pop %v2629
      %vm2633 = vweird.f32 %v544
      %v2634 = vadd.s32 %v2630, 3
      %v2635 = vand.u32 %v2634, 3
      %vm2636 = vcmp.lt.s32.totalorder %v2635, 2
      %vm2637 = vcmp.eq.s32.totalorder %v2635, 0
      %v2638 = vxor.u32 %v2632, 2147483648
      %v2639 = vsel %vm2637, %v2631, %v2638
      %vm2640 = vcmp.eq.s32.totalorder %v2635, 2
      %v2641 = vxor.u32 %v2631, 2147483648
      %v2642 = vsel %vm2640, %v2641, %v2632
      %v2643 = vsel %vm2636, %v2639, %v2642
      %v2644 = vsel %vm2633, nan, %v2643
      %v2645 = vand.u32 2147483647, %v545
      %vm2646 = vcmp.le.f32.partialorder %v2645, 0.7853982
      %vm2647 = vcmp.lt.s32.totalorder %v545, 0
      %v2648 = vand.u32 %v545, 2139095040
      %v2649 = vshrl.u32 %v2648, 23
      %v2650 = vsub.s32 %v2649, 127
      %v2651 = vand.u32 2147483647, %v545
      %v2652 = vand.u32 %v2651, 8388607
      %v2653 = vor.u32 %v2652, 8388608
      %v2654 = vsub.s32 0, %v2653
      %v2655 = vadd.s32 %v2650, 1
      %vm2656 = vcmp.gt.s32.totalorder %v2655, 0
      %v2657 = vsel %vm2656, %v2655, 0
      %v2658 = vshrl.u32 %v2657, 5
      %v2659 = vand.u32 %v2657, 31
      %v2660 = vsub.s32 32, %v2659
      %v2661 = vshrl.u32 683565275, %v2660
      %v2662 = vshll.u32 683565275, %v2659
      %v2663 = vshrl.u32 2475754826, %v2660
      %v2664 = vor.u32 %v2662, %v2663
      %v2665 = vshll.u32 2475754826, %v2659
      %v2666 = vshrl.u32 2131351028, %v2660
      %v2667 = vor.u32 %v2665, %v2666
      %v2668 = vshll.u32 2131351028, %v2659
      %v2669 = vshrl.u32 2102212464, %v2660
      %v2670 = vor.u32 %v2668, %v2669
      %v2671 = vshll.u32 2102212464, %v2659
      %v2672 = vshrl.u32 920167782, %v2660
      %v2673 = vor.u32 %v2671, %v2672
      %v2674 = vshll.u32 920167782, %v2659
      %v2675 = vshrl.u32 1326507024, %v2660
      %v2676 = vor.u32 %v2674, %v2675
      %vm2677 = vcmp.lt.s32.totalorder %v2658, 1
      %vm2678 = vcmp.lt.s32.totalorder %v2658, 2
      %vm2679 = vcmp.lt.s32.totalorder %v2658, 3
      %vm2680 = vcmp.lt.s32.totalorder %v2658, 4
      %v2681 = vsel %vm2677, %v2661, %v2664
      %v2682 = vsel %vm2680, %v2670, 2102212464
      %v2683 = vsel %vm2679, %v2667, %v2682
      %v2684 = vsel %vm2678, %v2681, %v2683
      %v2685 = vsel %vm2677, %v2664, %v2667
      %v2686 = vsel %vm2680, %v2673, 920167782
      %v2687 = vsel %vm2679, %v2670, %v2686
      %v2688 = vsel %vm2678, %v2685, %v2687
      %v2689 = vsel %vm2677, %v2667, %v2670
      %v2690 = vsel %vm2680, %v2676, 1326507024
      %v2691 = vsel %vm2679, %v2673, %v2690
      %v2692 = vsel %vm2678, %v2689, %v2691
      %v2693 = vshll.u32 %v2653, 8
      %v2694 = vmul.u32.u64.compose %v2693, %v2692
      %v2695 = vextract.low.u32 %v2694
      %v2696 = vextract.high.u32 %v2694
      %v2697 = vmul.u32.u64.compose %v2693, %v2688
      %v2698 = vextract.low.u32 %v2697
      %v2699 = vextract.high.u32 %v2697
      %v2700 = vmul.u32 %v2693, %v2684
      %v2701 = vadd.s32 %v2696, %v2698
      %vm2702 = vc.u32 %v2696, %v2698
      %v2703 = vadd.s32 %v2699, 1
      %v2704 = vsel %vm2702, %v2703, %v2699
      %v2705 = vadd.s32 %v2700, %v2704
      %v2706 = vadd.s32 %v2705, 536870912
      %v2707 = vshrl.u32 %v2706, 30
      %v2708 = vshll.u32 %v2707, 30
      %v2709 = vsub.s32 %v2705, %v2708
      %vm2710 = vcmp.lt.s32.totalorder %v2709, 0
      %v2711 = vsub.s32 0, %v2709
      %v2712 = vsel %vm2710, %v2711, %v2709
      %v2713 = vclz %v2712
      %v2714 = vsub.s32 %v2713, 2
      %vm2715 = vcmp.gt.s32.totalorder 0, %v2714
      %v2716 = vsel %vm2715, 0, %v2714
      %v2717 = vsub.s32 32, %v2716
      %v2718 = vshll.u32 %v2709, %v2716
      %v2719 = vshrl.u32 %v2701, %v2717
      %v2720 = vor.u32 %v2718, %v2719
      %v2721 = vsub.s32 4294967266, %v2716
      %v2722 = vadd.s32 %v2721, 127
      %v2723 = vshll.u32 %v2722, 23
      %v2724 = vor.u32 4788187, %v2723
      %v2725 = vand.u32 2147483647, %v2724
      %v2727 = vcvt.s32.f32 %v2720
      %v2728 = vmul.f32 %v2727, %v2725
      %v2729 = vxor.u32 %v2728, 2147483648
      %v2730 = vsel %vm2647, %v2729, %v2728
      %v2731 = vsub.s32 4, %v2707
      %v2732 = vsel %vm2647, %v2731, %v2707
      %v2733 = vsel %vm2646, %v545, %v2730
      %v2734 = vsel %vm2646, 0, %v2732
      %v2735 = vcosq.f32.pop %v2733
      %v2736 = vsinq.f32.pop %v2733
      %vm2737 = vweird.f32 %v545
      %v2738 = vadd.s32 %v2734, 3
      %v2739 = vand.u32 %v2738, 3
      %vm2740 = vcmp.lt.s32.totalorder %v2739, 2
      %vm2741 = vcmp.eq.s32.totalorder %v2739, 0
      %v2742 = vxor.u32 %v2736, 2147483648
      %v2743 = vsel %vm2741, %v2735, %v2742
      %vm2744 = vcmp.eq.s32.totalorder %v2739, 2
      %v2745 = vxor.u32 %v2735, 2147483648
      %v2746 = vsel %vm2744, %v2745, %v2736
      %v2747 = vsel %vm2740, %v2743, %v2746
      %v2748 = vsel %vm2737, nan, %v2747
      %v2749 = vand.u32 2147483647, %v546
      %vm2750 = vcmp.le.f32.partialorder %v2749, 0.7853982
      %vm2751 = vcmp.lt.s32.totalorder %v546, 0
      %v2752 = vand.u32 %v546, 2139095040
      %v2753 = vshrl.u32 %v2752, 23
      %v2754 = vsub.s32 %v2753, 127
      %v2755 = vand.u32 2147483647, %v546
      %v2756 = vand.u32 %v2755, 8388607
      %v2757 = vor.u32 %v2756, 8388608
      %v2758 = vsub.s32 0, %v2757
      %v2759 = vadd.s32 %v2754, 1
      %vm2760 = vcmp.gt.s32.totalorder %v2759, 0
      %v2761 = vsel %vm2760, %v2759, 0
      %v2762 = vshrl.u32 %v2761, 5
      %v2763 = vand.u32 %v2761, 31
      %v2764 = vsub.s32 32, %v2763
      %v2765 = vshrl.u32 683565275, %v2764
      %v2766 = vshll.u32 683565275, %v2763
      %v2767 = vshrl.u32 2475754826, %v2764
      %v2768 = vor.u32 %v2766, %v2767
      %v2769 = vshll.u32 2475754826, %v2763
      %v2770 = vshrl.u32 2131351028, %v2764
      %v2771 = vor.u32 %v2769, %v2770
      %v2772 = vshll.u32 2131351028, %v2763
      %v2773 = vshrl.u32 2102212464, %v2764
      %v2774 = vor.u32 %v2772, %v2773
      %v2775 = vshll.u32 2102212464, %v2763
      %v2776 = vshrl.u32 920167782, %v2764
      %v2777 = vor.u32 %v2775, %v2776
      %v2778 = vshll.u32 920167782, %v2763
      %v2779 = vshrl.u32 1326507024, %v2764
      %v2780 = vor.u32 %v2778, %v2779
      %vm2781 = vcmp.lt.s32.totalorder %v2762, 1
      %vm2782 = vcmp.lt.s32.totalorder %v2762, 2
      %vm2783 = vcmp.lt.s32.totalorder %v2762, 3
      %vm2784 = vcmp.lt.s32.totalorder %v2762, 4
      %v2785 = vsel %vm2781, %v2765, %v2768
      %v2786 = vsel %vm2784, %v2774, 2102212464
      %v2787 = vsel %vm2783, %v2771, %v2786
      %v2788 = vsel %vm2782, %v2785, %v2787
      %v2789 = vsel %vm2781, %v2768, %v2771
      %v2790 = vsel %vm2784, %v2777, 920167782
      %v2791 = vsel %vm2783, %v2774, %v2790
      %v2792 = vsel %vm2782, %v2789, %v2791
      %v2793 = vsel %vm2781, %v2771, %v2774
      %v2794 = vsel %vm2784, %v2780, 1326507024
      %v2795 = vsel %vm2783, %v2777, %v2794
      %v2796 = vsel %vm2782, %v2793, %v2795
      %v2797 = vshll.u32 %v2757, 8
      %v2798 = vmul.u32.u64.compose %v2797, %v2796
      %v2799 = vextract.low.u32 %v2798
      %v2800 = vextract.high.u32 %v2798
      %v2801 = vmul.u32.u64.compose %v2797, %v2792
      %v2802 = vextract.low.u32 %v2801
      %v2803 = vextract.high.u32 %v2801
      %v2804 = vmul.u32 %v2797, %v2788
      %v2805 = vadd.s32 %v2800, %v2802
      %vm2806 = vc.u32 %v2800, %v2802
      %v2807 = vadd.s32 %v2803, 1
      %v2808 = vsel %vm2806, %v2807, %v2803
      %v2809 = vadd.s32 %v2804, %v2808
      %v2810 = vadd.s32 %v2809, 536870912
      %v2811 = vshrl.u32 %v2810, 30
      %v2812 = vshll.u32 %v2811, 30
      %v2813 = vsub.s32 %v2809, %v2812
      %vm2814 = vcmp.lt.s32.totalorder %v2813, 0
      %v2815 = vsub.s32 0, %v2813
      %v2816 = vsel %vm2814, %v2815, %v2813
      %v2817 = vclz %v2816
      %v2818 = vsub.s32 %v2817, 2
      %vm2819 = vcmp.gt.s32.totalorder 0, %v2818
      %v2820 = vsel %vm2819, 0, %v2818
      %v2821 = vsub.s32 32, %v2820
      %v2822 = vshll.u32 %v2813, %v2820
      %v2823 = vshrl.u32 %v2805, %v2821
      %v2824 = vor.u32 %v2822, %v2823
      %v2825 = vsub.s32 4294967266, %v2820
      %v2826 = vadd.s32 %v2825, 127
      %v2827 = vshll.u32 %v2826, 23
      %v2828 = vor.u32 4788187, %v2827
      %v2829 = vand.u32 2147483647, %v2828
      %v2831 = vcvt.s32.f32 %v2824
      %v2832 = vmul.f32 %v2831, %v2829
      %v2833 = vxor.u32 %v2832, 2147483648
      %v2834 = vsel %vm2751, %v2833, %v2832
      %v2835 = vsub.s32 4, %v2811
      %v2836 = vsel %vm2751, %v2835, %v2811
      %v2837 = vsel %vm2750, %v546, %v2834
      %v2838 = vsel %vm2750, 0, %v2836
      %v2839 = vcosq.f32.pop %v2837
      %v2840 = vsinq.f32.pop %v2837
      %vm2841 = vweird.f32 %v546
      %v2842 = vadd.s32 %v2838, 3
      %v2843 = vand.u32 %v2842, 3
      %vm2844 = vcmp.lt.s32.totalorder %v2843, 2
      %vm2845 = vcmp.eq.s32.totalorder %v2843, 0
      %v2846 = vxor.u32 %v2840, 2147483648
      %v2847 = vsel %vm2845, %v2839, %v2846
      %vm2848 = vcmp.eq.s32.totalorder %v2843, 2
      %v2849 = vxor.u32 %v2839, 2147483648
      %v2850 = vsel %vm2848, %v2849, %v2840
      %v2851 = vsel %vm2844, %v2847, %v2850
      %v2852 = vsel %vm2841, nan, %v2851
      %v2853 = vand.u32 2147483647, %v547
      %vm2854 = vcmp.le.f32.partialorder %v2853, 0.7853982
      %vm2855 = vcmp.lt.s32.totalorder %v547, 0
      %v2856 = vand.u32 %v547, 2139095040
      %v2857 = vshrl.u32 %v2856, 23
      %v2858 = vsub.s32 %v2857, 127
      %v2859 = vand.u32 2147483647, %v547
      %v2860 = vand.u32 %v2859, 8388607
      %v2861 = vor.u32 %v2860, 8388608
      %v2862 = vsub.s32 0, %v2861
      %v2863 = vadd.s32 %v2858, 1
      %vm2864 = vcmp.gt.s32.totalorder %v2863, 0
      %v2865 = vsel %vm2864, %v2863, 0
      %v2866 = vshrl.u32 %v2865, 5
      %v2867 = vand.u32 %v2865, 31
      %v2868 = vsub.s32 32, %v2867
      %v2869 = vshrl.u32 683565275, %v2868
      %v2870 = vshll.u32 683565275, %v2867
      %v2871 = vshrl.u32 2475754826, %v2868
      %v2872 = vor.u32 %v2870, %v2871
      %v2873 = vshll.u32 2475754826, %v2867
      %v2874 = vshrl.u32 2131351028, %v2868
      %v2875 = vor.u32 %v2873, %v2874
      %v2876 = vshll.u32 2131351028, %v2867
      %v2877 = vshrl.u32 2102212464, %v2868
      %v2878 = vor.u32 %v2876, %v2877
      %v2879 = vshll.u32 2102212464, %v2867
      %v2880 = vshrl.u32 920167782, %v2868
      %v2881 = vor.u32 %v2879, %v2880
      %v2882 = vshll.u32 920167782, %v2867
      %v2883 = vshrl.u32 1326507024, %v2868
      %v2884 = vor.u32 %v2882, %v2883
      %vm2885 = vcmp.lt.s32.totalorder %v2866, 1
      %vm2886 = vcmp.lt.s32.totalorder %v2866, 2
      %vm2887 = vcmp.lt.s32.totalorder %v2866, 3
      %vm2888 = vcmp.lt.s32.totalorder %v2866, 4
      %v2889 = vsel %vm2885, %v2869, %v2872
      %v2890 = vsel %vm2888, %v2878, 2102212464
      %v2891 = vsel %vm2887, %v2875, %v2890
      %v2892 = vsel %vm2886, %v2889, %v2891
      %v2893 = vsel %vm2885, %v2872, %v2875
      %v2894 = vsel %vm2888, %v2881, 920167782
      %v2895 = vsel %vm2887, %v2878, %v2894
      %v2896 = vsel %vm2886, %v2893, %v2895
      %v2897 = vsel %vm2885, %v2875, %v2878
      %v2898 = vsel %vm2888, %v2884, 1326507024
      %v2899 = vsel %vm2887, %v2881, %v2898
      %v2900 = vsel %vm2886, %v2897, %v2899
      %v2901 = vshll.u32 %v2861, 8
      %v2902 = vmul.u32.u64.compose %v2901, %v2900
      %v2903 = vextract.low.u32 %v2902
      %v2904 = vextract.high.u32 %v2902
      %v2905 = vmul.u32.u64.compose %v2901, %v2896
      %v2906 = vextract.low.u32 %v2905
      %v2907 = vextract.high.u32 %v2905
      %v2908 = vmul.u32 %v2901, %v2892
      %v2909 = vadd.s32 %v2904, %v2906
      %vm2910 = vc.u32 %v2904, %v2906
      %v2911 = vadd.s32 %v2907, 1
      %v2912 = vsel %vm2910, %v2911, %v2907
      %v2913 = vadd.s32 %v2908, %v2912
      %v2914 = vadd.s32 %v2913, 536870912
      %v2915 = vshrl.u32 %v2914, 30
      %v2916 = vshll.u32 %v2915, 30
      %v2917 = vsub.s32 %v2913, %v2916
      %vm2918 = vcmp.lt.s32.totalorder %v2917, 0
      %v2919 = vsub.s32 0, %v2917
      %v2920 = vsel %vm2918, %v2919, %v2917
      %v2921 = vclz %v2920
      %v2922 = vsub.s32 %v2921, 2
      %vm2923 = vcmp.gt.s32.totalorder 0, %v2922
      %v2924 = vsel %vm2923, 0, %v2922
      %v2925 = vsub.s32 32, %v2924
      %v2926 = vshll.u32 %v2917, %v2924
      %v2927 = vshrl.u32 %v2909, %v2925
      %v2928 = vor.u32 %v2926, %v2927
      %v2929 = vsub.s32 4294967266, %v2924
      %v2930 = vadd.s32 %v2929, 127
      %v2931 = vshll.u32 %v2930, 23
      %v2932 = vor.u32 4788187, %v2931
      %v2933 = vand.u32 2147483647, %v2932
      %v2935 = vcvt.s32.f32 %v2928
      %v2936 = vmul.f32 %v2935, %v2933
      %v2937 = vxor.u32 %v2936, 2147483648
      %v2938 = vsel %vm2855, %v2937, %v2936
      %v2939 = vsub.s32 4, %v2915
      %v2940 = vsel %vm2855, %v2939, %v2915
      %v2941 = vsel %vm2854, %v547, %v2938
      %v2942 = vsel %vm2854, 0, %v2940
      %v2943 = vcosq.f32.pop %v2941
      %v2944 = vsinq.f32.pop %v2941
      %vm2945 = vweird.f32 %v547
      %v2946 = vadd.s32 %v2942, 3
      %v2947 = vand.u32 %v2946, 3
      %vm2948 = vcmp.lt.s32.totalorder %v2947, 2
      %vm2949 = vcmp.eq.s32.totalorder %v2947, 0
      %v2950 = vxor.u32 %v2944, 2147483648
      %v2951 = vsel %vm2949, %v2943, %v2950
      %vm2952 = vcmp.eq.s32.totalorder %v2947, 2
      %v2953 = vxor.u32 %v2943, 2147483648
      %v2954 = vsel %vm2952, %v2953, %v2944
      %v2955 = vsel %vm2948, %v2951, %v2954
      %v2956 = vsel %vm2945, nan, %v2955
      %v2957 = vand.u32 2147483647, %v548
      %vm2958 = vcmp.le.f32.partialorder %v2957, 0.7853982
      %vm2959 = vcmp.lt.s32.totalorder %v548, 0
      %v2960 = vand.u32 %v548, 2139095040
      %v2961 = vshrl.u32 %v2960, 23
      %v2962 = vsub.s32 %v2961, 127
      %v2963 = vand.u32 2147483647, %v548
      %v2964 = vand.u32 %v2963, 8388607
      %v2965 = vor.u32 %v2964, 8388608
      %v2966 = vsub.s32 0, %v2965
      %v2967 = vadd.s32 %v2962, 1
      %vm2968 = vcmp.gt.s32.totalorder %v2967, 0
      %v2969 = vsel %vm2968, %v2967, 0
      %v2970 = vshrl.u32 %v2969, 5
      %v2971 = vand.u32 %v2969, 31
      %v2972 = vsub.s32 32, %v2971
      %v2973 = vshrl.u32 683565275, %v2972
      %v2974 = vshll.u32 683565275, %v2971
      %v2975 = vshrl.u32 2475754826, %v2972
      %v2976 = vor.u32 %v2974, %v2975
      %v2977 = vshll.u32 2475754826, %v2971
      %v2978 = vshrl.u32 2131351028, %v2972
      %v2979 = vor.u32 %v2977, %v2978
      %v2980 = vshll.u32 2131351028, %v2971
      %v2981 = vshrl.u32 2102212464, %v2972
      %v2982 = vor.u32 %v2980, %v2981
      %v2983 = vshll.u32 2102212464, %v2971
      %v2984 = vshrl.u32 920167782, %v2972
      %v2985 = vor.u32 %v2983, %v2984
      %v2986 = vshll.u32 920167782, %v2971
      %v2987 = vshrl.u32 1326507024, %v2972
      %v2988 = vor.u32 %v2986, %v2987
      %vm2989 = vcmp.lt.s32.totalorder %v2970, 1
      %vm2990 = vcmp.lt.s32.totalorder %v2970, 2
      %vm2991 = vcmp.lt.s32.totalorder %v2970, 3
      %vm2992 = vcmp.lt.s32.totalorder %v2970, 4
      %v2993 = vsel %vm2989, %v2973, %v2976
      %v2994 = vsel %vm2992, %v2982, 2102212464
      %v2995 = vsel %vm2991, %v2979, %v2994
      %v2996 = vsel %vm2990, %v2993, %v2995
      %v2997 = vsel %vm2989, %v2976, %v2979
      %v2998 = vsel %vm2992, %v2985, 920167782
      %v2999 = vsel %vm2991, %v2982, %v2998
      %v3000 = vsel %vm2990, %v2997, %v2999
      %v3001 = vsel %vm2989, %v2979, %v2982
      %v3002 = vsel %vm2992, %v2988, 1326507024
      %v3003 = vsel %vm2991, %v2985, %v3002
      %v3004 = vsel %vm2990, %v3001, %v3003
      %v3005 = vshll.u32 %v2965, 8
      %v3006 = vmul.u32.u64.compose %v3005, %v3004
      %v3007 = vextract.low.u32 %v3006
      %v3008 = vextract.high.u32 %v3006
      %v3009 = vmul.u32.u64.compose %v3005, %v3000
      %v3010 = vextract.low.u32 %v3009
      %v3011 = vextract.high.u32 %v3009
      %v3012 = vmul.u32 %v3005, %v2996
      %v3013 = vadd.s32 %v3008, %v3010
      %vm3014 = vc.u32 %v3008, %v3010
      %v3015 = vadd.s32 %v3011, 1
      %v3016 = vsel %vm3014, %v3015, %v3011
      %v3017 = vadd.s32 %v3012, %v3016
      %v3018 = vadd.s32 %v3017, 536870912
      %v3019 = vshrl.u32 %v3018, 30
      %v3020 = vshll.u32 %v3019, 30
      %v3021 = vsub.s32 %v3017, %v3020
      %vm3022 = vcmp.lt.s32.totalorder %v3021, 0
      %v3023 = vsub.s32 0, %v3021
      %v3024 = vsel %vm3022, %v3023, %v3021
      %v3025 = vclz %v3024
      %v3026 = vsub.s32 %v3025, 2
      %vm3027 = vcmp.gt.s32.totalorder 0, %v3026
      %v3028 = vsel %vm3027, 0, %v3026
      %v3029 = vsub.s32 32, %v3028
      %v3030 = vshll.u32 %v3021, %v3028
      %v3031 = vshrl.u32 %v3013, %v3029
      %v3032 = vor.u32 %v3030, %v3031
      %v3033 = vsub.s32 4294967266, %v3028
      %v3034 = vadd.s32 %v3033, 127
      %v3035 = vshll.u32 %v3034, 23
      %v3036 = vor.u32 4788187, %v3035
      %v3037 = vand.u32 2147483647, %v3036
      %v3039 = vcvt.s32.f32 %v3032
      %v3040 = vmul.f32 %v3039, %v3037
      %v3041 = vxor.u32 %v3040, 2147483648
      %v3042 = vsel %vm2959, %v3041, %v3040
      %v3043 = vsub.s32 4, %v3019
      %v3044 = vsel %vm2959, %v3043, %v3019
      %v3045 = vsel %vm2958, %v548, %v3042
      %v3046 = vsel %vm2958, 0, %v3044
      %v3047 = vcosq.f32.pop %v3045
      %v3048 = vsinq.f32.pop %v3045
      %vm3049 = vweird.f32 %v548
      %v3050 = vadd.s32 %v3046, 3
      %v3051 = vand.u32 %v3050, 3
      %vm3052 = vcmp.lt.s32.totalorder %v3051, 2
      %vm3053 = vcmp.eq.s32.totalorder %v3051, 0
      %v3054 = vxor.u32 %v3048, 2147483648
      %v3055 = vsel %vm3053, %v3047, %v3054
      %vm3056 = vcmp.eq.s32.totalorder %v3051, 2
      %v3057 = vxor.u32 %v3047, 2147483648
      %v3058 = vsel %vm3056, %v3057, %v3048
      %v3059 = vsel %vm3052, %v3055, %v3058
      %v3060 = vsel %vm3049, nan, %v3059
      %v3061 = vand.u32 2147483647, %v549
      %vm3062 = vcmp.le.f32.partialorder %v3061, 0.7853982
      %vm3063 = vcmp.lt.s32.totalorder %v549, 0
      %v3064 = vand.u32 %v549, 2139095040
      %v3065 = vshrl.u32 %v3064, 23
      %v3066 = vsub.s32 %v3065, 127
      %v3067 = vand.u32 2147483647, %v549
      %v3068 = vand.u32 %v3067, 8388607
      %v3069 = vor.u32 %v3068, 8388608
      %v3070 = vsub.s32 0, %v3069
      %v3071 = vadd.s32 %v3066, 1
      %vm3072 = vcmp.gt.s32.totalorder %v3071, 0
      %v3073 = vsel %vm3072, %v3071, 0
      %v3074 = vshrl.u32 %v3073, 5
      %v3075 = vand.u32 %v3073, 31
      %v3076 = vsub.s32 32, %v3075
      %v3077 = vshrl.u32 683565275, %v3076
      %v3078 = vshll.u32 683565275, %v3075
      %v3079 = vshrl.u32 2475754826, %v3076
      %v3080 = vor.u32 %v3078, %v3079
      %v3081 = vshll.u32 2475754826, %v3075
      %v3082 = vshrl.u32 2131351028, %v3076
      %v3083 = vor.u32 %v3081, %v3082
      %v3084 = vshll.u32 2131351028, %v3075
      %v3085 = vshrl.u32 2102212464, %v3076
      %v3086 = vor.u32 %v3084, %v3085
      %v3087 = vshll.u32 2102212464, %v3075
      %v3088 = vshrl.u32 920167782, %v3076
      %v3089 = vor.u32 %v3087, %v3088
      %v3090 = vshll.u32 920167782, %v3075
      %v3091 = vshrl.u32 1326507024, %v3076
      %v3092 = vor.u32 %v3090, %v3091
      %vm3093 = vcmp.lt.s32.totalorder %v3074, 1
      %vm3094 = vcmp.lt.s32.totalorder %v3074, 2
      %vm3095 = vcmp.lt.s32.totalorder %v3074, 3
      %vm3096 = vcmp.lt.s32.totalorder %v3074, 4
      %v3097 = vsel %vm3093, %v3077, %v3080
      %v3098 = vsel %vm3096, %v3086, 2102212464
      %v3099 = vsel %vm3095, %v3083, %v3098
      %v3100 = vsel %vm3094, %v3097, %v3099
      %v3101 = vsel %vm3093, %v3080, %v3083
      %v3102 = vsel %vm3096, %v3089, 920167782
      %v3103 = vsel %vm3095, %v3086, %v3102
      %v3104 = vsel %vm3094, %v3101, %v3103
      %v3105 = vsel %vm3093, %v3083, %v3086
      %v3106 = vsel %vm3096, %v3092, 1326507024
      %v3107 = vsel %vm3095, %v3089, %v3106
      %v3108 = vsel %vm3094, %v3105, %v3107
      %v3109 = vshll.u32 %v3069, 8
      %v3110 = vmul.u32.u64.compose %v3109, %v3108
      %v3111 = vextract.low.u32 %v3110
      %v3112 = vextract.high.u32 %v3110
      %v3113 = vmul.u32.u64.compose %v3109, %v3104
      %v3114 = vextract.low.u32 %v3113
      %v3115 = vextract.high.u32 %v3113
      %v3116 = vmul.u32 %v3109, %v3100
      %v3117 = vadd.s32 %v3112, %v3114
      %vm3118 = vc.u32 %v3112, %v3114
      %v3119 = vadd.s32 %v3115, 1
      %v3120 = vsel %vm3118, %v3119, %v3115
      %v3121 = vadd.s32 %v3116, %v3120
      %v3122 = vadd.s32 %v3121, 536870912
      %v3123 = vshrl.u32 %v3122, 30
      %v3124 = vshll.u32 %v3123, 30
      %v3125 = vsub.s32 %v3121, %v3124
      %vm3126 = vcmp.lt.s32.totalorder %v3125, 0
      %v3127 = vsub.s32 0, %v3125
      %v3128 = vsel %vm3126, %v3127, %v3125
      %v3129 = vclz %v3128
      %v3130 = vsub.s32 %v3129, 2
      %vm3131 = vcmp.gt.s32.totalorder 0, %v3130
      %v3132 = vsel %vm3131, 0, %v3130
      %v3133 = vsub.s32 32, %v3132
      %v3134 = vshll.u32 %v3125, %v3132
      %v3135 = vshrl.u32 %v3117, %v3133
      %v3136 = vor.u32 %v3134, %v3135
      %v3137 = vsub.s32 4294967266, %v3132
      %v3138 = vadd.s32 %v3137, 127
      %v3139 = vshll.u32 %v3138, 23
      %v3140 = vor.u32 4788187, %v3139
      %v3141 = vand.u32 2147483647, %v3140
      %v3143 = vcvt.s32.f32 %v3136
      %v3144 = vmul.f32 %v3143, %v3141
      %v3145 = vxor.u32 %v3144, 2147483648
      %v3146 = vsel %vm3063, %v3145, %v3144
      %v3147 = vsub.s32 4, %v3123
      %v3148 = vsel %vm3063, %v3147, %v3123
      %v3149 = vsel %vm3062, %v549, %v3146
      %v3150 = vsel %vm3062, 0, %v3148
      %v3151 = vcosq.f32.pop %v3149
      %v3152 = vsinq.f32.pop %v3149
      %vm3153 = vweird.f32 %v549
      %v3154 = vadd.s32 %v3150, 3
      %v3155 = vand.u32 %v3154, 3
      %vm3156 = vcmp.lt.s32.totalorder %v3155, 2
      %vm3157 = vcmp.eq.s32.totalorder %v3155, 0
      %v3158 = vxor.u32 %v3152, 2147483648
      %v3159 = vsel %vm3157, %v3151, %v3158
      %vm3160 = vcmp.eq.s32.totalorder %v3155, 2
      %v3161 = vxor.u32 %v3151, 2147483648
      %v3162 = vsel %vm3160, %v3161, %v3152
      %v3163 = vsel %vm3156, %v3159, %v3162
      %v3164 = vsel %vm3153, nan, %v3163
      %v3165 = vand.u32 2147483647, %v550
      %vm3166 = vcmp.le.f32.partialorder %v3165, 0.7853982
      %vm3167 = vcmp.lt.s32.totalorder %v550, 0
      %v3168 = vand.u32 %v550, 2139095040
      %v3169 = vshrl.u32 %v3168, 23
      %v3170 = vsub.s32 %v3169, 127
      %v3171 = vand.u32 2147483647, %v550
      %v3172 = vand.u32 %v3171, 8388607
      %v3173 = vor.u32 %v3172, 8388608
      %v3174 = vsub.s32 0, %v3173
      %v3175 = vadd.s32 %v3170, 1
      %vm3176 = vcmp.gt.s32.totalorder %v3175, 0
      %v3177 = vsel %vm3176, %v3175, 0
      %v3178 = vshrl.u32 %v3177, 5
      %v3179 = vand.u32 %v3177, 31
      %v3180 = vsub.s32 32, %v3179
      %v3181 = vshrl.u32 683565275, %v3180
      %v3182 = vshll.u32 683565275, %v3179
      %v3183 = vshrl.u32 2475754826, %v3180
      %v3184 = vor.u32 %v3182, %v3183
      %v3185 = vshll.u32 2475754826, %v3179
      %v3186 = vshrl.u32 2131351028, %v3180
      %v3187 = vor.u32 %v3185, %v3186
      %v3188 = vshll.u32 2131351028, %v3179
      %v3189 = vshrl.u32 2102212464, %v3180
      %v3190 = vor.u32 %v3188, %v3189
      %v3191 = vshll.u32 2102212464, %v3179
      %v3192 = vshrl.u32 920167782, %v3180
      %v3193 = vor.u32 %v3191, %v3192
      %v3194 = vshll.u32 920167782, %v3179
      %v3195 = vshrl.u32 1326507024, %v3180
      %v3196 = vor.u32 %v3194, %v3195
      %vm3197 = vcmp.lt.s32.totalorder %v3178, 1
      %vm3198 = vcmp.lt.s32.totalorder %v3178, 2
      %vm3199 = vcmp.lt.s32.totalorder %v3178, 3
      %vm3200 = vcmp.lt.s32.totalorder %v3178, 4
      %v3201 = vsel %vm3197, %v3181, %v3184
      %v3202 = vsel %vm3200, %v3190, 2102212464
      %v3203 = vsel %vm3199, %v3187, %v3202
      %v3204 = vsel %vm3198, %v3201, %v3203
      %v3205 = vsel %vm3197, %v3184, %v3187
      %v3206 = vsel %vm3200, %v3193, 920167782
      %v3207 = vsel %vm3199, %v3190, %v3206
      %v3208 = vsel %vm3198, %v3205, %v3207
      %v3209 = vsel %vm3197, %v3187, %v3190
      %v3210 = vsel %vm3200, %v3196, 1326507024
      %v3211 = vsel %vm3199, %v3193, %v3210
      %v3212 = vsel %vm3198, %v3209, %v3211
      %v3213 = vshll.u32 %v3173, 8
      %v3214 = vmul.u32.u64.compose %v3213, %v3212
      %v3215 = vextract.low.u32 %v3214
      %v3216 = vextract.high.u32 %v3214
      %v3217 = vmul.u32.u64.compose %v3213, %v3208
      %v3218 = vextract.low.u32 %v3217
      %v3219 = vextract.high.u32 %v3217
      %v3220 = vmul.u32 %v3213, %v3204
      %v3221 = vadd.s32 %v3216, %v3218
      %vm3222 = vc.u32 %v3216, %v3218
      %v3223 = vadd.s32 %v3219, 1
      %v3224 = vsel %vm3222, %v3223, %v3219
      %v3225 = vadd.s32 %v3220, %v3224
      %v3226 = vadd.s32 %v3225, 536870912
      %v3227 = vshrl.u32 %v3226, 30
      %v3228 = vshll.u32 %v3227, 30
      %v3229 = vsub.s32 %v3225, %v3228
      %vm3230 = vcmp.lt.s32.totalorder %v3229, 0
      %v3231 = vsub.s32 0, %v3229
      %v3232 = vsel %vm3230, %v3231, %v3229
      %v3233 = vclz %v3232
      %v3234 = vsub.s32 %v3233, 2
      %vm3235 = vcmp.gt.s32.totalorder 0, %v3234
      %v3236 = vsel %vm3235, 0, %v3234
      %v3237 = vsub.s32 32, %v3236
      %v3238 = vshll.u32 %v3229, %v3236
      %v3239 = vshrl.u32 %v3221, %v3237
      %v3240 = vor.u32 %v3238, %v3239
      %v3241 = vsub.s32 4294967266, %v3236
      %v3242 = vadd.s32 %v3241, 127
      %v3243 = vshll.u32 %v3242, 23
      %v3244 = vor.u32 4788187, %v3243
      %v3245 = vand.u32 2147483647, %v3244
      %v3247 = vcvt.s32.f32 %v3240
      %v3248 = vmul.f32 %v3247, %v3245
      %v3249 = vxor.u32 %v3248, 2147483648
      %v3250 = vsel %vm3167, %v3249, %v3248
      %v3251 = vsub.s32 4, %v3227
      %v3252 = vsel %vm3167, %v3251, %v3227
      %v3253 = vsel %vm3166, %v550, %v3250
      %v3254 = vsel %vm3166, 0, %v3252
      %v3255 = vcosq.f32.pop %v3253
      %v3256 = vsinq.f32.pop %v3253
      %vm3257 = vweird.f32 %v550
      %v3258 = vadd.s32 %v3254, 3
      %v3259 = vand.u32 %v3258, 3
      %vm3260 = vcmp.lt.s32.totalorder %v3259, 2
      %vm3261 = vcmp.eq.s32.totalorder %v3259, 0
      %v3262 = vxor.u32 %v3256, 2147483648
      %v3263 = vsel %vm3261, %v3255, %v3262
      %vm3264 = vcmp.eq.s32.totalorder %v3259, 2
      %v3265 = vxor.u32 %v3255, 2147483648
      %v3266 = vsel %vm3264, %v3265, %v3256
      %v3267 = vsel %vm3260, %v3263, %v3266
      %v3268 = vsel %vm3257, nan, %v3267
      %v3269 = vand.u32 2147483647, %v551
      %vm3270 = vcmp.le.f32.partialorder %v3269, 0.7853982
      %vm3271 = vcmp.lt.s32.totalorder %v551, 0
      %v3272 = vand.u32 %v551, 2139095040
      %v3273 = vshrl.u32 %v3272, 23
      %v3274 = vsub.s32 %v3273, 127
      %v3275 = vand.u32 2147483647, %v551
      %v3276 = vand.u32 %v3275, 8388607
      %v3277 = vor.u32 %v3276, 8388608
      %v3278 = vsub.s32 0, %v3277
      %v3279 = vadd.s32 %v3274, 1
      %vm3280 = vcmp.gt.s32.totalorder %v3279, 0
      %v3281 = vsel %vm3280, %v3279, 0
      %v3282 = vshrl.u32 %v3281, 5
      %v3283 = vand.u32 %v3281, 31
      %v3284 = vsub.s32 32, %v3283
      %v3285 = vshrl.u32 683565275, %v3284
      %v3286 = vshll.u32 683565275, %v3283
      %v3287 = vshrl.u32 2475754826, %v3284
      %v3288 = vor.u32 %v3286, %v3287
      %v3289 = vshll.u32 2475754826, %v3283
      %v3290 = vshrl.u32 2131351028, %v3284
      %v3291 = vor.u32 %v3289, %v3290
      %v3292 = vshll.u32 2131351028, %v3283
      %v3293 = vshrl.u32 2102212464, %v3284
      %v3294 = vor.u32 %v3292, %v3293
      %v3295 = vshll.u32 2102212464, %v3283
      %v3296 = vshrl.u32 920167782, %v3284
      %v3297 = vor.u32 %v3295, %v3296
      %v3298 = vshll.u32 920167782, %v3283
      %v3299 = vshrl.u32 1326507024, %v3284
      %v3300 = vor.u32 %v3298, %v3299
      %vm3301 = vcmp.lt.s32.totalorder %v3282, 1
      %vm3302 = vcmp.lt.s32.totalorder %v3282, 2
      %vm3303 = vcmp.lt.s32.totalorder %v3282, 3
      %vm3304 = vcmp.lt.s32.totalorder %v3282, 4
      %v3305 = vsel %vm3301, %v3285, %v3288
      %v3306 = vsel %vm3304, %v3294, 2102212464
      %v3307 = vsel %vm3303, %v3291, %v3306
      %v3308 = vsel %vm3302, %v3305, %v3307
      %v3309 = vsel %vm3301, %v3288, %v3291
      %v3310 = vsel %vm3304, %v3297, 920167782
      %v3311 = vsel %vm3303, %v3294, %v3310
      %v3312 = vsel %vm3302, %v3309, %v3311
      %v3313 = vsel %vm3301, %v3291, %v3294
      %v3314 = vsel %vm3304, %v3300, 1326507024
      %v3315 = vsel %vm3303, %v3297, %v3314
      %v3316 = vsel %vm3302, %v3313, %v3315
      %v3317 = vshll.u32 %v3277, 8
      %v3318 = vmul.u32.u64.compose %v3317, %v3316
      %v3319 = vextract.low.u32 %v3318
      %v3320 = vextract.high.u32 %v3318
      %v3321 = vmul.u32.u64.compose %v3317, %v3312
      %v3322 = vextract.low.u32 %v3321
      %v3323 = vextract.high.u32 %v3321
      %v3324 = vmul.u32 %v3317, %v3308
      %v3325 = vadd.s32 %v3320, %v3322
      %vm3326 = vc.u32 %v3320, %v3322
      %v3327 = vadd.s32 %v3323, 1
      %v3328 = vsel %vm3326, %v3327, %v3323
      %v3329 = vadd.s32 %v3324, %v3328
      %v3330 = vadd.s32 %v3329, 536870912
      %v3331 = vshrl.u32 %v3330, 30
      %v3332 = vshll.u32 %v3331, 30
      %v3333 = vsub.s32 %v3329, %v3332
      %vm3334 = vcmp.lt.s32.totalorder %v3333, 0
      %v3335 = vsub.s32 0, %v3333
      %v3336 = vsel %vm3334, %v3335, %v3333
      %v3337 = vclz %v3336
      %v3338 = vsub.s32 %v3337, 2
      %vm3339 = vcmp.gt.s32.totalorder 0, %v3338
      %v3340 = vsel %vm3339, 0, %v3338
      %v3341 = vsub.s32 32, %v3340
      %v3342 = vshll.u32 %v3333, %v3340
      %v3343 = vshrl.u32 %v3325, %v3341
      %v3344 = vor.u32 %v3342, %v3343
      %v3345 = vsub.s32 4294967266, %v3340
      %v3346 = vadd.s32 %v3345, 127
      %v3347 = vshll.u32 %v3346, 23
      %v3348 = vor.u32 4788187, %v3347
      %v3349 = vand.u32 2147483647, %v3348
      %v3351 = vcvt.s32.f32 %v3344
      %v3352 = vmul.f32 %v3351, %v3349
      %v3353 = vxor.u32 %v3352, 2147483648
      %v3354 = vsel %vm3271, %v3353, %v3352
      %v3355 = vsub.s32 4, %v3331
      %v3356 = vsel %vm3271, %v3355, %v3331
      %v3357 = vsel %vm3270, %v551, %v3354
      %v3358 = vsel %vm3270, 0, %v3356
      %v3359 = vcosq.f32.pop %v3357
      %v3360 = vsinq.f32.pop %v3357
      %vm3361 = vweird.f32 %v551
      %v3362 = vadd.s32 %v3358, 3
      %v3363 = vand.u32 %v3362, 3
      %vm3364 = vcmp.lt.s32.totalorder %v3363, 2
      %vm3365 = vcmp.eq.s32.totalorder %v3363, 0
      %v3366 = vxor.u32 %v3360, 2147483648
      %v3367 = vsel %vm3365, %v3359, %v3366
      %vm3368 = vcmp.eq.s32.totalorder %v3363, 2
      %v3369 = vxor.u32 %v3359, 2147483648
      %v3370 = vsel %vm3368, %v3369, %v3360
      %v3371 = vsel %vm3364, %v3367, %v3370
      %v3372 = vsel %vm3361, nan, %v3371
      %v3373 = vand.u32 2147483647, %v552
      %vm3374 = vcmp.le.f32.partialorder %v3373, 0.7853982
      %vm3375 = vcmp.lt.s32.totalorder %v552, 0
      %v3376 = vand.u32 %v552, 2139095040
      %v3377 = vshrl.u32 %v3376, 23
      %v3378 = vsub.s32 %v3377, 127
      %v3379 = vand.u32 2147483647, %v552
      %v3380 = vand.u32 %v3379, 8388607
      %v3381 = vor.u32 %v3380, 8388608
      %v3382 = vsub.s32 0, %v3381
      %v3383 = vadd.s32 %v3378, 1
      %vm3384 = vcmp.gt.s32.totalorder %v3383, 0
      %v3385 = vsel %vm3384, %v3383, 0
      %v3386 = vshrl.u32 %v3385, 5
      %v3387 = vand.u32 %v3385, 31
      %v3388 = vsub.s32 32, %v3387
      %v3389 = vshrl.u32 683565275, %v3388
      %v3390 = vshll.u32 683565275, %v3387
      %v3391 = vshrl.u32 2475754826, %v3388
      %v3392 = vor.u32 %v3390, %v3391
      %v3393 = vshll.u32 2475754826, %v3387
      %v3394 = vshrl.u32 2131351028, %v3388
      %v3395 = vor.u32 %v3393, %v3394
      %v3396 = vshll.u32 2131351028, %v3387
      %v3397 = vshrl.u32 2102212464, %v3388
      %v3398 = vor.u32 %v3396, %v3397
      %v3399 = vshll.u32 2102212464, %v3387
      %v3400 = vshrl.u32 920167782, %v3388
      %v3401 = vor.u32 %v3399, %v3400
      %v3402 = vshll.u32 920167782, %v3387
      %v3403 = vshrl.u32 1326507024, %v3388
      %v3404 = vor.u32 %v3402, %v3403
      %vm3405 = vcmp.lt.s32.totalorder %v3386, 1
      %vm3406 = vcmp.lt.s32.totalorder %v3386, 2
      %vm3407 = vcmp.lt.s32.totalorder %v3386, 3
      %vm3408 = vcmp.lt.s32.totalorder %v3386, 4
      %v3409 = vsel %vm3405, %v3389, %v3392
      %v3410 = vsel %vm3408, %v3398, 2102212464
      %v3411 = vsel %vm3407, %v3395, %v3410
      %v3412 = vsel %vm3406, %v3409, %v3411
      %v3413 = vsel %vm3405, %v3392, %v3395
      %v3414 = vsel %vm3408, %v3401, 920167782
      %v3415 = vsel %vm3407, %v3398, %v3414
      %v3416 = vsel %vm3406, %v3413, %v3415
      %v3417 = vsel %vm3405, %v3395, %v3398
      %v3418 = vsel %vm3408, %v3404, 1326507024
      %v3419 = vsel %vm3407, %v3401, %v3418
      %v3420 = vsel %vm3406, %v3417, %v3419
      %v3421 = vshll.u32 %v3381, 8
      %v3422 = vmul.u32.u64.compose %v3421, %v3420
      %v3423 = vextract.low.u32 %v3422
      %v3424 = vextract.high.u32 %v3422
      %v3425 = vmul.u32.u64.compose %v3421, %v3416
      %v3426 = vextract.low.u32 %v3425
      %v3427 = vextract.high.u32 %v3425
      %v3428 = vmul.u32 %v3421, %v3412
      %v3429 = vadd.s32 %v3424, %v3426
      %vm3430 = vc.u32 %v3424, %v3426
      %v3431 = vadd.s32 %v3427, 1
      %v3432 = vsel %vm3430, %v3431, %v3427
      %v3433 = vadd.s32 %v3428, %v3432
      %v3434 = vadd.s32 %v3433, 536870912
      %v3435 = vshrl.u32 %v3434, 30
      %v3436 = vshll.u32 %v3435, 30
      %v3437 = vsub.s32 %v3433, %v3436
      %vm3438 = vcmp.lt.s32.totalorder %v3437, 0
      %v3439 = vsub.s32 0, %v3437
      %v3440 = vsel %vm3438, %v3439, %v3437
      %v3441 = vclz %v3440
      %v3442 = vsub.s32 %v3441, 2
      %vm3443 = vcmp.gt.s32.totalorder 0, %v3442
      %v3444 = vsel %vm3443, 0, %v3442
      %v3445 = vsub.s32 32, %v3444
      %v3446 = vshll.u32 %v3437, %v3444
      %v3447 = vshrl.u32 %v3429, %v3445
      %v3448 = vor.u32 %v3446, %v3447
      %v3449 = vsub.s32 4294967266, %v3444
      %v3450 = vadd.s32 %v3449, 127
      %v3451 = vshll.u32 %v3450, 23
      %v3452 = vor.u32 4788187, %v3451
      %v3453 = vand.u32 2147483647, %v3452
      %v3455 = vcvt.s32.f32 %v3448
      %v3456 = vmul.f32 %v3455, %v3453
      %v3457 = vxor.u32 %v3456, 2147483648
      %v3458 = vsel %vm3375, %v3457, %v3456
      %v3459 = vsub.s32 4, %v3435
      %v3460 = vsel %vm3375, %v3459, %v3435
      %v3461 = vsel %vm3374, %v552, %v3458
      %v3462 = vsel %vm3374, 0, %v3460
      %v3463 = vcosq.f32.pop %v3461
      %v3464 = vsinq.f32.pop %v3461
      %vm3465 = vweird.f32 %v552
      %v3466 = vadd.s32 %v3462, 3
      %v3467 = vand.u32 %v3466, 3
      %vm3468 = vcmp.lt.s32.totalorder %v3467, 2
      %vm3469 = vcmp.eq.s32.totalorder %v3467, 0
      %v3470 = vxor.u32 %v3464, 2147483648
      %v3471 = vsel %vm3469, %v3463, %v3470
      %vm3472 = vcmp.eq.s32.totalorder %v3467, 2
      %v3473 = vxor.u32 %v3463, 2147483648
      %v3474 = vsel %vm3472, %v3473, %v3464
      %v3475 = vsel %vm3468, %v3471, %v3474
      %v3476 = vsel %vm3465, nan, %v3475
      %v3477 = vand.u32 2147483647, %v553
      %vm3478 = vcmp.le.f32.partialorder %v3477, 0.7853982
      %vm3479 = vcmp.lt.s32.totalorder %v553, 0
      %v3480 = vand.u32 %v553, 2139095040
      %v3481 = vshrl.u32 %v3480, 23
      %v3482 = vsub.s32 %v3481, 127
      %v3483 = vand.u32 2147483647, %v553
      %v3484 = vand.u32 %v3483, 8388607
      %v3485 = vor.u32 %v3484, 8388608
      %v3486 = vsub.s32 0, %v3485
      %v3487 = vadd.s32 %v3482, 1
      %vm3488 = vcmp.gt.s32.totalorder %v3487, 0
      %v3489 = vsel %vm3488, %v3487, 0
      %v3490 = vshrl.u32 %v3489, 5
      %v3491 = vand.u32 %v3489, 31
      %v3492 = vsub.s32 32, %v3491
      %v3493 = vshrl.u32 683565275, %v3492
      %v3494 = vshll.u32 683565275, %v3491
      %v3495 = vshrl.u32 2475754826, %v3492
      %v3496 = vor.u32 %v3494, %v3495
      %v3497 = vshll.u32 2475754826, %v3491
      %v3498 = vshrl.u32 2131351028, %v3492
      %v3499 = vor.u32 %v3497, %v3498
      %v3500 = vshll.u32 2131351028, %v3491
      %v3501 = vshrl.u32 2102212464, %v3492
      %v3502 = vor.u32 %v3500, %v3501
      %v3503 = vshll.u32 2102212464, %v3491
      %v3504 = vshrl.u32 920167782, %v3492
      %v3505 = vor.u32 %v3503, %v3504
      %v3506 = vshll.u32 920167782, %v3491
      %v3507 = vshrl.u32 1326507024, %v3492
      %v3508 = vor.u32 %v3506, %v3507
      %vm3509 = vcmp.lt.s32.totalorder %v3490, 1
      %vm3510 = vcmp.lt.s32.totalorder %v3490, 2
      %vm3511 = vcmp.lt.s32.totalorder %v3490, 3
      %vm3512 = vcmp.lt.s32.totalorder %v3490, 4
      %v3513 = vsel %vm3509, %v3493, %v3496
      %v3514 = vsel %vm3512, %v3502, 2102212464
      %v3515 = vsel %vm3511, %v3499, %v3514
      %v3516 = vsel %vm3510, %v3513, %v3515
      %v3517 = vsel %vm3509, %v3496, %v3499
      %v3518 = vsel %vm3512, %v3505, 920167782
      %v3519 = vsel %vm3511, %v3502, %v3518
      %v3520 = vsel %vm3510, %v3517, %v3519
      %v3521 = vsel %vm3509, %v3499, %v3502
      %v3522 = vsel %vm3512, %v3508, 1326507024
      %v3523 = vsel %vm3511, %v3505, %v3522
      %v3524 = vsel %vm3510, %v3521, %v3523
      %v3525 = vshll.u32 %v3485, 8
      %v3526 = vmul.u32.u64.compose %v3525, %v3524
      %v3527 = vextract.low.u32 %v3526
      %v3528 = vextract.high.u32 %v3526
      %v3529 = vmul.u32.u64.compose %v3525, %v3520
      %v3530 = vextract.low.u32 %v3529
      %v3531 = vextract.high.u32 %v3529
      %v3532 = vmul.u32 %v3525, %v3516
      %v3533 = vadd.s32 %v3528, %v3530
      %vm3534 = vc.u32 %v3528, %v3530
      %v3535 = vadd.s32 %v3531, 1
      %v3536 = vsel %vm3534, %v3535, %v3531
      %v3537 = vadd.s32 %v3532, %v3536
      %v3538 = vadd.s32 %v3537, 536870912
      %v3539 = vshrl.u32 %v3538, 30
      %v3540 = vshll.u32 %v3539, 30
      %v3541 = vsub.s32 %v3537, %v3540
      %vm3542 = vcmp.lt.s32.totalorder %v3541, 0
      %v3543 = vsub.s32 0, %v3541
      %v3544 = vsel %vm3542, %v3543, %v3541
      %v3545 = vclz %v3544
      %v3546 = vsub.s32 %v3545, 2
      %vm3547 = vcmp.gt.s32.totalorder 0, %v3546
      %v3548 = vsel %vm3547, 0, %v3546
      %v3549 = vsub.s32 32, %v3548
      %v3550 = vshll.u32 %v3541, %v3548
      %v3551 = vshrl.u32 %v3533, %v3549
      %v3552 = vor.u32 %v3550, %v3551
      %v3553 = vsub.s32 4294967266, %v3548
      %v3554 = vadd.s32 %v3553, 127
      %v3555 = vshll.u32 %v3554, 23
      %v3556 = vor.u32 4788187, %v3555
      %v3557 = vand.u32 2147483647, %v3556
      %v3559 = vcvt.s32.f32 %v3552
      %v3560 = vmul.f32 %v3559, %v3557
      %v3561 = vxor.u32 %v3560, 2147483648
      %v3562 = vsel %vm3479, %v3561, %v3560
      %v3563 = vsub.s32 4, %v3539
      %v3564 = vsel %vm3479, %v3563, %v3539
      %v3565 = vsel %vm3478, %v553, %v3562
      %v3566 = vsel %vm3478, 0, %v3564
      %v3567 = vcosq.f32.pop %v3565
      %v3568 = vsinq.f32.pop %v3565
      %vm3569 = vweird.f32 %v553
      %v3570 = vadd.s32 %v3566, 3
      %v3571 = vand.u32 %v3570, 3
      %vm3572 = vcmp.lt.s32.totalorder %v3571, 2
      %vm3573 = vcmp.eq.s32.totalorder %v3571, 0
      %v3574 = vxor.u32 %v3568, 2147483648
      %v3575 = vsel %vm3573, %v3567, %v3574
      %vm3576 = vcmp.eq.s32.totalorder %v3571, 2
      %v3577 = vxor.u32 %v3567, 2147483648
      %v3578 = vsel %vm3576, %v3577, %v3568
      %v3579 = vsel %vm3572, %v3575, %v3578
      %v3580 = vsel %vm3569, nan, %v3579
      %v3581 = vand.u32 2147483647, %v554
      %vm3582 = vcmp.le.f32.partialorder %v3581, 0.7853982
      %vm3583 = vcmp.lt.s32.totalorder %v554, 0
      %v3584 = vand.u32 %v554, 2139095040
      %v3585 = vshrl.u32 %v3584, 23
      %v3586 = vsub.s32 %v3585, 127
      %v3587 = vand.u32 2147483647, %v554
      %v3588 = vand.u32 %v3587, 8388607
      %v3589 = vor.u32 %v3588, 8388608
      %v3590 = vsub.s32 0, %v3589
      %v3591 = vadd.s32 %v3586, 1
      %vm3592 = vcmp.gt.s32.totalorder %v3591, 0
      %v3593 = vsel %vm3592, %v3591, 0
      %v3594 = vshrl.u32 %v3593, 5
      %v3595 = vand.u32 %v3593, 31
      %v3596 = vsub.s32 32, %v3595
      %v3597 = vshrl.u32 683565275, %v3596
      %v3598 = vshll.u32 683565275, %v3595
      %v3599 = vshrl.u32 2475754826, %v3596
      %v3600 = vor.u32 %v3598, %v3599
      %v3601 = vshll.u32 2475754826, %v3595
      %v3602 = vshrl.u32 2131351028, %v3596
      %v3603 = vor.u32 %v3601, %v3602
      %v3604 = vshll.u32 2131351028, %v3595
      %v3605 = vshrl.u32 2102212464, %v3596
      %v3606 = vor.u32 %v3604, %v3605
      %v3607 = vshll.u32 2102212464, %v3595
      %v3608 = vshrl.u32 920167782, %v3596
      %v3609 = vor.u32 %v3607, %v3608
      %v3610 = vshll.u32 920167782, %v3595
      %v3611 = vshrl.u32 1326507024, %v3596
      %v3612 = vor.u32 %v3610, %v3611
      %vm3613 = vcmp.lt.s32.totalorder %v3594, 1
      %vm3614 = vcmp.lt.s32.totalorder %v3594, 2
      %vm3615 = vcmp.lt.s32.totalorder %v3594, 3
      %vm3616 = vcmp.lt.s32.totalorder %v3594, 4
      %v3617 = vsel %vm3613, %v3597, %v3600
      %v3618 = vsel %vm3616, %v3606, 2102212464
      %v3619 = vsel %vm3615, %v3603, %v3618
      %v3620 = vsel %vm3614, %v3617, %v3619
      %v3621 = vsel %vm3613, %v3600, %v3603
      %v3622 = vsel %vm3616, %v3609, 920167782
      %v3623 = vsel %vm3615, %v3606, %v3622
      %v3624 = vsel %vm3614, %v3621, %v3623
      %v3625 = vsel %vm3613, %v3603, %v3606
      %v3626 = vsel %vm3616, %v3612, 1326507024
      %v3627 = vsel %vm3615, %v3609, %v3626
      %v3628 = vsel %vm3614, %v3625, %v3627
      %v3629 = vshll.u32 %v3589, 8
      %v3630 = vmul.u32.u64.compose %v3629, %v3628
      %v3631 = vextract.low.u32 %v3630
      %v3632 = vextract.high.u32 %v3630
      %v3633 = vmul.u32.u64.compose %v3629, %v3624
      %v3634 = vextract.low.u32 %v3633
      %v3635 = vextract.high.u32 %v3633
      %v3636 = vmul.u32 %v3629, %v3620
      %v3637 = vadd.s32 %v3632, %v3634
      %vm3638 = vc.u32 %v3632, %v3634
      %v3639 = vadd.s32 %v3635, 1
      %v3640 = vsel %vm3638, %v3639, %v3635
      %v3641 = vadd.s32 %v3636, %v3640
      %v3642 = vadd.s32 %v3641, 536870912
      %v3643 = vshrl.u32 %v3642, 30
      %v3644 = vshll.u32 %v3643, 30
      %v3645 = vsub.s32 %v3641, %v3644
      %vm3646 = vcmp.lt.s32.totalorder %v3645, 0
      %v3647 = vsub.s32 0, %v3645
      %v3648 = vsel %vm3646, %v3647, %v3645
      %v3649 = vclz %v3648
      %v3650 = vsub.s32 %v3649, 2
      %vm3651 = vcmp.gt.s32.totalorder 0, %v3650
      %v3652 = vsel %vm3651, 0, %v3650
      %v3653 = vsub.s32 32, %v3652
      %v3654 = vshll.u32 %v3645, %v3652
      %v3655 = vshrl.u32 %v3637, %v3653
      %v3656 = vor.u32 %v3654, %v3655
      %v3657 = vsub.s32 4294967266, %v3652
      %v3658 = vadd.s32 %v3657, 127
      %v3659 = vshll.u32 %v3658, 23
      %v3660 = vor.u32 4788187, %v3659
      %v3661 = vand.u32 2147483647, %v3660
      %v3663 = vcvt.s32.f32 %v3656
      %v3664 = vmul.f32 %v3663, %v3661
      %v3665 = vxor.u32 %v3664, 2147483648
      %v3666 = vsel %vm3583, %v3665, %v3664
      %v3667 = vsub.s32 4, %v3643
      %v3668 = vsel %vm3583, %v3667, %v3643
      %v3669 = vsel %vm3582, %v554, %v3666
      %v3670 = vsel %vm3582, 0, %v3668
      %v3671 = vcosq.f32.pop %v3669
      %v3672 = vsinq.f32.pop %v3669
      %vm3673 = vweird.f32 %v554
      %v3674 = vadd.s32 %v3670, 3
      %v3675 = vand.u32 %v3674, 3
      %vm3676 = vcmp.lt.s32.totalorder %v3675, 2
      %vm3677 = vcmp.eq.s32.totalorder %v3675, 0
      %v3678 = vxor.u32 %v3672, 2147483648
      %v3679 = vsel %vm3677, %v3671, %v3678
      %vm3680 = vcmp.eq.s32.totalorder %v3675, 2
      %v3681 = vxor.u32 %v3671, 2147483648
      %v3682 = vsel %vm3680, %v3681, %v3672
      %v3683 = vsel %vm3676, %v3679, %v3682
      %v3684 = vsel %vm3673, nan, %v3683
      %v3685 = vand.u32 2147483647, %v555
      %vm3686 = vcmp.le.f32.partialorder %v3685, 0.7853982
      %vm3687 = vcmp.lt.s32.totalorder %v555, 0
      %v3688 = vand.u32 %v555, 2139095040
      %v3689 = vshrl.u32 %v3688, 23
      %v3690 = vsub.s32 %v3689, 127
      %v3691 = vand.u32 2147483647, %v555
      %v3692 = vand.u32 %v3691, 8388607
      %v3693 = vor.u32 %v3692, 8388608
      %v3694 = vsub.s32 0, %v3693
      %v3695 = vadd.s32 %v3690, 1
      %vm3696 = vcmp.gt.s32.totalorder %v3695, 0
      %v3697 = vsel %vm3696, %v3695, 0
      %v3698 = vshrl.u32 %v3697, 5
      %v3699 = vand.u32 %v3697, 31
      %v3700 = vsub.s32 32, %v3699
      %v3701 = vshrl.u32 683565275, %v3700
      %v3702 = vshll.u32 683565275, %v3699
      %v3703 = vshrl.u32 2475754826, %v3700
      %v3704 = vor.u32 %v3702, %v3703
      %v3705 = vshll.u32 2475754826, %v3699
      %v3706 = vshrl.u32 2131351028, %v3700
      %v3707 = vor.u32 %v3705, %v3706
      %v3708 = vshll.u32 2131351028, %v3699
      %v3709 = vshrl.u32 2102212464, %v3700
      %v3710 = vor.u32 %v3708, %v3709
      %v3711 = vshll.u32 2102212464, %v3699
      %v3712 = vshrl.u32 920167782, %v3700
      %v3713 = vor.u32 %v3711, %v3712
      %v3714 = vshll.u32 920167782, %v3699
      %v3715 = vshrl.u32 1326507024, %v3700
      %v3716 = vor.u32 %v3714, %v3715
      %vm3717 = vcmp.lt.s32.totalorder %v3698, 1
      %vm3718 = vcmp.lt.s32.totalorder %v3698, 2
      %vm3719 = vcmp.lt.s32.totalorder %v3698, 3
      %vm3720 = vcmp.lt.s32.totalorder %v3698, 4
      %v3721 = vsel %vm3717, %v3701, %v3704
      %v3722 = vsel %vm3720, %v3710, 2102212464
      %v3723 = vsel %vm3719, %v3707, %v3722
      %v3724 = vsel %vm3718, %v3721, %v3723
      %v3725 = vsel %vm3717, %v3704, %v3707
      %v3726 = vsel %vm3720, %v3713, 920167782
      %v3727 = vsel %vm3719, %v3710, %v3726
      %v3728 = vsel %vm3718, %v3725, %v3727
      %v3729 = vsel %vm3717, %v3707, %v3710
      %v3730 = vsel %vm3720, %v3716, 1326507024
      %v3731 = vsel %vm3719, %v3713, %v3730
      %v3732 = vsel %vm3718, %v3729, %v3731
      %v3733 = vshll.u32 %v3693, 8
      %v3734 = vmul.u32.u64.compose %v3733, %v3732
      %v3735 = vextract.low.u32 %v3734
      %v3736 = vextract.high.u32 %v3734
      %v3737 = vmul.u32.u64.compose %v3733, %v3728
      %v3738 = vextract.low.u32 %v3737
      %v3739 = vextract.high.u32 %v3737
      %v3740 = vmul.u32 %v3733, %v3724
      %v3741 = vadd.s32 %v3736, %v3738
      %vm3742 = vc.u32 %v3736, %v3738
      %v3743 = vadd.s32 %v3739, 1
      %v3744 = vsel %vm3742, %v3743, %v3739
      %v3745 = vadd.s32 %v3740, %v3744
      %v3746 = vadd.s32 %v3745, 536870912
      %v3747 = vshrl.u32 %v3746, 30
      %v3748 = vshll.u32 %v3747, 30
      %v3749 = vsub.s32 %v3745, %v3748
      %vm3750 = vcmp.lt.s32.totalorder %v3749, 0
      %v3751 = vsub.s32 0, %v3749
      %v3752 = vsel %vm3750, %v3751, %v3749
      %v3753 = vclz %v3752
      %v3754 = vsub.s32 %v3753, 2
      %vm3755 = vcmp.gt.s32.totalorder 0, %v3754
      %v3756 = vsel %vm3755, 0, %v3754
      %v3757 = vsub.s32 32, %v3756
      %v3758 = vshll.u32 %v3749, %v3756
      %v3759 = vshrl.u32 %v3741, %v3757
      %v3760 = vor.u32 %v3758, %v3759
      %v3761 = vsub.s32 4294967266, %v3756
      %v3762 = vadd.s32 %v3761, 127
      %v3763 = vshll.u32 %v3762, 23
      %v3764 = vor.u32 4788187, %v3763
      %v3765 = vand.u32 2147483647, %v3764
      %v3767 = vcvt.s32.f32 %v3760
      %v3768 = vmul.f32 %v3767, %v3765
      %v3769 = vxor.u32 %v3768, 2147483648
      %v3770 = vsel %vm3687, %v3769, %v3768
      %v3771 = vsub.s32 4, %v3747
      %v3772 = vsel %vm3687, %v3771, %v3747
      %v3773 = vsel %vm3686, %v555, %v3770
      %v3774 = vsel %vm3686, 0, %v3772
      %v3775 = vcosq.f32.pop %v3773
      %v3776 = vsinq.f32.pop %v3773
      %vm3777 = vweird.f32 %v555
      %v3778 = vadd.s32 %v3774, 3
      %v3779 = vand.u32 %v3778, 3
      %vm3780 = vcmp.lt.s32.totalorder %v3779, 2
      %vm3781 = vcmp.eq.s32.totalorder %v3779, 0
      %v3782 = vxor.u32 %v3776, 2147483648
      %v3783 = vsel %vm3781, %v3775, %v3782
      %vm3784 = vcmp.eq.s32.totalorder %v3779, 2
      %v3785 = vxor.u32 %v3775, 2147483648
      %v3786 = vsel %vm3784, %v3785, %v3776
      %v3787 = vsel %vm3780, %v3783, %v3786
      %v3788 = vsel %vm3777, nan, %v3787
      %v3789 = vand.u32 2147483647, %v556
      %vm3790 = vcmp.le.f32.partialorder %v3789, 0.7853982
      %vm3791 = vcmp.lt.s32.totalorder %v556, 0
      %v3792 = vand.u32 %v556, 2139095040
      %v3793 = vshrl.u32 %v3792, 23
      %v3794 = vsub.s32 %v3793, 127
      %v3795 = vand.u32 2147483647, %v556
      %v3796 = vand.u32 %v3795, 8388607
      %v3797 = vor.u32 %v3796, 8388608
      %v3798 = vsub.s32 0, %v3797
      %v3799 = vadd.s32 %v3794, 1
      %vm3800 = vcmp.gt.s32.totalorder %v3799, 0
      %v3801 = vsel %vm3800, %v3799, 0
      %v3802 = vshrl.u32 %v3801, 5
      %v3803 = vand.u32 %v3801, 31
      %v3804 = vsub.s32 32, %v3803
      %v3805 = vshrl.u32 683565275, %v3804
      %v3806 = vshll.u32 683565275, %v3803
      %v3807 = vshrl.u32 2475754826, %v3804
      %v3808 = vor.u32 %v3806, %v3807
      %v3809 = vshll.u32 2475754826, %v3803
      %v3810 = vshrl.u32 2131351028, %v3804
      %v3811 = vor.u32 %v3809, %v3810
      %v3812 = vshll.u32 2131351028, %v3803
      %v3813 = vshrl.u32 2102212464, %v3804
      %v3814 = vor.u32 %v3812, %v3813
      %v3815 = vshll.u32 2102212464, %v3803
      %v3816 = vshrl.u32 920167782, %v3804
      %v3817 = vor.u32 %v3815, %v3816
      %v3818 = vshll.u32 920167782, %v3803
      %v3819 = vshrl.u32 1326507024, %v3804
      %v3820 = vor.u32 %v3818, %v3819
      %vm3821 = vcmp.lt.s32.totalorder %v3802, 1
      %vm3822 = vcmp.lt.s32.totalorder %v3802, 2
      %vm3823 = vcmp.lt.s32.totalorder %v3802, 3
      %vm3824 = vcmp.lt.s32.totalorder %v3802, 4
      %v3825 = vsel %vm3821, %v3805, %v3808
      %v3826 = vsel %vm3824, %v3814, 2102212464
      %v3827 = vsel %vm3823, %v3811, %v3826
      %v3828 = vsel %vm3822, %v3825, %v3827
      %v3829 = vsel %vm3821, %v3808, %v3811
      %v3830 = vsel %vm3824, %v3817, 920167782
      %v3831 = vsel %vm3823, %v3814, %v3830
      %v3832 = vsel %vm3822, %v3829, %v3831
      %v3833 = vsel %vm3821, %v3811, %v3814
      %v3834 = vsel %vm3824, %v3820, 1326507024
      %v3835 = vsel %vm3823, %v3817, %v3834
      %v3836 = vsel %vm3822, %v3833, %v3835
      %v3837 = vshll.u32 %v3797, 8
      %v3838 = vmul.u32.u64.compose %v3837, %v3836
      %v3839 = vextract.low.u32 %v3838
      %v3840 = vextract.high.u32 %v3838
      %v3841 = vmul.u32.u64.compose %v3837, %v3832
      %v3842 = vextract.low.u32 %v3841
      %v3843 = vextract.high.u32 %v3841
      %v3844 = vmul.u32 %v3837, %v3828
      %v3845 = vadd.s32 %v3840, %v3842
      %vm3846 = vc.u32 %v3840, %v3842
      %v3847 = vadd.s32 %v3843, 1
      %v3848 = vsel %vm3846, %v3847, %v3843
      %v3849 = vadd.s32 %v3844, %v3848
      %v3850 = vadd.s32 %v3849, 536870912
      %v3851 = vshrl.u32 %v3850, 30
      %v3852 = vshll.u32 %v3851, 30
      %v3853 = vsub.s32 %v3849, %v3852
      %vm3854 = vcmp.lt.s32.totalorder %v3853, 0
      %v3855 = vsub.s32 0, %v3853
      %v3856 = vsel %vm3854, %v3855, %v3853
      %v3857 = vclz %v3856
      %v3858 = vsub.s32 %v3857, 2
      %vm3859 = vcmp.gt.s32.totalorder 0, %v3858
      %v3860 = vsel %vm3859, 0, %v3858
      %v3861 = vsub.s32 32, %v3860
      %v3862 = vshll.u32 %v3853, %v3860
      %v3863 = vshrl.u32 %v3845, %v3861
      %v3864 = vor.u32 %v3862, %v3863
      %v3865 = vsub.s32 4294967266, %v3860
      %v3866 = vadd.s32 %v3865, 127
      %v3867 = vshll.u32 %v3866, 23
      %v3868 = vor.u32 4788187, %v3867
      %v3869 = vand.u32 2147483647, %v3868
      %v3871 = vcvt.s32.f32 %v3864
      %v3872 = vmul.f32 %v3871, %v3869
      %v3873 = vxor.u32 %v3872, 2147483648
      %v3874 = vsel %vm3791, %v3873, %v3872
      %v3875 = vsub.s32 4, %v3851
      %v3876 = vsel %vm3791, %v3875, %v3851
      %v3877 = vsel %vm3790, %v556, %v3874
      %v3878 = vsel %vm3790, 0, %v3876
      %v3879 = vcosq.f32.pop %v3877
      %v3880 = vsinq.f32.pop %v3877
      %vm3881 = vweird.f32 %v556
      %v3882 = vadd.s32 %v3878, 3
      %v3883 = vand.u32 %v3882, 3
      %vm3884 = vcmp.lt.s32.totalorder %v3883, 2
      %vm3885 = vcmp.eq.s32.totalorder %v3883, 0
      %v3886 = vxor.u32 %v3880, 2147483648
      %v3887 = vsel %vm3885, %v3879, %v3886
      %vm3888 = vcmp.eq.s32.totalorder %v3883, 2
      %v3889 = vxor.u32 %v3879, 2147483648
      %v3890 = vsel %vm3888, %v3889, %v3880
      %v3891 = vsel %vm3884, %v3887, %v3890
      %v3892 = vsel %vm3881, nan, %v3891
      %v3893 = vand.u32 2147483647, %v557
      %vm3894 = vcmp.le.f32.partialorder %v3893, 0.7853982
      %vm3895 = vcmp.lt.s32.totalorder %v557, 0
      %v3896 = vand.u32 %v557, 2139095040
      %v3897 = vshrl.u32 %v3896, 23
      %v3898 = vsub.s32 %v3897, 127
      %v3899 = vand.u32 2147483647, %v557
      %v3900 = vand.u32 %v3899, 8388607
      %v3901 = vor.u32 %v3900, 8388608
      %v3902 = vsub.s32 0, %v3901
      %v3903 = vadd.s32 %v3898, 1
      %vm3904 = vcmp.gt.s32.totalorder %v3903, 0
      %v3905 = vsel %vm3904, %v3903, 0
      %v3906 = vshrl.u32 %v3905, 5
      %v3907 = vand.u32 %v3905, 31
      %v3908 = vsub.s32 32, %v3907
      %v3909 = vshrl.u32 683565275, %v3908
      %v3910 = vshll.u32 683565275, %v3907
      %v3911 = vshrl.u32 2475754826, %v3908
      %v3912 = vor.u32 %v3910, %v3911
      %v3913 = vshll.u32 2475754826, %v3907
      %v3914 = vshrl.u32 2131351028, %v3908
      %v3915 = vor.u32 %v3913, %v3914
      %v3916 = vshll.u32 2131351028, %v3907
      %v3917 = vshrl.u32 2102212464, %v3908
      %v3918 = vor.u32 %v3916, %v3917
      %v3919 = vshll.u32 2102212464, %v3907
      %v3920 = vshrl.u32 920167782, %v3908
      %v3921 = vor.u32 %v3919, %v3920
      %v3922 = vshll.u32 920167782, %v3907
      %v3923 = vshrl.u32 1326507024, %v3908
      %v3924 = vor.u32 %v3922, %v3923
      %vm3925 = vcmp.lt.s32.totalorder %v3906, 1
      %vm3926 = vcmp.lt.s32.totalorder %v3906, 2
      %vm3927 = vcmp.lt.s32.totalorder %v3906, 3
      %vm3928 = vcmp.lt.s32.totalorder %v3906, 4
      %v3929 = vsel %vm3925, %v3909, %v3912
      %v3930 = vsel %vm3928, %v3918, 2102212464
      %v3931 = vsel %vm3927, %v3915, %v3930
      %v3932 = vsel %vm3926, %v3929, %v3931
      %v3933 = vsel %vm3925, %v3912, %v3915
      %v3934 = vsel %vm3928, %v3921, 920167782
      %v3935 = vsel %vm3927, %v3918, %v3934
      %v3936 = vsel %vm3926, %v3933, %v3935
      %v3937 = vsel %vm3925, %v3915, %v3918
      %v3938 = vsel %vm3928, %v3924, 1326507024
      %v3939 = vsel %vm3927, %v3921, %v3938
      %v3940 = vsel %vm3926, %v3937, %v3939
      %v3941 = vshll.u32 %v3901, 8
      %v3942 = vmul.u32.u64.compose %v3941, %v3940
      %v3943 = vextract.low.u32 %v3942
      %v3944 = vextract.high.u32 %v3942
      %v3945 = vmul.u32.u64.compose %v3941, %v3936
      %v3946 = vextract.low.u32 %v3945
      %v3947 = vextract.high.u32 %v3945
      %v3948 = vmul.u32 %v3941, %v3932
      %v3949 = vadd.s32 %v3944, %v3946
      %vm3950 = vc.u32 %v3944, %v3946
      %v3951 = vadd.s32 %v3947, 1
      %v3952 = vsel %vm3950, %v3951, %v3947
      %v3953 = vadd.s32 %v3948, %v3952
      %v3954 = vadd.s32 %v3953, 536870912
      %v3955 = vshrl.u32 %v3954, 30
      %v3956 = vshll.u32 %v3955, 30
      %v3957 = vsub.s32 %v3953, %v3956
      %vm3958 = vcmp.lt.s32.totalorder %v3957, 0
      %v3959 = vsub.s32 0, %v3957
      %v3960 = vsel %vm3958, %v3959, %v3957
      %v3961 = vclz %v3960
      %v3962 = vsub.s32 %v3961, 2
      %vm3963 = vcmp.gt.s32.totalorder 0, %v3962
      %v3964 = vsel %vm3963, 0, %v3962
      %v3965 = vsub.s32 32, %v3964
      %v3966 = vshll.u32 %v3957, %v3964
      %v3967 = vshrl.u32 %v3949, %v3965
      %v3968 = vor.u32 %v3966, %v3967
      %v3969 = vsub.s32 4294967266, %v3964
      %v3970 = vadd.s32 %v3969, 127
      %v3971 = vshll.u32 %v3970, 23
      %v3972 = vor.u32 4788187, %v3971
      %v3973 = vand.u32 2147483647, %v3972
      %v3975 = vcvt.s32.f32 %v3968
      %v3976 = vmul.f32 %v3975, %v3973
      %v3977 = vxor.u32 %v3976, 2147483648
      %v3978 = vsel %vm3895, %v3977, %v3976
      %v3979 = vsub.s32 4, %v3955
      %v3980 = vsel %vm3895, %v3979, %v3955
      %v3981 = vsel %vm3894, %v557, %v3978
      %v3982 = vsel %vm3894, 0, %v3980
      %v3983 = vcosq.f32.pop %v3981
      %v3984 = vsinq.f32.pop %v3981
      %vm3985 = vweird.f32 %v557
      %v3986 = vadd.s32 %v3982, 3
      %v3987 = vand.u32 %v3986, 3
      %vm3988 = vcmp.lt.s32.totalorder %v3987, 2
      %vm3989 = vcmp.eq.s32.totalorder %v3987, 0
      %v3990 = vxor.u32 %v3984, 2147483648
      %v3991 = vsel %vm3989, %v3983, %v3990
      %vm3992 = vcmp.eq.s32.totalorder %v3987, 2
      %v3993 = vxor.u32 %v3983, 2147483648
      %v3994 = vsel %vm3992, %v3993, %v3984
      %v3995 = vsel %vm3988, %v3991, %v3994
      %v3996 = vsel %vm3985, nan, %v3995
      %v3997 = vand.u32 2147483647, %v558
      %vm3998 = vcmp.le.f32.partialorder %v3997, 0.7853982
      %vm3999 = vcmp.lt.s32.totalorder %v558, 0
      %v4000 = vand.u32 %v558, 2139095040
      %v4001 = vshrl.u32 %v4000, 23
      %v4002 = vsub.s32 %v4001, 127
      %v4003 = vand.u32 2147483647, %v558
      %v4004 = vand.u32 %v4003, 8388607
      %v4005 = vor.u32 %v4004, 8388608
      %v4006 = vsub.s32 0, %v4005
      %v4007 = vadd.s32 %v4002, 1
      %vm4008 = vcmp.gt.s32.totalorder %v4007, 0
      %v4009 = vsel %vm4008, %v4007, 0
      %v4010 = vshrl.u32 %v4009, 5
      %v4011 = vand.u32 %v4009, 31
      %v4012 = vsub.s32 32, %v4011
      %v4013 = vshrl.u32 683565275, %v4012
      %v4014 = vshll.u32 683565275, %v4011
      %v4015 = vshrl.u32 2475754826, %v4012
      %v4016 = vor.u32 %v4014, %v4015
      %v4017 = vshll.u32 2475754826, %v4011
      %v4018 = vshrl.u32 2131351028, %v4012
      %v4019 = vor.u32 %v4017, %v4018
      %v4020 = vshll.u32 2131351028, %v4011
      %v4021 = vshrl.u32 2102212464, %v4012
      %v4022 = vor.u32 %v4020, %v4021
      %v4023 = vshll.u32 2102212464, %v4011
      %v4024 = vshrl.u32 920167782, %v4012
      %v4025 = vor.u32 %v4023, %v4024
      %v4026 = vshll.u32 920167782, %v4011
      %v4027 = vshrl.u32 1326507024, %v4012
      %v4028 = vor.u32 %v4026, %v4027
      %vm4029 = vcmp.lt.s32.totalorder %v4010, 1
      %vm4030 = vcmp.lt.s32.totalorder %v4010, 2
      %vm4031 = vcmp.lt.s32.totalorder %v4010, 3
      %vm4032 = vcmp.lt.s32.totalorder %v4010, 4
      %v4033 = vsel %vm4029, %v4013, %v4016
      %v4034 = vsel %vm4032, %v4022, 2102212464
      %v4035 = vsel %vm4031, %v4019, %v4034
      %v4036 = vsel %vm4030, %v4033, %v4035
      %v4037 = vsel %vm4029, %v4016, %v4019
      %v4038 = vsel %vm4032, %v4025, 920167782
      %v4039 = vsel %vm4031, %v4022, %v4038
      %v4040 = vsel %vm4030, %v4037, %v4039
      %v4041 = vsel %vm4029, %v4019, %v4022
      %v4042 = vsel %vm4032, %v4028, 1326507024
      %v4043 = vsel %vm4031, %v4025, %v4042
      %v4044 = vsel %vm4030, %v4041, %v4043
      %v4045 = vshll.u32 %v4005, 8
      %v4046 = vmul.u32.u64.compose %v4045, %v4044
      %v4047 = vextract.low.u32 %v4046
      %v4048 = vextract.high.u32 %v4046
      %v4049 = vmul.u32.u64.compose %v4045, %v4040
      %v4050 = vextract.low.u32 %v4049
      %v4051 = vextract.high.u32 %v4049
      %v4052 = vmul.u32 %v4045, %v4036
      %v4053 = vadd.s32 %v4048, %v4050
      %vm4054 = vc.u32 %v4048, %v4050
      %v4055 = vadd.s32 %v4051, 1
      %v4056 = vsel %vm4054, %v4055, %v4051
      %v4057 = vadd.s32 %v4052, %v4056
      %v4058 = vadd.s32 %v4057, 536870912
      %v4059 = vshrl.u32 %v4058, 30
      %v4060 = vshll.u32 %v4059, 30
      %v4061 = vsub.s32 %v4057, %v4060
      %vm4062 = vcmp.lt.s32.totalorder %v4061, 0
      %v4063 = vsub.s32 0, %v4061
      %v4064 = vsel %vm4062, %v4063, %v4061
      %v4065 = vclz %v4064
      %v4066 = vsub.s32 %v4065, 2
      %vm4067 = vcmp.gt.s32.totalorder 0, %v4066
      %v4068 = vsel %vm4067, 0, %v4066
      %v4069 = vsub.s32 32, %v4068
      %v4070 = vshll.u32 %v4061, %v4068
      %v4071 = vshrl.u32 %v4053, %v4069
      %v4072 = vor.u32 %v4070, %v4071
      %v4073 = vsub.s32 4294967266, %v4068
      %v4074 = vadd.s32 %v4073, 127
      %v4075 = vshll.u32 %v4074, 23
      %v4076 = vor.u32 4788187, %v4075
      %v4077 = vand.u32 2147483647, %v4076
      %v4079 = vcvt.s32.f32 %v4072
      %v4080 = vmul.f32 %v4079, %v4077
      %v4081 = vxor.u32 %v4080, 2147483648
      %v4082 = vsel %vm3999, %v4081, %v4080
      %v4083 = vsub.s32 4, %v4059
      %v4084 = vsel %vm3999, %v4083, %v4059
      %v4085 = vsel %vm3998, %v558, %v4082
      %v4086 = vsel %vm3998, 0, %v4084
      %v4087 = vcosq.f32.pop %v4085
      %v4088 = vsinq.f32.pop %v4085
      %vm4089 = vweird.f32 %v558
      %v4090 = vadd.s32 %v4086, 3
      %v4091 = vand.u32 %v4090, 3
      %vm4092 = vcmp.lt.s32.totalorder %v4091, 2
      %vm4093 = vcmp.eq.s32.totalorder %v4091, 0
      %v4094 = vxor.u32 %v4088, 2147483648
      %v4095 = vsel %vm4093, %v4087, %v4094
      %vm4096 = vcmp.eq.s32.totalorder %v4091, 2
      %v4097 = vxor.u32 %v4087, 2147483648
      %v4098 = vsel %vm4096, %v4097, %v4088
      %v4099 = vsel %vm4092, %v4095, %v4098
      %v4100 = vsel %vm4089, nan, %v4099
      %v4101 = vand.u32 2147483647, %v559
      %vm4102 = vcmp.le.f32.partialorder %v4101, 0.7853982
      %vm4103 = vcmp.lt.s32.totalorder %v559, 0
      %v4104 = vand.u32 %v559, 2139095040
      %v4105 = vshrl.u32 %v4104, 23
      %v4106 = vsub.s32 %v4105, 127
      %v4107 = vand.u32 2147483647, %v559
      %v4108 = vand.u32 %v4107, 8388607
      %v4109 = vor.u32 %v4108, 8388608
      %v4110 = vsub.s32 0, %v4109
      %v4111 = vadd.s32 %v4106, 1
      %vm4112 = vcmp.gt.s32.totalorder %v4111, 0
      %v4113 = vsel %vm4112, %v4111, 0
      %v4114 = vshrl.u32 %v4113, 5
      %v4115 = vand.u32 %v4113, 31
      %v4116 = vsub.s32 32, %v4115
      %v4117 = vshrl.u32 683565275, %v4116
      %v4118 = vshll.u32 683565275, %v4115
      %v4119 = vshrl.u32 2475754826, %v4116
      %v4120 = vor.u32 %v4118, %v4119
      %v4121 = vshll.u32 2475754826, %v4115
      %v4122 = vshrl.u32 2131351028, %v4116
      %v4123 = vor.u32 %v4121, %v4122
      %v4124 = vshll.u32 2131351028, %v4115
      %v4125 = vshrl.u32 2102212464, %v4116
      %v4126 = vor.u32 %v4124, %v4125
      %v4127 = vshll.u32 2102212464, %v4115
      %v4128 = vshrl.u32 920167782, %v4116
      %v4129 = vor.u32 %v4127, %v4128
      %v4130 = vshll.u32 920167782, %v4115
      %v4131 = vshrl.u32 1326507024, %v4116
      %v4132 = vor.u32 %v4130, %v4131
      %vm4133 = vcmp.lt.s32.totalorder %v4114, 1
      %vm4134 = vcmp.lt.s32.totalorder %v4114, 2
      %vm4135 = vcmp.lt.s32.totalorder %v4114, 3
      %vm4136 = vcmp.lt.s32.totalorder %v4114, 4
      %v4137 = vsel %vm4133, %v4117, %v4120
      %v4138 = vsel %vm4136, %v4126, 2102212464
      %v4139 = vsel %vm4135, %v4123, %v4138
      %v4140 = vsel %vm4134, %v4137, %v4139
      %v4141 = vsel %vm4133, %v4120, %v4123
      %v4142 = vsel %vm4136, %v4129, 920167782
      %v4143 = vsel %vm4135, %v4126, %v4142
      %v4144 = vsel %vm4134, %v4141, %v4143
      %v4145 = vsel %vm4133, %v4123, %v4126
      %v4146 = vsel %vm4136, %v4132, 1326507024
      %v4147 = vsel %vm4135, %v4129, %v4146
      %v4148 = vsel %vm4134, %v4145, %v4147
      %v4149 = vshll.u32 %v4109, 8
      %v4150 = vmul.u32.u64.compose %v4149, %v4148
      %v4151 = vextract.low.u32 %v4150
      %v4152 = vextract.high.u32 %v4150
      %v4153 = vmul.u32.u64.compose %v4149, %v4144
      %v4154 = vextract.low.u32 %v4153
      %v4155 = vextract.high.u32 %v4153
      %v4156 = vmul.u32 %v4149, %v4140
      %v4157 = vadd.s32 %v4152, %v4154
      %vm4158 = vc.u32 %v4152, %v4154
      %v4159 = vadd.s32 %v4155, 1
      %v4160 = vsel %vm4158, %v4159, %v4155
      %v4161 = vadd.s32 %v4156, %v4160
      %v4162 = vadd.s32 %v4161, 536870912
      %v4163 = vshrl.u32 %v4162, 30
      %v4164 = vshll.u32 %v4163, 30
      %v4165 = vsub.s32 %v4161, %v4164
      %vm4166 = vcmp.lt.s32.totalorder %v4165, 0
      %v4167 = vsub.s32 0, %v4165
      %v4168 = vsel %vm4166, %v4167, %v4165
      %v4169 = vclz %v4168
      %v4170 = vsub.s32 %v4169, 2
      %vm4171 = vcmp.gt.s32.totalorder 0, %v4170
      %v4172 = vsel %vm4171, 0, %v4170
      %v4173 = vsub.s32 32, %v4172
      %v4174 = vshll.u32 %v4165, %v4172
      %v4175 = vshrl.u32 %v4157, %v4173
      %v4176 = vor.u32 %v4174, %v4175
      %v4177 = vsub.s32 4294967266, %v4172
      %v4178 = vadd.s32 %v4177, 127
      %v4179 = vshll.u32 %v4178, 23
      %v4180 = vor.u32 4788187, %v4179
      %v4181 = vand.u32 2147483647, %v4180
      %v4183 = vcvt.s32.f32 %v4176
      %v4184 = vmul.f32 %v4183, %v4181
      %v4185 = vxor.u32 %v4184, 2147483648
      %v4186 = vsel %vm4103, %v4185, %v4184
      %v4187 = vsub.s32 4, %v4163
      %v4188 = vsel %vm4103, %v4187, %v4163
      %v4189 = vsel %vm4102, %v559, %v4186
      %v4190 = vsel %vm4102, 0, %v4188
      %v4191 = vcosq.f32.pop %v4189
      %v4192 = vsinq.f32.pop %v4189
      %vm4193 = vweird.f32 %v559
      %v4194 = vadd.s32 %v4190, 3
      %v4195 = vand.u32 %v4194, 3
      %vm4196 = vcmp.lt.s32.totalorder %v4195, 2
      %vm4197 = vcmp.eq.s32.totalorder %v4195, 0
      %v4198 = vxor.u32 %v4192, 2147483648
      %v4199 = vsel %vm4197, %v4191, %v4198
      %vm4200 = vcmp.eq.s32.totalorder %v4195, 2
      %v4201 = vxor.u32 %v4191, 2147483648
      %v4202 = vsel %vm4200, %v4201, %v4192
      %v4203 = vsel %vm4196, %v4199, %v4202
      %v4204 = vsel %vm4193, nan, %v4203
      %v4205 = vand.u32 2147483647, %v560
      %vm4206 = vcmp.le.f32.partialorder %v4205, 0.7853982
      %vm4207 = vcmp.lt.s32.totalorder %v560, 0
      %v4208 = vand.u32 %v560, 2139095040
      %v4209 = vshrl.u32 %v4208, 23
      %v4210 = vsub.s32 %v4209, 127
      %v4211 = vand.u32 2147483647, %v560
      %v4212 = vand.u32 %v4211, 8388607
      %v4213 = vor.u32 %v4212, 8388608
      %v4214 = vsub.s32 0, %v4213
      %v4215 = vadd.s32 %v4210, 1
      %vm4216 = vcmp.gt.s32.totalorder %v4215, 0
      %v4217 = vsel %vm4216, %v4215, 0
      %v4218 = vshrl.u32 %v4217, 5
      %v4219 = vand.u32 %v4217, 31
      %v4220 = vsub.s32 32, %v4219
      %v4221 = vshrl.u32 683565275, %v4220
      %v4222 = vshll.u32 683565275, %v4219
      %v4223 = vshrl.u32 2475754826, %v4220
      %v4224 = vor.u32 %v4222, %v4223
      %v4225 = vshll.u32 2475754826, %v4219
      %v4226 = vshrl.u32 2131351028, %v4220
      %v4227 = vor.u32 %v4225, %v4226
      %v4228 = vshll.u32 2131351028, %v4219
      %v4229 = vshrl.u32 2102212464, %v4220
      %v4230 = vor.u32 %v4228, %v4229
      %v4231 = vshll.u32 2102212464, %v4219
      %v4232 = vshrl.u32 920167782, %v4220
      %v4233 = vor.u32 %v4231, %v4232
      %v4234 = vshll.u32 920167782, %v4219
      %v4235 = vshrl.u32 1326507024, %v4220
      %v4236 = vor.u32 %v4234, %v4235
      %vm4237 = vcmp.lt.s32.totalorder %v4218, 1
      %vm4238 = vcmp.lt.s32.totalorder %v4218, 2
      %vm4239 = vcmp.lt.s32.totalorder %v4218, 3
      %vm4240 = vcmp.lt.s32.totalorder %v4218, 4
      %v4241 = vsel %vm4237, %v4221, %v4224
      %v4242 = vsel %vm4240, %v4230, 2102212464
      %v4243 = vsel %vm4239, %v4227, %v4242
      %v4244 = vsel %vm4238, %v4241, %v4243
      %v4245 = vsel %vm4237, %v4224, %v4227
      %v4246 = vsel %vm4240, %v4233, 920167782
      %v4247 = vsel %vm4239, %v4230, %v4246
      %v4248 = vsel %vm4238, %v4245, %v4247
      %v4249 = vsel %vm4237, %v4227, %v4230
      %v4250 = vsel %vm4240, %v4236, 1326507024
      %v4251 = vsel %vm4239, %v4233, %v4250
      %v4252 = vsel %vm4238, %v4249, %v4251
      %v4253 = vshll.u32 %v4213, 8
      %v4254 = vmul.u32.u64.compose %v4253, %v4252
      %v4255 = vextract.low.u32 %v4254
      %v4256 = vextract.high.u32 %v4254
      %v4257 = vmul.u32.u64.compose %v4253, %v4248
      %v4258 = vextract.low.u32 %v4257
      %v4259 = vextract.high.u32 %v4257
      %v4260 = vmul.u32 %v4253, %v4244
      %v4261 = vadd.s32 %v4256, %v4258
      %vm4262 = vc.u32 %v4256, %v4258
      %v4263 = vadd.s32 %v4259, 1
      %v4264 = vsel %vm4262, %v4263, %v4259
      %v4265 = vadd.s32 %v4260, %v4264
      %v4266 = vadd.s32 %v4265, 536870912
      %v4267 = vshrl.u32 %v4266, 30
      %v4268 = vshll.u32 %v4267, 30
      %v4269 = vsub.s32 %v4265, %v4268
      %vm4270 = vcmp.lt.s32.totalorder %v4269, 0
      %v4271 = vsub.s32 0, %v4269
      %v4272 = vsel %vm4270, %v4271, %v4269
      %v4273 = vclz %v4272
      %v4274 = vsub.s32 %v4273, 2
      %vm4275 = vcmp.gt.s32.totalorder 0, %v4274
      %v4276 = vsel %vm4275, 0, %v4274
      %v4277 = vsub.s32 32, %v4276
      %v4278 = vshll.u32 %v4269, %v4276
      %v4279 = vshrl.u32 %v4261, %v4277
      %v4280 = vor.u32 %v4278, %v4279
      %v4281 = vsub.s32 4294967266, %v4276
      %v4282 = vadd.s32 %v4281, 127
      %v4283 = vshll.u32 %v4282, 23
      %v4284 = vor.u32 4788187, %v4283
      %v4285 = vand.u32 2147483647, %v4284
      %v4287 = vcvt.s32.f32 %v4280
      %v4288 = vmul.f32 %v4287, %v4285
      %v4289 = vxor.u32 %v4288, 2147483648
      %v4290 = vsel %vm4207, %v4289, %v4288
      %v4291 = vsub.s32 4, %v4267
      %v4292 = vsel %vm4207, %v4291, %v4267
      %v4293 = vsel %vm4206, %v560, %v4290
      %v4294 = vsel %vm4206, 0, %v4292
      %v4295 = vcosq.f32.pop %v4293
      %v4296 = vsinq.f32.pop %v4293
      %vm4297 = vweird.f32 %v560
      %v4298 = vadd.s32 %v4294, 3
      %v4299 = vand.u32 %v4298, 3
      %vm4300 = vcmp.lt.s32.totalorder %v4299, 2
      %vm4301 = vcmp.eq.s32.totalorder %v4299, 0
      %v4302 = vxor.u32 %v4296, 2147483648
      %v4303 = vsel %vm4301, %v4295, %v4302
      %vm4304 = vcmp.eq.s32.totalorder %v4299, 2
      %v4305 = vxor.u32 %v4295, 2147483648
      %v4306 = vsel %vm4304, %v4305, %v4296
      %v4307 = vsel %vm4300, %v4303, %v4306
      %v4308 = vsel %vm4297, nan, %v4307
      %v4309 = vand.u32 2147483647, %v561
      %vm4310 = vcmp.le.f32.partialorder %v4309, 0.7853982
      %vm4311 = vcmp.lt.s32.totalorder %v561, 0
      %v4312 = vand.u32 %v561, 2139095040
      %v4313 = vshrl.u32 %v4312, 23
      %v4314 = vsub.s32 %v4313, 127
      %v4315 = vand.u32 2147483647, %v561
      %v4316 = vand.u32 %v4315, 8388607
      %v4317 = vor.u32 %v4316, 8388608
      %v4318 = vsub.s32 0, %v4317
      %v4319 = vadd.s32 %v4314, 1
      %vm4320 = vcmp.gt.s32.totalorder %v4319, 0
      %v4321 = vsel %vm4320, %v4319, 0
      %v4322 = vshrl.u32 %v4321, 5
      %v4323 = vand.u32 %v4321, 31
      %v4324 = vsub.s32 32, %v4323
      %v4325 = vshrl.u32 683565275, %v4324
      %v4326 = vshll.u32 683565275, %v4323
      %v4327 = vshrl.u32 2475754826, %v4324
      %v4328 = vor.u32 %v4326, %v4327
      %v4329 = vshll.u32 2475754826, %v4323
      %v4330 = vshrl.u32 2131351028, %v4324
      %v4331 = vor.u32 %v4329, %v4330
      %v4332 = vshll.u32 2131351028, %v4323
      %v4333 = vshrl.u32 2102212464, %v4324
      %v4334 = vor.u32 %v4332, %v4333
      %v4335 = vshll.u32 2102212464, %v4323
      %v4336 = vshrl.u32 920167782, %v4324
      %v4337 = vor.u32 %v4335, %v4336
      %v4338 = vshll.u32 920167782, %v4323
      %v4339 = vshrl.u32 1326507024, %v4324
      %v4340 = vor.u32 %v4338, %v4339
      %vm4341 = vcmp.lt.s32.totalorder %v4322, 1
      %vm4342 = vcmp.lt.s32.totalorder %v4322, 2
      %vm4343 = vcmp.lt.s32.totalorder %v4322, 3
      %vm4344 = vcmp.lt.s32.totalorder %v4322, 4
      %v4345 = vsel %vm4341, %v4325, %v4328
      %v4346 = vsel %vm4344, %v4334, 2102212464
      %v4347 = vsel %vm4343, %v4331, %v4346
      %v4348 = vsel %vm4342, %v4345, %v4347
      %v4349 = vsel %vm4341, %v4328, %v4331
      %v4350 = vsel %vm4344, %v4337, 920167782
      %v4351 = vsel %vm4343, %v4334, %v4350
      %v4352 = vsel %vm4342, %v4349, %v4351
      %v4353 = vsel %vm4341, %v4331, %v4334
      %v4354 = vsel %vm4344, %v4340, 1326507024
      %v4355 = vsel %vm4343, %v4337, %v4354
      %v4356 = vsel %vm4342, %v4353, %v4355
      %v4357 = vshll.u32 %v4317, 8
      %v4358 = vmul.u32.u64.compose %v4357, %v4356
      %v4359 = vextract.low.u32 %v4358
      %v4360 = vextract.high.u32 %v4358
      %v4361 = vmul.u32.u64.compose %v4357, %v4352
      %v4362 = vextract.low.u32 %v4361
      %v4363 = vextract.high.u32 %v4361
      %v4364 = vmul.u32 %v4357, %v4348
      %v4365 = vadd.s32 %v4360, %v4362
      %vm4366 = vc.u32 %v4360, %v4362
      %v4367 = vadd.s32 %v4363, 1
      %v4368 = vsel %vm4366, %v4367, %v4363
      %v4369 = vadd.s32 %v4364, %v4368
      %v4370 = vadd.s32 %v4369, 536870912
      %v4371 = vshrl.u32 %v4370, 30
      %v4372 = vshll.u32 %v4371, 30
      %v4373 = vsub.s32 %v4369, %v4372
      %vm4374 = vcmp.lt.s32.totalorder %v4373, 0
      %v4375 = vsub.s32 0, %v4373
      %v4376 = vsel %vm4374, %v4375, %v4373
      %v4377 = vclz %v4376
      %v4378 = vsub.s32 %v4377, 2
      %vm4379 = vcmp.gt.s32.totalorder 0, %v4378
      %v4380 = vsel %vm4379, 0, %v4378
      %v4381 = vsub.s32 32, %v4380
      %v4382 = vshll.u32 %v4373, %v4380
      %v4383 = vshrl.u32 %v4365, %v4381
      %v4384 = vor.u32 %v4382, %v4383
      %v4385 = vsub.s32 4294967266, %v4380
      %v4386 = vadd.s32 %v4385, 127
      %v4387 = vshll.u32 %v4386, 23
      %v4388 = vor.u32 4788187, %v4387
      %v4389 = vand.u32 2147483647, %v4388
      %v4391 = vcvt.s32.f32 %v4384
      %v4392 = vmul.f32 %v4391, %v4389
      %v4393 = vxor.u32 %v4392, 2147483648
      %v4394 = vsel %vm4311, %v4393, %v4392
      %v4395 = vsub.s32 4, %v4371
      %v4396 = vsel %vm4311, %v4395, %v4371
      %v4397 = vsel %vm4310, %v561, %v4394
      %v4398 = vsel %vm4310, 0, %v4396
      %v4399 = vcosq.f32.pop %v4397
      %v4400 = vsinq.f32.pop %v4397
      %vm4401 = vweird.f32 %v561
      %v4402 = vadd.s32 %v4398, 3
      %v4403 = vand.u32 %v4402, 3
      %vm4404 = vcmp.lt.s32.totalorder %v4403, 2
      %vm4405 = vcmp.eq.s32.totalorder %v4403, 0
      %v4406 = vxor.u32 %v4400, 2147483648
      %v4407 = vsel %vm4405, %v4399, %v4406
      %vm4408 = vcmp.eq.s32.totalorder %v4403, 2
      %v4409 = vxor.u32 %v4399, 2147483648
      %v4410 = vsel %vm4408, %v4409, %v4400
      %v4411 = vsel %vm4404, %v4407, %v4410
      %v4412 = vsel %vm4401, nan, %v4411
      %v4413 = vand.u32 2147483647, %v562
      %vm4414 = vcmp.le.f32.partialorder %v4413, 0.7853982
      %vm4415 = vcmp.lt.s32.totalorder %v562, 0
      %v4416 = vand.u32 %v562, 2139095040
      %v4417 = vshrl.u32 %v4416, 23
      %v4418 = vsub.s32 %v4417, 127
      %v4419 = vand.u32 2147483647, %v562
      %v4420 = vand.u32 %v4419, 8388607
      %v4421 = vor.u32 %v4420, 8388608
      %v4422 = vsub.s32 0, %v4421
      %v4423 = vadd.s32 %v4418, 1
      %vm4424 = vcmp.gt.s32.totalorder %v4423, 0
      %v4425 = vsel %vm4424, %v4423, 0
      %v4426 = vshrl.u32 %v4425, 5
      %v4427 = vand.u32 %v4425, 31
      %v4428 = vsub.s32 32, %v4427
      %v4429 = vshrl.u32 683565275, %v4428
      %v4430 = vshll.u32 683565275, %v4427
      %v4431 = vshrl.u32 2475754826, %v4428
      %v4432 = vor.u32 %v4430, %v4431
      %v4433 = vshll.u32 2475754826, %v4427
      %v4434 = vshrl.u32 2131351028, %v4428
      %v4435 = vor.u32 %v4433, %v4434
      %v4436 = vshll.u32 2131351028, %v4427
      %v4437 = vshrl.u32 2102212464, %v4428
      %v4438 = vor.u32 %v4436, %v4437
      %v4439 = vshll.u32 2102212464, %v4427
      %v4440 = vshrl.u32 920167782, %v4428
      %v4441 = vor.u32 %v4439, %v4440
      %v4442 = vshll.u32 920167782, %v4427
      %v4443 = vshrl.u32 1326507024, %v4428
      %v4444 = vor.u32 %v4442, %v4443
      %vm4445 = vcmp.lt.s32.totalorder %v4426, 1
      %vm4446 = vcmp.lt.s32.totalorder %v4426, 2
      %vm4447 = vcmp.lt.s32.totalorder %v4426, 3
      %vm4448 = vcmp.lt.s32.totalorder %v4426, 4
      %v4449 = vsel %vm4445, %v4429, %v4432
      %v4450 = vsel %vm4448, %v4438, 2102212464
      %v4451 = vsel %vm4447, %v4435, %v4450
      %v4452 = vsel %vm4446, %v4449, %v4451
      %v4453 = vsel %vm4445, %v4432, %v4435
      %v4454 = vsel %vm4448, %v4441, 920167782
      %v4455 = vsel %vm4447, %v4438, %v4454
      %v4456 = vsel %vm4446, %v4453, %v4455
      %v4457 = vsel %vm4445, %v4435, %v4438
      %v4458 = vsel %vm4448, %v4444, 1326507024
      %v4459 = vsel %vm4447, %v4441, %v4458
      %v4460 = vsel %vm4446, %v4457, %v4459
      %v4461 = vshll.u32 %v4421, 8
      %v4462 = vmul.u32.u64.compose %v4461, %v4460
      %v4463 = vextract.low.u32 %v4462
      %v4464 = vextract.high.u32 %v4462
      %v4465 = vmul.u32.u64.compose %v4461, %v4456
      %v4466 = vextract.low.u32 %v4465
      %v4467 = vextract.high.u32 %v4465
      %v4468 = vmul.u32 %v4461, %v4452
      %v4469 = vadd.s32 %v4464, %v4466
      %vm4470 = vc.u32 %v4464, %v4466
      %v4471 = vadd.s32 %v4467, 1
      %v4472 = vsel %vm4470, %v4471, %v4467
      %v4473 = vadd.s32 %v4468, %v4472
      %v4474 = vadd.s32 %v4473, 536870912
      %v4475 = vshrl.u32 %v4474, 30
      %v4476 = vshll.u32 %v4475, 30
      %v4477 = vsub.s32 %v4473, %v4476
      %vm4478 = vcmp.lt.s32.totalorder %v4477, 0
      %v4479 = vsub.s32 0, %v4477
      %v4480 = vsel %vm4478, %v4479, %v4477
      %v4481 = vclz %v4480
      %v4482 = vsub.s32 %v4481, 2
      %vm4483 = vcmp.gt.s32.totalorder 0, %v4482
      %v4484 = vsel %vm4483, 0, %v4482
      %v4485 = vsub.s32 32, %v4484
      %v4486 = vshll.u32 %v4477, %v4484
      %v4487 = vshrl.u32 %v4469, %v4485
      %v4488 = vor.u32 %v4486, %v4487
      %v4489 = vsub.s32 4294967266, %v4484
      %v4490 = vadd.s32 %v4489, 127
      %v4491 = vshll.u32 %v4490, 23
      %v4492 = vor.u32 4788187, %v4491
      %v4493 = vand.u32 2147483647, %v4492
      %v4495 = vcvt.s32.f32 %v4488
      %v4496 = vmul.f32 %v4495, %v4493
      %v4497 = vxor.u32 %v4496, 2147483648
      %v4498 = vsel %vm4415, %v4497, %v4496
      %v4499 = vsub.s32 4, %v4475
      %v4500 = vsel %vm4415, %v4499, %v4475
      %v4501 = vsel %vm4414, %v562, %v4498
      %v4502 = vsel %vm4414, 0, %v4500
      %v4503 = vcosq.f32.pop %v4501
      %v4504 = vsinq.f32.pop %v4501
      %vm4505 = vweird.f32 %v562
      %v4506 = vadd.s32 %v4502, 3
      %v4507 = vand.u32 %v4506, 3
      %vm4508 = vcmp.lt.s32.totalorder %v4507, 2
      %vm4509 = vcmp.eq.s32.totalorder %v4507, 0
      %v4510 = vxor.u32 %v4504, 2147483648
      %v4511 = vsel %vm4509, %v4503, %v4510
      %vm4512 = vcmp.eq.s32.totalorder %v4507, 2
      %v4513 = vxor.u32 %v4503, 2147483648
      %v4514 = vsel %vm4512, %v4513, %v4504
      %v4515 = vsel %vm4508, %v4511, %v4514
      %v4516 = vsel %vm4505, nan, %v4515
      %v4517 = vand.u32 2147483647, %v563
      %vm4518 = vcmp.le.f32.partialorder %v4517, 0.7853982
      %vm4519 = vcmp.lt.s32.totalorder %v563, 0
      %v4520 = vand.u32 %v563, 2139095040
      %v4521 = vshrl.u32 %v4520, 23
      %v4522 = vsub.s32 %v4521, 127
      %v4523 = vand.u32 2147483647, %v563
      %v4524 = vand.u32 %v4523, 8388607
      %v4525 = vor.u32 %v4524, 8388608
      %v4526 = vsub.s32 0, %v4525
      %v4527 = vadd.s32 %v4522, 1
      %vm4528 = vcmp.gt.s32.totalorder %v4527, 0
      %v4529 = vsel %vm4528, %v4527, 0
      %v4530 = vshrl.u32 %v4529, 5
      %v4531 = vand.u32 %v4529, 31
      %v4532 = vsub.s32 32, %v4531
      %v4533 = vshrl.u32 683565275, %v4532
      %v4534 = vshll.u32 683565275, %v4531
      %v4535 = vshrl.u32 2475754826, %v4532
      %v4536 = vor.u32 %v4534, %v4535
      %v4537 = vshll.u32 2475754826, %v4531
      %v4538 = vshrl.u32 2131351028, %v4532
      %v4539 = vor.u32 %v4537, %v4538
      %v4540 = vshll.u32 2131351028, %v4531
      %v4541 = vshrl.u32 2102212464, %v4532
      %v4542 = vor.u32 %v4540, %v4541
      %v4543 = vshll.u32 2102212464, %v4531
      %v4544 = vshrl.u32 920167782, %v4532
      %v4545 = vor.u32 %v4543, %v4544
      %v4546 = vshll.u32 920167782, %v4531
      %v4547 = vshrl.u32 1326507024, %v4532
      %v4548 = vor.u32 %v4546, %v4547
      %vm4549 = vcmp.lt.s32.totalorder %v4530, 1
      %vm4550 = vcmp.lt.s32.totalorder %v4530, 2
      %vm4551 = vcmp.lt.s32.totalorder %v4530, 3
      %vm4552 = vcmp.lt.s32.totalorder %v4530, 4
      %v4553 = vsel %vm4549, %v4533, %v4536
      %v4554 = vsel %vm4552, %v4542, 2102212464
      %v4555 = vsel %vm4551, %v4539, %v4554
      %v4556 = vsel %vm4550, %v4553, %v4555
      %v4557 = vsel %vm4549, %v4536, %v4539
      %v4558 = vsel %vm4552, %v4545, 920167782
      %v4559 = vsel %vm4551, %v4542, %v4558
      %v4560 = vsel %vm4550, %v4557, %v4559
      %v4561 = vsel %vm4549, %v4539, %v4542
      %v4562 = vsel %vm4552, %v4548, 1326507024
      %v4563 = vsel %vm4551, %v4545, %v4562
      %v4564 = vsel %vm4550, %v4561, %v4563
      %v4565 = vshll.u32 %v4525, 8
      %v4566 = vmul.u32.u64.compose %v4565, %v4564
      %v4567 = vextract.low.u32 %v4566
      %v4568 = vextract.high.u32 %v4566
      %v4569 = vmul.u32.u64.compose %v4565, %v4560
      %v4570 = vextract.low.u32 %v4569
      %v4571 = vextract.high.u32 %v4569
      %v4572 = vmul.u32 %v4565, %v4556
      %v4573 = vadd.s32 %v4568, %v4570
      %vm4574 = vc.u32 %v4568, %v4570
      %v4575 = vadd.s32 %v4571, 1
      %v4576 = vsel %vm4574, %v4575, %v4571
      %v4577 = vadd.s32 %v4572, %v4576
      %v4578 = vadd.s32 %v4577, 536870912
      %v4579 = vshrl.u32 %v4578, 30
      %v4580 = vshll.u32 %v4579, 30
      %v4581 = vsub.s32 %v4577, %v4580
      %vm4582 = vcmp.lt.s32.totalorder %v4581, 0
      %v4583 = vsub.s32 0, %v4581
      %v4584 = vsel %vm4582, %v4583, %v4581
      %v4585 = vclz %v4584
      %v4586 = vsub.s32 %v4585, 2
      %vm4587 = vcmp.gt.s32.totalorder 0, %v4586
      %v4588 = vsel %vm4587, 0, %v4586
      %v4589 = vsub.s32 32, %v4588
      %v4590 = vshll.u32 %v4581, %v4588
      %v4591 = vshrl.u32 %v4573, %v4589
      %v4592 = vor.u32 %v4590, %v4591
      %v4593 = vsub.s32 4294967266, %v4588
      %v4594 = vadd.s32 %v4593, 127
      %v4595 = vshll.u32 %v4594, 23
      %v4596 = vor.u32 4788187, %v4595
      %v4597 = vand.u32 2147483647, %v4596
      %v4599 = vcvt.s32.f32 %v4592
      %v4600 = vmul.f32 %v4599, %v4597
      %v4601 = vxor.u32 %v4600, 2147483648
      %v4602 = vsel %vm4519, %v4601, %v4600
      %v4603 = vsub.s32 4, %v4579
      %v4604 = vsel %vm4519, %v4603, %v4579
      %v4605 = vsel %vm4518, %v563, %v4602
      %v4606 = vsel %vm4518, 0, %v4604
      %v4607 = vcosq.f32.pop %v4605
      %v4608 = vsinq.f32.pop %v4605
      %vm4609 = vweird.f32 %v563
      %v4610 = vadd.s32 %v4606, 3
      %v4611 = vand.u32 %v4610, 3
      %vm4612 = vcmp.lt.s32.totalorder %v4611, 2
      %vm4613 = vcmp.eq.s32.totalorder %v4611, 0
      %v4614 = vxor.u32 %v4608, 2147483648
      %v4615 = vsel %vm4613, %v4607, %v4614
      %vm4616 = vcmp.eq.s32.totalorder %v4611, 2
      %v4617 = vxor.u32 %v4607, 2147483648
      %v4618 = vsel %vm4616, %v4617, %v4608
      %v4619 = vsel %vm4612, %v4615, %v4618
      %v4620 = vsel %vm4609, nan, %v4619
      %v4621 = vand.u32 2147483647, %v564
      %vm4622 = vcmp.le.f32.partialorder %v4621, 0.7853982
      %vm4623 = vcmp.lt.s32.totalorder %v564, 0
      %v4624 = vand.u32 %v564, 2139095040
      %v4625 = vshrl.u32 %v4624, 23
      %v4626 = vsub.s32 %v4625, 127
      %v4627 = vand.u32 2147483647, %v564
      %v4628 = vand.u32 %v4627, 8388607
      %v4629 = vor.u32 %v4628, 8388608
      %v4630 = vsub.s32 0, %v4629
      %v4631 = vadd.s32 %v4626, 1
      %vm4632 = vcmp.gt.s32.totalorder %v4631, 0
      %v4633 = vsel %vm4632, %v4631, 0
      %v4634 = vshrl.u32 %v4633, 5
      %v4635 = vand.u32 %v4633, 31
      %v4636 = vsub.s32 32, %v4635
      %v4637 = vshrl.u32 683565275, %v4636
      %v4638 = vshll.u32 683565275, %v4635
      %v4639 = vshrl.u32 2475754826, %v4636
      %v4640 = vor.u32 %v4638, %v4639
      %v4641 = vshll.u32 2475754826, %v4635
      %v4642 = vshrl.u32 2131351028, %v4636
      %v4643 = vor.u32 %v4641, %v4642
      %v4644 = vshll.u32 2131351028, %v4635
      %v4645 = vshrl.u32 2102212464, %v4636
      %v4646 = vor.u32 %v4644, %v4645
      %v4647 = vshll.u32 2102212464, %v4635
      %v4648 = vshrl.u32 920167782, %v4636
      %v4649 = vor.u32 %v4647, %v4648
      %v4650 = vshll.u32 920167782, %v4635
      %v4651 = vshrl.u32 1326507024, %v4636
      %v4652 = vor.u32 %v4650, %v4651
      %vm4653 = vcmp.lt.s32.totalorder %v4634, 1
      %vm4654 = vcmp.lt.s32.totalorder %v4634, 2
      %vm4655 = vcmp.lt.s32.totalorder %v4634, 3
      %vm4656 = vcmp.lt.s32.totalorder %v4634, 4
      %v4657 = vsel %vm4653, %v4637, %v4640
      %v4658 = vsel %vm4656, %v4646, 2102212464
      %v4659 = vsel %vm4655, %v4643, %v4658
      %v4660 = vsel %vm4654, %v4657, %v4659
      %v4661 = vsel %vm4653, %v4640, %v4643
      %v4662 = vsel %vm4656, %v4649, 920167782
      %v4663 = vsel %vm4655, %v4646, %v4662
      %v4664 = vsel %vm4654, %v4661, %v4663
      %v4665 = vsel %vm4653, %v4643, %v4646
      %v4666 = vsel %vm4656, %v4652, 1326507024
      %v4667 = vsel %vm4655, %v4649, %v4666
      %v4668 = vsel %vm4654, %v4665, %v4667
      %v4669 = vshll.u32 %v4629, 8
      %v4670 = vmul.u32.u64.compose %v4669, %v4668
      %v4671 = vextract.low.u32 %v4670
      %v4672 = vextract.high.u32 %v4670
      %v4673 = vmul.u32.u64.compose %v4669, %v4664
      %v4674 = vextract.low.u32 %v4673
      %v4675 = vextract.high.u32 %v4673
      %v4676 = vmul.u32 %v4669, %v4660
      %v4677 = vadd.s32 %v4672, %v4674
      %vm4678 = vc.u32 %v4672, %v4674
      %v4679 = vadd.s32 %v4675, 1
      %v4680 = vsel %vm4678, %v4679, %v4675
      %v4681 = vadd.s32 %v4676, %v4680
      %v4682 = vadd.s32 %v4681, 536870912
      %v4683 = vshrl.u32 %v4682, 30
      %v4684 = vshll.u32 %v4683, 30
      %v4685 = vsub.s32 %v4681, %v4684
      %vm4686 = vcmp.lt.s32.totalorder %v4685, 0
      %v4687 = vsub.s32 0, %v4685
      %v4688 = vsel %vm4686, %v4687, %v4685
      %v4689 = vclz %v4688
      %v4690 = vsub.s32 %v4689, 2
      %vm4691 = vcmp.gt.s32.totalorder 0, %v4690
      %v4692 = vsel %vm4691, 0, %v4690
      %v4693 = vsub.s32 32, %v4692
      %v4694 = vshll.u32 %v4685, %v4692
      %v4695 = vshrl.u32 %v4677, %v4693
      %v4696 = vor.u32 %v4694, %v4695
      %v4697 = vsub.s32 4294967266, %v4692
      %v4698 = vadd.s32 %v4697, 127
      %v4699 = vshll.u32 %v4698, 23
      %v4700 = vor.u32 4788187, %v4699
      %v4701 = vand.u32 2147483647, %v4700
      %v4703 = vcvt.s32.f32 %v4696
      %v4704 = vmul.f32 %v4703, %v4701
      %v4705 = vxor.u32 %v4704, 2147483648
      %v4706 = vsel %vm4623, %v4705, %v4704
      %v4707 = vsub.s32 4, %v4683
      %v4708 = vsel %vm4623, %v4707, %v4683
      %v4709 = vsel %vm4622, %v564, %v4706
      %v4710 = vsel %vm4622, 0, %v4708
      %v4711 = vcosq.f32.pop %v4709
      %v4712 = vsinq.f32.pop %v4709
      %vm4713 = vweird.f32 %v564
      %v4714 = vadd.s32 %v4710, 3
      %v4715 = vand.u32 %v4714, 3
      %vm4716 = vcmp.lt.s32.totalorder %v4715, 2
      %vm4717 = vcmp.eq.s32.totalorder %v4715, 0
      %v4718 = vxor.u32 %v4712, 2147483648
      %v4719 = vsel %vm4717, %v4711, %v4718
      %vm4720 = vcmp.eq.s32.totalorder %v4715, 2
      %v4721 = vxor.u32 %v4711, 2147483648
      %v4722 = vsel %vm4720, %v4721, %v4712
      %v4723 = vsel %vm4716, %v4719, %v4722
      %v4724 = vsel %vm4713, nan, %v4723
      %v4725 = vld [vmem:[%s3] sm:$0xf]
      %v4726 = vld [vmem:[%s3 + $0x4] sm:$0xf]
      %v4727 = vld [vmem:[%s3 + $0x8] sm:$0xf]
      %v4728 = vld [vmem:[%s3 + $0xc] sm:$0xf]
      %v4729 = vld [vmem:[%s3 + $0x10] sm:$0xf]
      %v4730 = vpack.c.bf16 %v1500, %v668
      %v4731 = vpack.c.bf16 %v1604, %v772
      %v4732 = vpack.c.bf16 %v1708, %v876
      %v4733 = vpack.c.bf16 %v1812, %v980
      %v4734 = vpack.c.bf16 %v1916, %v1084
      %v4735 = vpack.c.bf16 %v2020, %v1188
      %v4736 = vpack.c.bf16 %v2124, %v1292
      %v4737 = vpack.c.bf16 %v2228, %v1396
      %v4738 = vpack.c.bf16 %v3164, %v2332
      %v4739 = vpack.c.bf16 %v3268, %v2436
      %v4740 = vpack.c.bf16 %v3372, %v2540
      %v4741 = vpack.c.bf16 %v3476, %v2644
      %v4742 = vpack.c.bf16 %v3580, %v2748
      %v4743 = vpack.c.bf16 %v3684, %v2852
      %v4744 = vpack.c.bf16 %v3788, %v2956
      %v4745 = vpack.c.bf16 %v3892, %v3060
      %v4746 = vpack.c.bf16 %v3996, %v3996
      %v4747 = vpack.c.bf16 %v4100, %v4100
      %v4748 = vpack.c.bf16 %v4204, %v4204
      %v4749 = vpack.c.bf16 %v4308, %v4308
      %v4750 = vpack.c.bf16 %v4412, %v4412
      %v4751 = vpack.c.bf16 %v4516, %v4516
      %v4752 = vpack.c.bf16 %v4620, %v4620
      %v4753 = vpack.c.bf16 %v4724, %v4724
      %v4754 = vld [vmem:[%s4] sm:$0xff]
      %v4755 = vld [vmem:[%s4 + $0x8] sm:$0xff]
      %v4756 = vld [vmem:[%s4 + $0x10] sm:$0xff]
      %v4757 = vld [vmem:[%s4 + $0x18] sm:$0xff]
      %v4758 = vld [vmem:[%s4 + $0x20] sm:$0xff]
      %4760 = vset.pattern.permute.xlu0 0
      %4761 = vperm.xlu0 %4760, %v4754
      %v4762 = vpop.permute.xlu0 %4761
      %4765 = vset.pattern.permute.xlu0 0
      %4766 = vperm.xlu0 %4765, %v4755
      %v4767 = vpop.permute.xlu0 %4766
      %4770 = vset.pattern.permute.xlu0 0
      %4771 = vperm.xlu0 %4770, %v4756
      %v4772 = vpop.permute.xlu0 %4771
      %4775 = vset.pattern.permute.xlu0 0
      %4776 = vperm.xlu0 %4775, %v4757
      %v4777 = vpop.permute.xlu0 %4776
      %4780 = vset.pattern.permute.xlu0 0
      %4781 = vperm.xlu0 %4780, %v4758
      %v4782 = vpop.permute.xlu0 %4781
      %v4789 = vunpack.c.l.b16 %v4725
      %v4790 = vunpack.c.l.b16 %v4726
      %v4791 = vunpack.c.l.b16 %v4727
      %v4792 = vunpack.c.l.b16 %v4728
      %v4793 = vunpack.c.l.b16 %v4729
      %v4794 = vpack.c.b16 %v4790, %v4789
      %v4795 = vpack.c.b16 %v4792, %v4791
      %v4796 = vpack.c.b16 %v4793, %v4793
      %vm4797 = vcmask 326656
      %v4799 = vsel %vm4797, %v4794, 0
      %v4802 = vsel %vm4797, %v4795, 0
      %v4805 = vsel %vm4797, %v4796, 0
      %vm4807 = vcmask 1043456
      %v4809 = vsel %vm4807, %v4746, 0
      %v4812 = vsel %vm4807, %v4747, 0
      %v4815 = vsel %vm4807, %v4748, 0
      %v4818 = vsel %vm4807, %v4749, 0
      %v4821 = vsel %vm4807, %v4750, 0
      %v4824 = vsel %vm4807, %v4751, 0
      %v4827 = vsel %vm4807, %v4752, 0
      %v4830 = vsel %vm4807, %v4753, 0
      %4832 = vmatprep.subr.bf16.mxu0 %v4731
      %4833 = vmatpush1.bf16.msra.mxu0 %v4730
      %4834 = vmatprep.subr.bf16.mxu0 %v4739
      %4835 = vmatpush1.bf16.msra.mxu0 %v4738
      %4836 = vmatprep.subr.bf16.mxu0 %v4812
      %4837 = vmatpush1.bf16.msra.mxu0 %v4809
      %4838 = vmatprep.subr.bf16.mxu0 0
      %4839 = vmatpush1.bf16.msra.mxu0 0
      %4840 = vmatprep.subr.bf16.mxu0 0
      %4841 = vmatpush1.bf16.msra.mxu0 0
      %4842 = vmatprep.subr.bf16.mxu0 0
      %4843 = vmatpush1.bf16.msra.mxu0 0
      %4844 = vmatprep.subr.bf16.mxu0 0
      %4845 = vmatpush1.bf16.msra.mxu0 0
      %4846 = vmatprep.subr.bf16.mxu0 0
      %4847 = vmatpush1.bf16.msra.mxu0 0
      %4848 = vmatprep.subr.bf16.mxu0 0
      %4849 = vmatpush1.bf16.msra.mxu0 0
      %4850 = vmatprep.subr.bf16.mxu0 0
      %4851 = vmatpush1.bf16.msra.mxu0 0
      %4852 = vmatprep.subr.bf16.mxu0 0
      %4853 = vmatpush1.bf16.msra.mxu0 0
      %4854 = vmatprep.subr.bf16.mxu0 0
      %4855 = vmatpush1.bf16.msra.mxu0 0
      %4856 = vmatprep.subr.bf16.mxu0 0
      %4857 = vmatpush1.bf16.msra.mxu0 0
      %4858 = vmatprep.subr.bf16.mxu0 0
      %4859 = vmatpush1.bf16.msra.mxu0 0
      %4860 = vmatprep.subr.bf16.mxu0 0
      %4861 = vmatpush1.bf16.msra.mxu0 0
      %4862 = vmatprep.subr.bf16.mxu0 0
      %4863 = vmatpush1.bf16.msra.mxu0 0
      %4864 = vmatprep.mubr.bf16.mxu0 0
      %4865 = vmatmul.mubr.bf16.gmra.mrb[0].mxu0 %v4799
      %v4866 = vpop.f32.mrb[0].mxu0
      %v4867 = vadd.f32 %v4762, %v4866
      %v4868 = vpop.f32.mrb[0].mxu0
      %v4869 = vadd.f32 %v4762, %v4868
      %v4870 = vpop.f32.mrb[0].mxu0
      %v4871 = vadd.f32 %v4767, %v4870
      %v4872 = vpop.f32.mrb[0].mxu0
      %v4873 = vadd.f32 %v4767, %v4872
      %4874 = vmatprep.mubr.bf16.mxu0 0
      %4875 = vmatmul.mubr.bf16.gmra.mrb[0].mxu0 %v4802
      %v4876 = vpop.f32.mrb[0].mxu0
      %v4877 = vadd.f32 %v4772, %v4876
      %v4878 = vpop.f32.mrb[0].mxu0
      %v4879 = vadd.f32 %v4772, %v4878
      %v4880 = vpop.f32.mrb[0].mxu0
      %v4881 = vadd.f32 %v4777, %v4880
      %v4882 = vpop.f32.mrb[0].mxu0
      %v4883 = vadd.f32 %v4777, %v4882
      %4884 = vmatprep.mubr.bf16.mxu0 0
      %4885 = vmatmul.mubr.bf16.gmra.mrb[0].mxu0 %v4805
      %v4886 = vpop.f32.mrb[0].mxu0
      %v4887 = vadd.f32 %v4782, %v4886
      %v4888 = vpop.f32.mrb[0].mxu0
      %v4889 = vadd.f32 %v4782, %v4888
      %v4890 = vpop.f32.mrb[0].mxu0
      %v4891 = vpop.f32.mrb[0].mxu0
      %4892 = vdwg.mxu0
      %4893 = vmatprep.subr.bf16.mxu0 %v4733
      %4894 = vmatpush1.bf16.msra.mxu0 %v4732
      %4895 = vmatprep.subr.bf16.mxu0 %v4741
      %4896 = vmatpush1.bf16.msra.mxu0 %v4740
      %4897 = vmatprep.subr.bf16.mxu0 %v4818
      %4898 = vmatpush1.bf16.msra.mxu0 %v4815
      %4899 = vmatprep.subr.bf16.mxu0 0
      %4900 = vmatpush1.bf16.msra.mxu0 0
      %4901 = vmatprep.subr.bf16.mxu0 0
      %4902 = vmatpush1.bf16.msra.mxu0 0
      %4903 = vmatprep.subr.bf16.mxu0 0
      %4904 = vmatpush1.bf16.msra.mxu0 0
      %4905 = vmatprep.subr.bf16.mxu0 0
      %4906 = vmatpush1.bf16.msra.mxu0 0
      %4907 = vmatprep.subr.bf16.mxu0 0
      %4908 = vmatpush1.bf16.msra.mxu0 0
      %4909 = vmatprep.subr.bf16.mxu0 0
      %4910 = vmatpush1.bf16.msra.mxu0 0
      %4911 = vmatprep.subr.bf16.mxu0 0
      %4912 = vmatpush1.bf16.msra.mxu0 0
      %4913 = vmatprep.subr.bf16.mxu0 0
      %4914 = vmatpush1.bf16.msra.mxu0 0
      %4915 = vmatprep.subr.bf16.mxu0 0
      %4916 = vmatpush1.bf16.msra.mxu0 0
      %4917 = vmatprep.subr.bf16.mxu0 0
      %4918 = vmatpush1.bf16.msra.mxu0 0
      %4919 = vmatprep.subr.bf16.mxu0 0
      %4920 = vmatpush1.bf16.msra.mxu0 0
      %4921 = vmatprep.subr.bf16.mxu0 0
      %4922 = vmatpush1.bf16.msra.mxu0 0
      %4923 = vmatprep.subr.bf16.mxu0 0
      %4924 = vmatpush1.bf16.msra.mxu0 0
      %4925 = vmatprep.mubr.bf16.mxu0 0
      %4926 = vmatmul.mubr.bf16.gmra.mrb[0].mxu0 %v4799
      %v4927 = vpop.f32.mrb[0].mxu0
      %v4928 = vadd.f32 %v4762, %v4927
      %v4929 = vpop.f32.mrb[0].mxu0
      %v4930 = vadd.f32 %v4762, %v4929
      %v4931 = vpop.f32.mrb[0].mxu0
      %v4932 = vadd.f32 %v4767, %v4931
      %v4933 = vpop.f32.mrb[0].mxu0
      %v4934 = vadd.f32 %v4767, %v4933
      %4935 = vmatprep.mubr.bf16.mxu0 0
      %4936 = vmatmul.mubr.bf16.gmra.mrb[0].mxu0 %v4802
      %v4937 = vpop.f32.mrb[0].mxu0
      %v4938 = vadd.f32 %v4772, %v4937
      %v4939 = vpop.f32.mrb[0].mxu0
      %v4940 = vadd.f32 %v4772, %v4939
      %v4941 = vpop.f32.mrb[0].mxu0
      %v4942 = vadd.f32 %v4777, %v4941
      %v4943 = vpop.f32.mrb[0].mxu0
      %v4944 = vadd.f32 %v4777, %v4943
      %4945 = vmatprep.mubr.bf16.mxu0 0
      %4946 = vmatmul.mubr.bf16.gmra.mrb[0].mxu0 %v4805
      %v4947 = vpop.f32.mrb[0].mxu0
      %v4948 = vadd.f32 %v4782, %v4947
      %v4949 = vpop.f32.mrb[0].mxu0
      %v4950 = vadd.f32 %v4782, %v4949
      %v4951 = vpop.f32.mrb[0].mxu0
      %v4952 = vpop.f32.mrb[0].mxu0
      %4953 = vdwg.mxu0
      %4954 = vmatprep.subr.bf16.mxu0 %v4735
      %4955 = vmatpush1.bf16.msra.mxu0 %v4734
      %4956 = vmatprep.subr.bf16.mxu0 %v4743
      %4957 = vmatpush1.bf16.msra.mxu0 %v4742
      %4958 = vmatprep.subr.bf16.mxu0 %v4824
      %4959 = vmatpush1.bf16.msra.mxu0 %v4821
      %4960 = vmatprep.subr.bf16.mxu0 0
      %4961 = vmatpush1.bf16.msra.mxu0 0
      %4962 = vmatprep.subr.bf16.mxu0 0
      %4963 = vmatpush1.bf16.msra.mxu0 0
      %4964 = vmatprep.subr.bf16.mxu0 0
      %4965 = vmatpush1.bf16.msra.mxu0 0
      %4966 = vmatprep.subr.bf16.mxu0 0
      %4967 = vmatpush1.bf16.msra.mxu0 0
      %4968 = vmatprep.subr.bf16.mxu0 0
      %4969 = vmatpush1.bf16.msra.mxu0 0
      %4970 = vmatprep.subr.bf16.mxu0 0
      %4971 = vmatpush1.bf16.msra.mxu0 0
      %4972 = vmatprep.subr.bf16.mxu0 0
      %4973 = vmatpush1.bf16.msra.mxu0 0
      %4974 = vmatprep.subr.bf16.mxu0 0
      %4975 = vmatpush1.bf16.msra.mxu0 0
      %4976 = vmatprep.subr.bf16.mxu0 0
      %4977 = vmatpush1.bf16.msra.mxu0 0
      %4978 = vmatprep.subr.bf16.mxu0 0
      %4979 = vmatpush1.bf16.msra.mxu0 0
      %4980 = vmatprep.subr.bf16.mxu0 0
      %4981 = vmatpush1.bf16.msra.mxu0 0
      %4982 = vmatprep.subr.bf16.mxu0 0
      %4983 = vmatpush1.bf16.msra.mxu0 0
      %4984 = vmatprep.subr.bf16.mxu0 0
      %4985 = vmatpush1.bf16.msra.mxu0 0
      %4986 = vmatprep.mubr.bf16.mxu0 0
      %4987 = vmatmul.mubr.bf16.gmra.mrb[0].mxu0 %v4799
      %v4988 = vpop.f32.mrb[0].mxu0
      %v4989 = vadd.f32 %v4762, %v4988
      %v4990 = vpop.f32.mrb[0].mxu0
      %v4991 = vadd.f32 %v4762, %v4990
      %v4992 = vpop.f32.mrb[0].mxu0
      %v4993 = vadd.f32 %v4767, %v4992
      %v4994 = vpop.f32.mrb[0].mxu0
      %v4995 = vadd.f32 %v4767, %v4994
      %4996 = vmatprep.mubr.bf16.mxu0 0
      %4997 = vmatmul.mubr.bf16.gmra.mrb[0].mxu0 %v4802
      %v4998 = vpop.f32.mrb[0].mxu0
      %v4999 = vadd.f32 %v4772, %v4998
      %v5000 = vpop.f32.mrb[0].mxu0
      %v5001 = vadd.f32 %v4772, %v5000
      %v5002 = vpop.f32.mrb[0].mxu0
      %v5003 = vadd.f32 %v4777, %v5002
      %v5004 = vpop.f32.mrb[0].mxu0
      %v5005 = vadd.f32 %v4777, %v5004
      %5006 = vmatprep.mubr.bf16.mxu0 0
      %5007 = vmatmul.mubr.bf16.gmra.mrb[0].mxu0 %v4805
      %v5008 = vpop.f32.mrb[0].mxu0
      %v5009 = vadd.f32 %v4782, %v5008
      %v5010 = vpop.f32.mrb[0].mxu0
      %v5011 = vadd.f32 %v4782, %v5010
      %v5012 = vpop.f32.mrb[0].mxu0
      %v5013 = vpop.f32.mrb[0].mxu0
      %5014 = vdwg.mxu0
      %5015 = vmatprep.subr.bf16.mxu0 %v4737
      %5016 = vmatpush1.bf16.msra.mxu0 %v4736
      %5017 = vmatprep.subr.bf16.mxu0 %v4745
      %5018 = vmatpush1.bf16.msra.mxu0 %v4744
      %5019 = vmatprep.subr.bf16.mxu0 %v4830
      %5020 = vmatpush1.bf16.msra.mxu0 %v4827
      %5021 = vmatprep.subr.bf16.mxu0 0
      %5022 = vmatpush1.bf16.msra.mxu0 0
      %5023 = vmatprep.subr.bf16.mxu0 0
      %5024 = vmatpush1.bf16.msra.mxu0 0
      %5025 = vmatprep.subr.bf16.mxu0 0
      %5026 = vmatpush1.bf16.msra.mxu0 0
      %5027 = vmatprep.subr.bf16.mxu0 0
      %5028 = vmatpush1.bf16.msra.mxu0 0
      %5029 = vmatprep.subr.bf16.mxu0 0
      %5030 = vmatpush1.bf16.msra.mxu0 0
      %5031 = vmatprep.subr.bf16.mxu0 0
      %5032 = vmatpush1.bf16.msra.mxu0 0
      %5033 = vmatprep.subr.bf16.mxu0 0
      %5034 = vmatpush1.bf16.msra.mxu0 0
      %5035 = vmatprep.subr.bf16.mxu0 0
      %5036 = vmatpush1.bf16.msra.mxu0 0
      %5037 = vmatprep.subr.bf16.mxu0 0
      %5038 = vmatpush1.bf16.msra.mxu0 0
      %5039 = vmatprep.subr.bf16.mxu0 0
      %5040 = vmatpush1.bf16.msra.mxu0 0
      %5041 = vmatprep.subr.bf16.mxu0 0
      %5042 = vmatpush1.bf16.msra.mxu0 0
      %5043 = vmatprep.subr.bf16.mxu0 0
      %5044 = vmatpush1.bf16.msra.mxu0 0
      %5045 = vmatprep.subr.bf16.mxu0 0
      %5046 = vmatpush1.bf16.msra.mxu0 0
      %5047 = vmatprep.mubr.bf16.mxu0 0
      %5048 = vmatmul.mubr.bf16.gmra.mrb[0].mxu0 %v4799
      %v5049 = vpop.f32.mrb[0].mxu0
      %v5050 = vadd.f32 %v4762, %v5049
      %v5051 = vpop.f32.mrb[0].mxu0
      %v5052 = vadd.f32 %v4762, %v5051
      %v5053 = vpop.f32.mrb[0].mxu0
      %v5054 = vadd.f32 %v4767, %v5053
      %v5055 = vpop.f32.mrb[0].mxu0
      %v5056 = vadd.f32 %v4767, %v5055
      %5057 = vmatprep.mubr.bf16.mxu0 0
      %5058 = vmatmul.mubr.bf16.gmra.mrb[0].mxu0 %v4802
      %v5059 = vpop.f32.mrb[0].mxu0
      %v5060 = vadd.f32 %v4772, %v5059
      %v5061 = vpop.f32.mrb[0].mxu0
      %v5062 = vadd.f32 %v4772, %v5061
      %v5063 = vpop.f32.mrb[0].mxu0
      %v5064 = vadd.f32 %v4777, %v5063
      %v5065 = vpop.f32.mrb[0].mxu0
      %v5066 = vadd.f32 %v4777, %v5065
      %5067 = vmatprep.mubr.bf16.mxu0 0
      %5068 = vmatmul.mubr.bf16.gmra.mrb[0].mxu0 %v4805
      %v5069 = vpop.f32.mrb[0].mxu0
      %v5070 = vadd.f32 %v4782, %v5069
      %v5071 = vpop.f32.mrb[0].mxu0
      %v5072 = vadd.f32 %v4782, %v5071
      %v5073 = vpop.f32.mrb[0].mxu0
      %v5074 = vpop.f32.mrb[0].mxu0
      %5075 = vdwg.mxu0
      %v5076 = vmax.f32 %v4867, 0.0
      %v5077 = vmax.f32 %v4869, 0.0
      %v5078 = vmax.f32 %v4928, 0.0
      %v5079 = vmax.f32 %v4930, 0.0
      %v5080 = vmax.f32 %v4989, 0.0
      %v5081 = vmax.f32 %v4991, 0.0
      %v5082 = vmax.f32 %v5050, 0.0
      %v5083 = vmax.f32 %v5052, 0.0
      %v5084 = vmax.f32 %v4871, 0.0
      %v5085 = vmax.f32 %v4873, 0.0
      %v5086 = vmax.f32 %v4932, 0.0
      %v5087 = vmax.f32 %v4934, 0.0
      %v5088 = vmax.f32 %v4993, 0.0
      %v5089 = vmax.f32 %v4995, 0.0
      %v5090 = vmax.f32 %v5054, 0.0
      %v5091 = vmax.f32 %v5056, 0.0
      %v5092 = vmax.f32 %v4877, 0.0
      %v5093 = vmax.f32 %v4879, 0.0
      %v5094 = vmax.f32 %v4938, 0.0
      %v5095 = vmax.f32 %v4940, 0.0
      %v5096 = vmax.f32 %v4999, 0.0
      %v5097 = vmax.f32 %v5001, 0.0
      %v5098 = vmax.f32 %v5060, 0.0
      %v5099 = vmax.f32 %v5062, 0.0
      %v5100 = vmax.f32 %v4881, 0.0
      %v5101 = vmax.f32 %v4883, 0.0
      %v5102 = vmax.f32 %v4942, 0.0
      %v5103 = vmax.f32 %v4944, 0.0
      %v5104 = vmax.f32 %v5003, 0.0
      %v5105 = vmax.f32 %v5005, 0.0
      %v5106 = vmax.f32 %v5064, 0.0
      %v5107 = vmax.f32 %v5066, 0.0
      %v5108 = vmax.f32 %v4887, 0.0
      %v5109 = vmax.f32 %v4889, 0.0
      %v5110 = vmax.f32 %v4948, 0.0
      %v5111 = vmax.f32 %v4950, 0.0
      %v5112 = vmax.f32 %v5009, 0.0
      %v5113 = vmax.f32 %v5011, 0.0
      %v5114 = vmax.f32 %v5070, 0.0
      %v5115 = vmax.f32 %v5072, 0.0
      %s5116 = scalar_lea.vmem %s3, 20
      %v5117 = vld [vmem:[%s5116] sm:$0xf]
      %v5118 = vld [vmem:[%s5116 + $0x4] sm:$0xf]
      %v5119 = vld [vmem:[%s5116 + $0x8] sm:$0xf]
      %v5120 = vld [vmem:[%s5116 + $0xc] sm:$0xf]
      %v5121 = vld [vmem:[%s5116 + $0x10] sm:$0xf]
      %v5122 = vpack.c.bf16 %v5084, %v5076
      %v5123 = vpack.c.bf16 %v5085, %v5077
      %v5124 = vpack.c.bf16 %v5086, %v5078
      %v5125 = vpack.c.bf16 %v5087, %v5079
      %v5126 = vpack.c.bf16 %v5088, %v5080
      %v5127 = vpack.c.bf16 %v5089, %v5081
      %v5128 = vpack.c.bf16 %v5090, %v5082
      %v5129 = vpack.c.bf16 %v5091, %v5083
      %v5130 = vpack.c.bf16 %v5100, %v5092
      %v5131 = vpack.c.bf16 %v5101, %v5093
      %v5132 = vpack.c.bf16 %v5102, %v5094
      %v5133 = vpack.c.bf16 %v5103, %v5095
      %v5134 = vpack.c.bf16 %v5104, %v5096
      %v5135 = vpack.c.bf16 %v5105, %v5097
      %v5136 = vpack.c.bf16 %v5106, %v5098
      %v5137 = vpack.c.bf16 %v5107, %v5099
      %v5138 = vpack.c.bf16 %v5108, %v5108
      %v5139 = vpack.c.bf16 %v5109, %v5109
      %v5140 = vpack.c.bf16 %v5110, %v5110
      %v5141 = vpack.c.bf16 %v5111, %v5111
      %v5142 = vpack.c.bf16 %v5112, %v5112
      %v5143 = vpack.c.bf16 %v5113, %v5113
      %v5144 = vpack.c.bf16 %v5114, %v5114
      %v5145 = vpack.c.bf16 %v5115, %v5115
      %s5146 = scalar_lea.vmem %s4, 40
      %v5147 = vld [vmem:[%s5146] sm:$0xff]
      %v5148 = vld [vmem:[%s5146 + $0x8] sm:$0xff]
      %v5149 = vld [vmem:[%s5146 + $0x10] sm:$0xff]
      %v5150 = vld [vmem:[%s5146 + $0x18] sm:$0xff]
      %v5151 = vld [vmem:[%s5146 + $0x20] sm:$0xff]
      %5153 = vset.pattern.permute.xlu0 0
      %5154 = vperm.xlu0 %5153, %v5147
      %v5155 = vpop.permute.xlu0 %5154
      %5158 = vset.pattern.permute.xlu0 0
      %5159 = vperm.xlu0 %5158, %v5148
      %v5160 = vpop.permute.xlu0 %5159
      %5163 = vset.pattern.permute.xlu0 0
      %5164 = vperm.xlu0 %5163, %v5149
      %v5165 = vpop.permute.xlu0 %5164
      %5168 = vset.pattern.permute.xlu0 0
      %5169 = vperm.xlu0 %5168, %v5150
      %v5170 = vpop.permute.xlu0 %5169
      %5173 = vset.pattern.permute.xlu0 0
      %5174 = vperm.xlu0 %5173, %v5151
      %v5175 = vpop.permute.xlu0 %5174
      %v5182 = vunpack.c.l.b16 %v5117
      %v5183 = vunpack.c.l.b16 %v5118
      %v5184 = vunpack.c.l.b16 %v5119
      %v5185 = vunpack.c.l.b16 %v5120
      %v5186 = vunpack.c.l.b16 %v5121
      %v5187 = vpack.c.b16 %v5183, %v5182
      %v5188 = vpack.c.b16 %v5185, %v5184
      %v5189 = vpack.c.b16 %v5186, %v5186
      %v5191 = vsel %vm4797, %v5187, 0
      %v5194 = vsel %vm4797, %v5188, 0
      %v5197 = vsel %vm4797, %v5189, 0
      %v5200 = vsel %vm4807, %v5138, 0
      %v5203 = vsel %vm4807, %v5139, 0
      %v5206 = vsel %vm4807, %v5140, 0
      %v5209 = vsel %vm4807, %v5141, 0
      %v5212 = vsel %vm4807, %v5142, 0
      %v5215 = vsel %vm4807, %v5143, 0
      %v5218 = vsel %vm4807, %v5144, 0
      %v5221 = vsel %vm4807, %v5145, 0
      %5223 = vmatprep.subr.bf16.mxu0 %v5123
      %5224 = vmatpush1.bf16.msra.mxu0 %v5122
      %5225 = vmatprep.subr.bf16.mxu0 %v5131
      %5226 = vmatpush1.bf16.msra.mxu0 %v5130
      %5227 = vmatprep.subr.bf16.mxu0 %v5203
      %5228 = vmatpush1.bf16.msra.mxu0 %v5200
      %5229 = vmatprep.subr.bf16.mxu0 0
      %5230 = vmatpush1.bf16.msra.mxu0 0
      %5231 = vmatprep.subr.bf16.mxu0 0
      %5232 = vmatpush1.bf16.msra.mxu0 0
      %5233 = vmatprep.subr.bf16.mxu0 0
      %5234 = vmatpush1.bf16.msra.mxu0 0
      %5235 = vmatprep.subr.bf16.mxu0 0
      %5236 = vmatpush1.bf16.msra.mxu0 0
      %5237 = vmatprep.subr.bf16.mxu0 0
      %5238 = vmatpush1.bf16.msra.mxu0 0
      %5239 = vmatprep.subr.bf16.mxu0 0
      %5240 = vmatpush1.bf16.msra.mxu0 0
      %5241 = vmatprep.subr.bf16.mxu0 0
      %5242 = vmatpush1.bf16.msra.mxu0 0
      %5243 = vmatprep.subr.bf16.mxu0 0
      %5244 = vmatpush1.bf16.msra.mxu0 0
      %5245 = vmatprep.subr.bf16.mxu0 0
      %5246 = vmatpush1.bf16.msra.mxu0 0
      %5247 = vmatprep.subr.bf16.mxu0 0
      %5248 = vmatpush1.bf16.msra.mxu0 0
      %5249 = vmatprep.subr.bf16.mxu0 0
      %5250 = vmatpush1.bf16.msra.mxu0 0
      %5251 = vmatprep.subr.bf16.mxu0 0
      %5252 = vmatpush1.bf16.msra.mxu0 0
      %5253 = vmatprep.subr.bf16.mxu0 0
      %5254 = vmatpush1.bf16.msra.mxu0 0
      %5255 = vmatprep.mubr.bf16.mxu0 0
      %5256 = vmatmul.mubr.bf16.gmra.mrb[0].mxu0 %v5191
      %v5257 = vpop.f32.mrb[0].mxu0
      %v5258 = vadd.f32 %v5155, %v5257
      %v5259 = vpop.f32.mrb[0].mxu0
      %v5260 = vadd.f32 %v5155, %v5259
      %v5261 = vpop.f32.mrb[0].mxu0
      %v5262 = vadd.f32 %v5160, %v5261
      %v5263 = vpop.f32.mrb[0].mxu0
      %v5264 = vadd.f32 %v5160, %v5263
      %5265 = vmatprep.mubr.bf16.mxu0 0
      %5266 = vmatmul.mubr.bf16.gmra.mrb[0].mxu0 %v5194
      %v5267 = vpop.f32.mrb[0].mxu0
      %v5268 = vadd.f32 %v5165, %v5267
      %v5269 = vpop.f32.mrb[0].mxu0
      %v5270 = vadd.f32 %v5165, %v5269
      %v5271 = vpop.f32.mrb[0].mxu0
      %v5272 = vadd.f32 %v5170, %v5271
      %v5273 = vpop.f32.mrb[0].mxu0
      %v5274 = vadd.f32 %v5170, %v5273
      %5275 = vmatprep.mubr.bf16.mxu0 0
      %5276 = vmatmul.mubr.bf16.gmra.mrb[0].mxu0 %v5197
      %v5277 = vpop.f32.mrb[0].mxu0
      %v5278 = vadd.f32 %v5175, %v5277
      %v5279 = vpop.f32.mrb[0].mxu0
      %v5280 = vadd.f32 %v5175, %v5279
      %v5281 = vpop.f32.mrb[0].mxu0
      %v5282 = vpop.f32.mrb[0].mxu0
      %5283 = vdwg.mxu0
      %5284 = vmatprep.subr.bf16.mxu0 %v5125
      %5285 = vmatpush1.bf16.msra.mxu0 %v5124
      %5286 = vmatprep.subr.bf16.mxu0 %v5133
      %5287 = vmatpush1.bf16.msra.mxu0 %v5132
      %5288 = vmatprep.subr.bf16.mxu0 %v5209
      %5289 = vmatpush1.bf16.msra.mxu0 %v5206
      %5290 = vmatprep.subr.bf16.mxu0 0
      %5291 = vmatpush1.bf16.msra.mxu0 0
      %5292 = vmatprep.subr.bf16.mxu0 0
      %5293 = vmatpush1.bf16.msra.mxu0 0
      %5294 = vmatprep.subr.bf16.mxu0 0
      %5295 = vmatpush1.bf16.msra.mxu0 0
      %5296 = vmatprep.subr.bf16.mxu0 0
      %5297 = vmatpush1.bf16.msra.mxu0 0
      %5298 = vmatprep.subr.bf16.mxu0 0
      %5299 = vmatpush1.bf16.msra.mxu0 0
      %5300 = vmatprep.subr.bf16.mxu0 0
      %5301 = vmatpush1.bf16.msra.mxu0 0
      %5302 = vmatprep.subr.bf16.mxu0 0
      %5303 = vmatpush1.bf16.msra.mxu0 0
      %5304 = vmatprep.subr.bf16.mxu0 0
      %5305 = vmatpush1.bf16.msra.mxu0 0
      %5306 = vmatprep.subr.bf16.mxu0 0
      %5307 = vmatpush1.bf16.msra.mxu0 0
      %5308 = vmatprep.subr.bf16.mxu0 0
      %5309 = vmatpush1.bf16.msra.mxu0 0
      %5310 = vmatprep.subr.bf16.mxu0 0
      %5311 = vmatpush1.bf16.msra.mxu0 0
      %5312 = vmatprep.subr.bf16.mxu0 0
      %5313 = vmatpush1.bf16.msra.mxu0 0
      %5314 = vmatprep.subr.bf16.mxu0 0
      %5315 = vmatpush1.bf16.msra.mxu0 0
      %5316 = vmatprep.mubr.bf16.mxu0 0
      %5317 = vmatmul.mubr.bf16.gmra.mrb[0].mxu0 %v5191
      %v5318 = vpop.f32.mrb[0].mxu0
      %v5319 = vadd.f32 %v5155, %v5318
      %v5320 = vpop.f32.mrb[0].mxu0
      %v5321 = vadd.f32 %v5155, %v5320
      %v5322 = vpop.f32.mrb[0].mxu0
      %v5323 = vadd.f32 %v5160, %v5322
      %v5324 = vpop.f32.mrb[0].mxu0
      %v5325 = vadd.f32 %v5160, %v5324
      %5326 = vmatprep.mubr.bf16.mxu0 0
      %5327 = vmatmul.mubr.bf16.gmra.mrb[0].mxu0 %v5194
      %v5328 = vpop.f32.mrb[0].mxu0
      %v5329 = vadd.f32 %v5165, %v5328
      %v5330 = vpop.f32.mrb[0].mxu0
      %v5331 = vadd.f32 %v5165, %v5330
      %v5332 = vpop.f32.mrb[0].mxu0
      %v5333 = vadd.f32 %v5170, %v5332
      %v5334 = vpop.f32.mrb[0].mxu0
      %v5335 = vadd.f32 %v5170, %v5334
      %5336 = vmatprep.mubr.bf16.mxu0 0
      %5337 = vmatmul.mubr.bf16.gmra.mrb[0].mxu0 %v5197
      %v5338 = vpop.f32.mrb[0].mxu0
      %v5339 = vadd.f32 %v5175, %v5338
      %v5340 = vpop.f32.mrb[0].mxu0
      %v5341 = vadd.f32 %v5175, %v5340
      %v5342 = vpop.f32.mrb[0].mxu0
      %v5343 = vpop.f32.mrb[0].mxu0
      %5344 = vdwg.mxu0
      %5345 = vmatprep.subr.bf16.mxu0 %v5127
      %5346 = vmatpush1.bf16.msra.mxu0 %v5126
      %5347 = vmatprep.subr.bf16.mxu0 %v5135
      %5348 = vmatpush1.bf16.msra.mxu0 %v5134
      %5349 = vmatprep.subr.bf16.mxu0 %v5215
      %5350 = vmatpush1.bf16.msra.mxu0 %v5212
      %5351 = vmatprep.subr.bf16.mxu0 0
      %5352 = vmatpush1.bf16.msra.mxu0 0
      %5353 = vmatprep.subr.bf16.mxu0 0
      %5354 = vmatpush1.bf16.msra.mxu0 0
      %5355 = vmatprep.subr.bf16.mxu0 0
      %5356 = vmatpush1.bf16.msra.mxu0 0
      %5357 = vmatprep.subr.bf16.mxu0 0
      %5358 = vmatpush1.bf16.msra.mxu0 0
      %5359 = vmatprep.subr.bf16.mxu0 0
      %5360 = vmatpush1.bf16.msra.mxu0 0
      %5361 = vmatprep.subr.bf16.mxu0 0
      %5362 = vmatpush1.bf16.msra.mxu0 0
      %5363 = vmatprep.subr.bf16.mxu0 0
      %5364 = vmatpush1.bf16.msra.mxu0 0
      %5365 = vmatprep.subr.bf16.mxu0 0
      %5366 = vmatpush1.bf16.msra.mxu0 0
      %5367 = vmatprep.subr.bf16.mxu0 0
      %5368 = vmatpush1.bf16.msra.mxu0 0
      %5369 = vmatprep.subr.bf16.mxu0 0
      %5370 = vmatpush1.bf16.msra.mxu0 0
      %5371 = vmatprep.subr.bf16.mxu0 0
      %5372 = vmatpush1.bf16.msra.mxu0 0
      %5373 = vmatprep.subr.bf16.mxu0 0
      %5374 = vmatpush1.bf16.msra.mxu0 0
      %5375 = vmatprep.subr.bf16.mxu0 0
      %5376 = vmatpush1.bf16.msra.mxu0 0
      %5377 = vmatprep.mubr.bf16.mxu0 0
      %5378 = vmatmul.mubr.bf16.gmra.mrb[0].mxu0 %v5191
      %v5379 = vpop.f32.mrb[0].mxu0
      %v5380 = vadd.f32 %v5155, %v5379
      %v5381 = vpop.f32.mrb[0].mxu0
      %v5382 = vadd.f32 %v5155, %v5381
      %v5383 = vpop.f32.mrb[0].mxu0
      %v5384 = vadd.f32 %v5160, %v5383
      %v5385 = vpop.f32.mrb[0].mxu0
      %v5386 = vadd.f32 %v5160, %v5385
      %5387 = vmatprep.mubr.bf16.mxu0 0
      %5388 = vmatmul.mubr.bf16.gmra.mrb[0].mxu0 %v5194
      %v5389 = vpop.f32.mrb[0].mxu0
      %v5390 = vadd.f32 %v5165, %v5389
      %v5391 = vpop.f32.mrb[0].mxu0
      %v5392 = vadd.f32 %v5165, %v5391
      %v5393 = vpop.f32.mrb[0].mxu0
      %v5394 = vadd.f32 %v5170, %v5393
      %v5395 = vpop.f32.mrb[0].mxu0
      %v5396 = vadd.f32 %v5170, %v5395
      %5397 = vmatprep.mubr.bf16.mxu0 0
      %5398 = vmatmul.mubr.bf16.gmra.mrb[0].mxu0 %v5197
      %v5399 = vpop.f32.mrb[0].mxu0
      %v5400 = vadd.f32 %v5175, %v5399
      %v5401 = vpop.f32.mrb[0].mxu0
      %v5402 = vadd.f32 %v5175, %v5401
      %v5403 = vpop.f32.mrb[0].mxu0
      %v5404 = vpop.f32.mrb[0].mxu0
      %5405 = vdwg.mxu0
      %5406 = vmatprep.subr.bf16.mxu0 %v5129
      %5407 = vmatpush1.bf16.msra.mxu0 %v5128
      %5408 = vmatprep.subr.bf16.mxu0 %v5137
      %5409 = vmatpush1.bf16.msra.mxu0 %v5136
      %5410 = vmatprep.subr.bf16.mxu0 %v5221
      %5411 = vmatpush1.bf16.msra.mxu0 %v5218
      %5412 = vmatprep.subr.bf16.mxu0 0
      %5413 = vmatpush1.bf16.msra.mxu0 0
      %5414 = vmatprep.subr.bf16.mxu0 0
      %5415 = vmatpush1.bf16.msra.mxu0 0
      %5416 = vmatprep.subr.bf16.mxu0 0
      %5417 = vmatpush1.bf16.msra.mxu0 0
      %5418 = vmatprep.subr.bf16.mxu0 0
      %5419 = vmatpush1.bf16.msra.mxu0 0
      %5420 = vmatprep.subr.bf16.mxu0 0
      %5421 = vmatpush1.bf16.msra.mxu0 0
      %5422 = vmatprep.subr.bf16.mxu0 0
      %5423 = vmatpush1.bf16.msra.mxu0 0
      %5424 = vmatprep.subr.bf16.mxu0 0
      %5425 = vmatpush1.bf16.msra.mxu0 0
      %5426 = vmatprep.subr.bf16.mxu0 0
      %5427 = vmatpush1.bf16.msra.mxu0 0
      %5428 = vmatprep.subr.bf16.mxu0 0
      %5429 = vmatpush1.bf16.msra.mxu0 0
      %5430 = vmatprep.subr.bf16.mxu0 0
      %5431 = vmatpush1.bf16.msra.mxu0 0
      %5432 = vmatprep.subr.bf16.mxu0 0
      %5433 = vmatpush1.bf16.msra.mxu0 0
      %5434 = vmatprep.subr.bf16.mxu0 0
      %5435 = vmatpush1.bf16.msra.mxu0 0
      %5436 = vmatprep.subr.bf16.mxu0 0
      %5437 = vmatpush1.bf16.msra.mxu0 0
      %5438 = vmatprep.mubr.bf16.mxu0 0
      %5439 = vmatmul.mubr.bf16.gmra.mrb[0].mxu0 %v5191
      %v5440 = vpop.f32.mrb[0].mxu0
      %v5441 = vadd.f32 %v5155, %v5440
      %v5442 = vpop.f32.mrb[0].mxu0
      %v5443 = vadd.f32 %v5155, %v5442
      %v5444 = vpop.f32.mrb[0].mxu0
      %v5445 = vadd.f32 %v5160, %v5444
      %v5446 = vpop.f32.mrb[0].mxu0
      %v5447 = vadd.f32 %v5160, %v5446
      %5448 = vmatprep.mubr.bf16.mxu0 0
      %5449 = vmatmul.mubr.bf16.gmra.mrb[0].mxu0 %v5194
      %v5450 = vpop.f32.mrb[0].mxu0
      %v5451 = vadd.f32 %v5165, %v5450
      %v5452 = vpop.f32.mrb[0].mxu0
      %v5453 = vadd.f32 %v5165, %v5452
      %v5454 = vpop.f32.mrb[0].mxu0
      %v5455 = vadd.f32 %v5170, %v5454
      %v5456 = vpop.f32.mrb[0].mxu0
      %v5457 = vadd.f32 %v5170, %v5456
      %5458 = vmatprep.mubr.bf16.mxu0 0
      %5459 = vmatmul.mubr.bf16.gmra.mrb[0].mxu0 %v5197
      %v5460 = vpop.f32.mrb[0].mxu0
      %v5461 = vadd.f32 %v5175, %v5460
      %v5462 = vpop.f32.mrb[0].mxu0
      %v5463 = vadd.f32 %v5175, %v5462
      %v5464 = vpop.f32.mrb[0].mxu0
      %v5465 = vpop.f32.mrb[0].mxu0
      %5466 = vdwg.mxu0
      %v5467 = vmax.f32 %v5258, 0.0
      %v5468 = vmax.f32 %v5260, 0.0
      %v5469 = vmax.f32 %v5319, 0.0
      %v5470 = vmax.f32 %v5321, 0.0
      %v5471 = vmax.f32 %v5380, 0.0
      %v5472 = vmax.f32 %v5382, 0.0
      %v5473 = vmax.f32 %v5441, 0.0
      %v5474 = vmax.f32 %v5443, 0.0
      %v5475 = vmax.f32 %v5262, 0.0
      %v5476 = vmax.f32 %v5264, 0.0
      %v5477 = vmax.f32 %v5323, 0.0
      %v5478 = vmax.f32 %v5325, 0.0
      %v5479 = vmax.f32 %v5384, 0.0
      %v5480 = vmax.f32 %v5386, 0.0
      %v5481 = vmax.f32 %v5445, 0.0
      %v5482 = vmax.f32 %v5447, 0.0
      %v5483 = vmax.f32 %v5268, 0.0
      %v5484 = vmax.f32 %v5270, 0.0
      %v5485 = vmax.f32 %v5329, 0.0
      %v5486 = vmax.f32 %v5331, 0.0
      %v5487 = vmax.f32 %v5390, 0.0
      %v5488 = vmax.f32 %v5392, 0.0
      %v5489 = vmax.f32 %v5451, 0.0
      %v5490 = vmax.f32 %v5453, 0.0
      %v5491 = vmax.f32 %v5272, 0.0
      %v5492 = vmax.f32 %v5274, 0.0
      %v5493 = vmax.f32 %v5333, 0.0
      %v5494 = vmax.f32 %v5335, 0.0
      %v5495 = vmax.f32 %v5394, 0.0
      %v5496 = vmax.f32 %v5396, 0.0
      %v5497 = vmax.f32 %v5455, 0.0
      %v5498 = vmax.f32 %v5457, 0.0
      %v5499 = vmax.f32 %v5278, 0.0
      %v5500 = vmax.f32 %v5280, 0.0
      %v5501 = vmax.f32 %v5339, 0.0
      %v5502 = vmax.f32 %v5341, 0.0
      %v5503 = vmax.f32 %v5400, 0.0
      %v5504 = vmax.f32 %v5402, 0.0
      %v5505 = vmax.f32 %v5461, 0.0
      %v5506 = vmax.f32 %v5463, 0.0
      %s5507 = scalar_lea.vmem %s3, 40
      %v5508 = vld [vmem:[%s5507] sm:$0xf]
      %v5509 = vld [vmem:[%s5507 + $0x4] sm:$0xf]
      %v5510 = vld [vmem:[%s5507 + $0x8] sm:$0xf]
      %v5511 = vld [vmem:[%s5507 + $0xc] sm:$0xf]
      %v5512 = vld [vmem:[%s5507 + $0x10] sm:$0xf]
      %v5513 = vpack.c.bf16 %v5475, %v5467
      %v5514 = vpack.c.bf16 %v5476, %v5468
      %v5515 = vpack.c.bf16 %v5477, %v5469
      %v5516 = vpack.c.bf16 %v5478, %v5470
      %v5517 = vpack.c.bf16 %v5479, %v5471
      %v5518 = vpack.c.bf16 %v5480, %v5472
      %v5519 = vpack.c.bf16 %v5481, %v5473
      %v5520 = vpack.c.bf16 %v5482, %v5474
      %v5521 = vpack.c.bf16 %v5491, %v5483
      %v5522 = vpack.c.bf16 %v5492, %v5484
      %v5523 = vpack.c.bf16 %v5493, %v5485
      %v5524 = vpack.c.bf16 %v5494, %v5486
      %v5525 = vpack.c.bf16 %v5495, %v5487
      %v5526 = vpack.c.bf16 %v5496, %v5488
      %v5527 = vpack.c.bf16 %v5497, %v5489
      %v5528 = vpack.c.bf16 %v5498, %v5490
      %v5529 = vpack.c.bf16 %v5499, %v5499
      %v5530 = vpack.c.bf16 %v5500, %v5500
      %v5531 = vpack.c.bf16 %v5501, %v5501
      %v5532 = vpack.c.bf16 %v5502, %v5502
      %v5533 = vpack.c.bf16 %v5503, %v5503
      %v5534 = vpack.c.bf16 %v5504, %v5504
      %v5535 = vpack.c.bf16 %v5505, %v5505
      %v5536 = vpack.c.bf16 %v5506, %v5506
      %s5537 = scalar_lea.vmem %s4, 80
      %v5538 = vld [vmem:[%s5537] sm:$0xff]
      %v5539 = vld [vmem:[%s5537 + $0x8] sm:$0xff]
      %v5540 = vld [vmem:[%s5537 + $0x10] sm:$0xff]
      %v5541 = vld [vmem:[%s5537 + $0x18] sm:$0xff]
      %v5542 = vld [vmem:[%s5537 + $0x20] sm:$0xff]
      %5544 = vset.pattern.permute.xlu0 0
      %5545 = vperm.xlu0 %5544, %v5538
      %v5546 = vpop.permute.xlu0 %5545
      %5549 = vset.pattern.permute.xlu0 0
      %5550 = vperm.xlu0 %5549, %v5539
      %v5551 = vpop.permute.xlu0 %5550
      %5554 = vset.pattern.permute.xlu0 0
      %5555 = vperm.xlu0 %5554, %v5540
      %v5556 = vpop.permute.xlu0 %5555
      %5559 = vset.pattern.permute.xlu0 0
      %5560 = vperm.xlu0 %5559, %v5541
      %v5561 = vpop.permute.xlu0 %5560
      %5564 = vset.pattern.permute.xlu0 0
      %5565 = vperm.xlu0 %5564, %v5542
      %v5566 = vpop.permute.xlu0 %5565
      %v5573 = vunpack.c.l.b16 %v5508
      %v5574 = vunpack.c.l.b16 %v5509
      %v5575 = vunpack.c.l.b16 %v5510
      %v5576 = vunpack.c.l.b16 %v5511
      %v5577 = vunpack.c.l.b16 %v5512
      %v5578 = vpack.c.b16 %v5574, %v5573
      %v5579 = vpack.c.b16 %v5576, %v5575
      %v5580 = vpack.c.b16 %v5577, %v5577
      %v5582 = vsel %vm4797, %v5578, 0
      %v5585 = vsel %vm4797, %v5579, 0
      %v5588 = vsel %vm4797, %v5580, 0
      %v5591 = vsel %vm4807, %v5529, 0
      %v5594 = vsel %vm4807, %v5530, 0
      %v5597 = vsel %vm4807, %v5531, 0
      %v5600 = vsel %vm4807, %v5532, 0
      %v5603 = vsel %vm4807, %v5533, 0
      %v5606 = vsel %vm4807, %v5534, 0
      %v5609 = vsel %vm4807, %v5535, 0
      %v5612 = vsel %vm4807, %v5536, 0
      %5614 = vmatprep.subr.bf16.mxu0 %v5514
      %5615 = vmatpush1.bf16.msra.mxu0 %v5513
      %5616 = vmatprep.subr.bf16.mxu0 %v5522
      %5617 = vmatpush1.bf16.msra.mxu0 %v5521
      %5618 = vmatprep.subr.bf16.mxu0 %v5594
      %5619 = vmatpush1.bf16.msra.mxu0 %v5591
      %5620 = vmatprep.subr.bf16.mxu0 0
      %5621 = vmatpush1.bf16.msra.mxu0 0
      %5622 = vmatprep.subr.bf16.mxu0 0
      %5623 = vmatpush1.bf16.msra.mxu0 0
      %5624 = vmatprep.subr.bf16.mxu0 0
      %5625 = vmatpush1.bf16.msra.mxu0 0
      %5626 = vmatprep.subr.bf16.mxu0 0
      %5627 = vmatpush1.bf16.msra.mxu0 0
      %5628 = vmatprep.subr.bf16.mxu0 0
      %5629 = vmatpush1.bf16.msra.mxu0 0
      %5630 = vmatprep.subr.bf16.mxu0 0
      %5631 = vmatpush1.bf16.msra.mxu0 0
      %5632 = vmatprep.subr.bf16.mxu0 0
      %5633 = vmatpush1.bf16.msra.mxu0 0
      %5634 = vmatprep.subr.bf16.mxu0 0
      %5635 = vmatpush1.bf16.msra.mxu0 0
      %5636 = vmatprep.subr.bf16.mxu0 0
      %5637 = vmatpush1.bf16.msra.mxu0 0
      %5638 = vmatprep.subr.bf16.mxu0 0
      %5639 = vmatpush1.bf16.msra.mxu0 0
      %5640 = vmatprep.subr.bf16.mxu0 0
      %5641 = vmatpush1.bf16.msra.mxu0 0
      %5642 = vmatprep.subr.bf16.mxu0 0
      %5643 = vmatpush1.bf16.msra.mxu0 0
      %5644 = vmatprep.subr.bf16.mxu0 0
      %5645 = vmatpush1.bf16.msra.mxu0 0
      %5646 = vmatprep.mubr.bf16.mxu0 0
      %5647 = vmatmul.mubr.bf16.gmra.mrb[0].mxu0 %v5582
      %v5648 = vpop.f32.mrb[0].mxu0
      %v5649 = vadd.f32 %v5546, %v5648
      %v5650 = vpop.f32.mrb[0].mxu0
      %v5651 = vadd.f32 %v5546, %v5650
      %v5652 = vpop.f32.mrb[0].mxu0
      %v5653 = vadd.f32 %v5551, %v5652
      %v5654 = vpop.f32.mrb[0].mxu0
      %v5655 = vadd.f32 %v5551, %v5654
      %5656 = vmatprep.mubr.bf16.mxu0 0
      %5657 = vmatmul.mubr.bf16.gmra.mrb[0].mxu0 %v5585
      %v5658 = vpop.f32.mrb[0].mxu0
      %v5659 = vadd.f32 %v5556, %v5658
      %v5660 = vpop.f32.mrb[0].mxu0
      %v5661 = vadd.f32 %v5556, %v5660
      %v5662 = vpop.f32.mrb[0].mxu0
      %v5663 = vadd.f32 %v5561, %v5662
      %v5664 = vpop.f32.mrb[0].mxu0
      %v5665 = vadd.f32 %v5561, %v5664
      %5666 = vmatprep.mubr.bf16.mxu0 0
      %5667 = vmatmul.mubr.bf16.gmra.mrb[0].mxu0 %v5588
      %v5668 = vpop.f32.mrb[0].mxu0
      %v5669 = vadd.f32 %v5566, %v5668
      %v5670 = vpop.f32.mrb[0].mxu0
      %v5671 = vadd.f32 %v5566, %v5670
      %v5672 = vpop.f32.mrb[0].mxu0
      %v5673 = vpop.f32.mrb[0].mxu0
      %5674 = vdwg.mxu0
      %5675 = vmatprep.subr.bf16.mxu0 %v5516
      %5676 = vmatpush1.bf16.msra.mxu0 %v5515
      %5677 = vmatprep.subr.bf16.mxu0 %v5524
      %5678 = vmatpush1.bf16.msra.mxu0 %v5523
      %5679 = vmatprep.subr.bf16.mxu0 %v5600
      %5680 = vmatpush1.bf16.msra.mxu0 %v5597
      %5681 = vmatprep.subr.bf16.mxu0 0
      %5682 = vmatpush1.bf16.msra.mxu0 0
      %5683 = vmatprep.subr.bf16.mxu0 0
      %5684 = vmatpush1.bf16.msra.mxu0 0
      %5685 = vmatprep.subr.bf16.mxu0 0
      %5686 = vmatpush1.bf16.msra.mxu0 0
      %5687 = vmatprep.subr.bf16.mxu0 0
      %5688 = vmatpush1.bf16.msra.mxu0 0
      %5689 = vmatprep.subr.bf16.mxu0 0
      %5690 = vmatpush1.bf16.msra.mxu0 0
      %5691 = vmatprep.subr.bf16.mxu0 0
      %5692 = vmatpush1.bf16.msra.mxu0 0
      %5693 = vmatprep.subr.bf16.mxu0 0
      %5694 = vmatpush1.bf16.msra.mxu0 0
      %5695 = vmatprep.subr.bf16.mxu0 0
      %5696 = vmatpush1.bf16.msra.mxu0 0
      %5697 = vmatprep.subr.bf16.mxu0 0
      %5698 = vmatpush1.bf16.msra.mxu0 0
      %5699 = vmatprep.subr.bf16.mxu0 0
      %5700 = vmatpush1.bf16.msra.mxu0 0
      %5701 = vmatprep.subr.bf16.mxu0 0
      %5702 = vmatpush1.bf16.msra.mxu0 0
      %5703 = vmatprep.subr.bf16.mxu0 0
      %5704 = vmatpush1.bf16.msra.mxu0 0
      %5705 = vmatprep.subr.bf16.mxu0 0
      %5706 = vmatpush1.bf16.msra.mxu0 0
      %5707 = vmatprep.mubr.bf16.mxu0 0
      %5708 = vmatmul.mubr.bf16.gmra.mrb[0].mxu0 %v5582
      %v5709 = vpop.f32.mrb[0].mxu0
      %v5710 = vadd.f32 %v5546, %v5709
      %v5711 = vpop.f32.mrb[0].mxu0
      %v5712 = vadd.f32 %v5546, %v5711
      %v5713 = vpop.f32.mrb[0].mxu0
      %v5714 = vadd.f32 %v5551, %v5713
      %v5715 = vpop.f32.mrb[0].mxu0
      %v5716 = vadd.f32 %v5551, %v5715
      %5717 = vmatprep.mubr.bf16.mxu0 0
      %5718 = vmatmul.mubr.bf16.gmra.mrb[0].mxu0 %v5585
      %v5719 = vpop.f32.mrb[0].mxu0
      %v5720 = vadd.f32 %v5556, %v5719
      %v5721 = vpop.f32.mrb[0].mxu0
      %v5722 = vadd.f32 %v5556, %v5721
      %v5723 = vpop.f32.mrb[0].mxu0
      %v5724 = vadd.f32 %v5561, %v5723
      %v5725 = vpop.f32.mrb[0].mxu0
      %v5726 = vadd.f32 %v5561, %v5725
      %5727 = vmatprep.mubr.bf16.mxu0 0
      %5728 = vmatmul.mubr.bf16.gmra.mrb[0].mxu0 %v5588
      %v5729 = vpop.f32.mrb[0].mxu0
      %v5730 = vadd.f32 %v5566, %v5729
      %v5731 = vpop.f32.mrb[0].mxu0
      %v5732 = vadd.f32 %v5566, %v5731
      %v5733 = vpop.f32.mrb[0].mxu0
      %v5734 = vpop.f32.mrb[0].mxu0
      %5735 = vdwg.mxu0
      %5736 = vmatprep.subr.bf16.mxu0 %v5518
      %5737 = vmatpush1.bf16.msra.mxu0 %v5517
      %5738 = vmatprep.subr.bf16.mxu0 %v5526
      %5739 = vmatpush1.bf16.msra.mxu0 %v5525
      %5740 = vmatprep.subr.bf16.mxu0 %v5606
      %5741 = vmatpush1.bf16.msra.mxu0 %v5603
      %5742 = vmatprep.subr.bf16.mxu0 0
      %5743 = vmatpush1.bf16.msra.mxu0 0
      %5744 = vmatprep.subr.bf16.mxu0 0
      %5745 = vmatpush1.bf16.msra.mxu0 0
      %5746 = vmatprep.subr.bf16.mxu0 0
      %5747 = vmatpush1.bf16.msra.mxu0 0
      %5748 = vmatprep.subr.bf16.mxu0 0
      %5749 = vmatpush1.bf16.msra.mxu0 0
      %5750 = vmatprep.subr.bf16.mxu0 0
      %5751 = vmatpush1.bf16.msra.mxu0 0
      %5752 = vmatprep.subr.bf16.mxu0 0
      %5753 = vmatpush1.bf16.msra.mxu0 0
      %5754 = vmatprep.subr.bf16.mxu0 0
      %5755 = vmatpush1.bf16.msra.mxu0 0
      %5756 = vmatprep.subr.bf16.mxu0 0
      %5757 = vmatpush1.bf16.msra.mxu0 0
      %5758 = vmatprep.subr.bf16.mxu0 0
      %5759 = vmatpush1.bf16.msra.mxu0 0
      %5760 = vmatprep.subr.bf16.mxu0 0
      %5761 = vmatpush1.bf16.msra.mxu0 0
      %5762 = vmatprep.subr.bf16.mxu0 0
      %5763 = vmatpush1.bf16.msra.mxu0 0
      %5764 = vmatprep.subr.bf16.mxu0 0
      %5765 = vmatpush1.bf16.msra.mxu0 0
      %5766 = vmatprep.subr.bf16.mxu0 0
      %5767 = vmatpush1.bf16.msra.mxu0 0
      %5768 = vmatprep.mubr.bf16.mxu0 0
      %5769 = vmatmul.mubr.bf16.gmra.mrb[0].mxu0 %v5582
      %v5770 = vpop.f32.mrb[0].mxu0
      %v5771 = vadd.f32 %v5546, %v5770
      %v5772 = vpop.f32.mrb[0].mxu0
      %v5773 = vadd.f32 %v5546, %v5772
      %v5774 = vpop.f32.mrb[0].mxu0
      %v5775 = vadd.f32 %v5551, %v5774
      %v5776 = vpop.f32.mrb[0].mxu0
      %v5777 = vadd.f32 %v5551, %v5776
      %5778 = vmatprep.mubr.bf16.mxu0 0
      %5779 = vmatmul.mubr.bf16.gmra.mrb[0].mxu0 %v5585
      %v5780 = vpop.f32.mrb[0].mxu0
      %v5781 = vadd.f32 %v5556, %v5780
      %v5782 = vpop.f32.mrb[0].mxu0
      %v5783 = vadd.f32 %v5556, %v5782
      %v5784 = vpop.f32.mrb[0].mxu0
      %v5785 = vadd.f32 %v5561, %v5784
      %v5786 = vpop.f32.mrb[0].mxu0
      %v5787 = vadd.f32 %v5561, %v5786
      %5788 = vmatprep.mubr.bf16.mxu0 0
      %5789 = vmatmul.mubr.bf16.gmra.mrb[0].mxu0 %v5588
      %v5790 = vpop.f32.mrb[0].mxu0
      %v5791 = vadd.f32 %v5566, %v5790
      %v5792 = vpop.f32.mrb[0].mxu0
      %v5793 = vadd.f32 %v5566, %v5792
      %v5794 = vpop.f32.mrb[0].mxu0
      %v5795 = vpop.f32.mrb[0].mxu0
      %5796 = vdwg.mxu0
      %5797 = vmatprep.subr.bf16.mxu0 %v5520
      %5798 = vmatpush1.bf16.msra.mxu0 %v5519
      %5799 = vmatprep.subr.bf16.mxu0 %v5528
      %5800 = vmatpush1.bf16.msra.mxu0 %v5527
      %5801 = vmatprep.subr.bf16.mxu0 %v5612
      %5802 = vmatpush1.bf16.msra.mxu0 %v5609
      %5803 = vmatprep.subr.bf16.mxu0 0
      %5804 = vmatpush1.bf16.msra.mxu0 0
      %5805 = vmatprep.subr.bf16.mxu0 0
      %5806 = vmatpush1.bf16.msra.mxu0 0
      %5807 = vmatprep.subr.bf16.mxu0 0
      %5808 = vmatpush1.bf16.msra.mxu0 0
      %5809 = vmatprep.subr.bf16.mxu0 0
      %5810 = vmatpush1.bf16.msra.mxu0 0
      %5811 = vmatprep.subr.bf16.mxu0 0
      %5812 = vmatpush1.bf16.msra.mxu0 0
      %5813 = vmatprep.subr.bf16.mxu0 0
      %5814 = vmatpush1.bf16.msra.mxu0 0
      %5815 = vmatprep.subr.bf16.mxu0 0
      %5816 = vmatpush1.bf16.msra.mxu0 0
      %5817 = vmatprep.subr.bf16.mxu0 0
      %5818 = vmatpush1.bf16.msra.mxu0 0
      %5819 = vmatprep.subr.bf16.mxu0 0
      %5820 = vmatpush1.bf16.msra.mxu0 0
      %5821 = vmatprep.subr.bf16.mxu0 0
      %5822 = vmatpush1.bf16.msra.mxu0 0
      %5823 = vmatprep.subr.bf16.mxu0 0
      %5824 = vmatpush1.bf16.msra.mxu0 0
      %5825 = vmatprep.subr.bf16.mxu0 0
      %5826 = vmatpush1.bf16.msra.mxu0 0
      %5827 = vmatprep.subr.bf16.mxu0 0
      %5828 = vmatpush1.bf16.msra.mxu0 0
      %5829 = vmatprep.mubr.bf16.mxu0 0
      %5830 = vmatmul.mubr.bf16.gmra.mrb[0].mxu0 %v5582
      %v5831 = vpop.f32.mrb[0].mxu0
      %v5832 = vadd.f32 %v5546, %v5831
      %v5833 = vpop.f32.mrb[0].mxu0
      %v5834 = vadd.f32 %v5546, %v5833
      %v5835 = vpop.f32.mrb[0].mxu0
      %v5836 = vadd.f32 %v5551, %v5835
      %v5837 = vpop.f32.mrb[0].mxu0
      %v5838 = vadd.f32 %v5551, %v5837
      %5839 = vmatprep.mubr.bf16.mxu0 0
      %5840 = vmatmul.mubr.bf16.gmra.mrb[0].mxu0 %v5585
      %v5841 = vpop.f32.mrb[0].mxu0
      %v5842 = vadd.f32 %v5556, %v5841
      %v5843 = vpop.f32.mrb[0].mxu0
      %v5844 = vadd.f32 %v5556, %v5843
      %v5845 = vpop.f32.mrb[0].mxu0
      %v5846 = vadd.f32 %v5561, %v5845
      %v5847 = vpop.f32.mrb[0].mxu0
      %v5848 = vadd.f32 %v5561, %v5847
      %5849 = vmatprep.mubr.bf16.mxu0 0
      %5850 = vmatmul.mubr.bf16.gmra.mrb[0].mxu0 %v5588
      %v5851 = vpop.f32.mrb[0].mxu0
      %v5852 = vadd.f32 %v5566, %v5851
      %v5853 = vpop.f32.mrb[0].mxu0
      %v5854 = vadd.f32 %v5566, %v5853
      %v5855 = vpop.f32.mrb[0].mxu0
      %v5856 = vpop.f32.mrb[0].mxu0
      %5857 = vdwg.mxu0
      %v5858 = vmax.f32 %v5649, 0.0
      %v5859 = vmax.f32 %v5651, 0.0
      %v5860 = vmax.f32 %v5710, 0.0
      %v5861 = vmax.f32 %v5712, 0.0
      %v5862 = vmax.f32 %v5771, 0.0
      %v5863 = vmax.f32 %v5773, 0.0
      %v5864 = vmax.f32 %v5832, 0.0
      %v5865 = vmax.f32 %v5834, 0.0
      %v5866 = vmax.f32 %v5653, 0.0
      %v5867 = vmax.f32 %v5655, 0.0
      %v5868 = vmax.f32 %v5714, 0.0
      %v5869 = vmax.f32 %v5716, 0.0
      %v5870 = vmax.f32 %v5775, 0.0
      %v5871 = vmax.f32 %v5777, 0.0
      %v5872 = vmax.f32 %v5836, 0.0
      %v5873 = vmax.f32 %v5838, 0.0
      %v5874 = vmax.f32 %v5659, 0.0
      %v5875 = vmax.f32 %v5661, 0.0
      %v5876 = vmax.f32 %v5720, 0.0
      %v5877 = vmax.f32 %v5722, 0.0
      %v5878 = vmax.f32 %v5781, 0.0
      %v5879 = vmax.f32 %v5783, 0.0
      %v5880 = vmax.f32 %v5842, 0.0
      %v5881 = vmax.f32 %v5844, 0.0
      %v5882 = vmax.f32 %v5663, 0.0
      %v5883 = vmax.f32 %v5665, 0.0
      %v5884 = vmax.f32 %v5724, 0.0
      %v5885 = vmax.f32 %v5726, 0.0
      %v5886 = vmax.f32 %v5785, 0.0
      %v5887 = vmax.f32 %v5787, 0.0
      %v5888 = vmax.f32 %v5846, 0.0
      %v5889 = vmax.f32 %v5848, 0.0
      %v5890 = vmax.f32 %v5669, 0.0
      %v5891 = vmax.f32 %v5671, 0.0
      %v5892 = vmax.f32 %v5730, 0.0
      %v5893 = vmax.f32 %v5732, 0.0
      %v5894 = vmax.f32 %v5791, 0.0
      %v5895 = vmax.f32 %v5793, 0.0
      %v5896 = vmax.f32 %v5852, 0.0
      %v5897 = vmax.f32 %v5854, 0.0
      %s5898 = scalar_lea.vmem %s3, 60
      %v5899 = vld [vmem:[%s5898] sm:$0xf]
      %v5900 = vld [vmem:[%s5898 + $0x4] sm:$0xf]
      %v5901 = vld [vmem:[%s5898 + $0x8] sm:$0xf]
      %v5902 = vld [vmem:[%s5898 + $0xc] sm:$0xf]
      %v5903 = vld [vmem:[%s5898 + $0x10] sm:$0xf]
      %v5904 = vpack.c.bf16 %v5866, %v5858
      %v5905 = vpack.c.bf16 %v5867, %v5859
      %v5906 = vpack.c.bf16 %v5868, %v5860
      %v5907 = vpack.c.bf16 %v5869, %v5861
      %v5908 = vpack.c.bf16 %v5870, %v5862
      %v5909 = vpack.c.bf16 %v5871, %v5863
      %v5910 = vpack.c.bf16 %v5872, %v5864
      %v5911 = vpack.c.bf16 %v5873, %v5865
      %v5912 = vpack.c.bf16 %v5882, %v5874
      %v5913 = vpack.c.bf16 %v5883, %v5875
      %v5914 = vpack.c.bf16 %v5884, %v5876
      %v5915 = vpack.c.bf16 %v5885, %v5877
      %v5916 = vpack.c.bf16 %v5886, %v5878
      %v5917 = vpack.c.bf16 %v5887, %v5879
      %v5918 = vpack.c.bf16 %v5888, %v5880
      %v5919 = vpack.c.bf16 %v5889, %v5881
      %v5920 = vpack.c.bf16 %v5890, %v5890
      %v5921 = vpack.c.bf16 %v5891, %v5891
      %v5922 = vpack.c.bf16 %v5892, %v5892
      %v5923 = vpack.c.bf16 %v5893, %v5893
      %v5924 = vpack.c.bf16 %v5894, %v5894
      %v5925 = vpack.c.bf16 %v5895, %v5895
      %v5926 = vpack.c.bf16 %v5896, %v5896
      %v5927 = vpack.c.bf16 %v5897, %v5897
      %s5928 = scalar_lea.vmem %s4, 120
      %v5929 = vld [vmem:[%s5928] sm:$0xff]
      %v5930 = vld [vmem:[%s5928 + $0x8] sm:$0xff]
      %v5931 = vld [vmem:[%s5928 + $0x10] sm:$0xff]
      %v5932 = vld [vmem:[%s5928 + $0x18] sm:$0xff]
      %v5933 = vld [vmem:[%s5928 + $0x20] sm:$0xff]
      %5935 = vset.pattern.permute.xlu0 0
      %5936 = vperm.xlu0 %5935, %v5929
      %v5937 = vpop.permute.xlu0 %5936
      %5940 = vset.pattern.permute.xlu0 0
      %5941 = vperm.xlu0 %5940, %v5930
      %v5942 = vpop.permute.xlu0 %5941
      %5944 = vset.pattern.permute.xlu0 0
      %5945 = vperm.xlu0 %5944, %v5931
      %v5946 = vpop.permute.xlu0 %5945
      %5948 = vset.pattern.permute.xlu0 0
      %5949 = vperm.xlu0 %5948, %v5932
      %v5950 = vpop.permute.xlu0 %5949
      %5952 = vset.pattern.permute.xlu0 0
      %5953 = vperm.xlu0 %5952, %v5933
      %v5954 = vpop.permute.xlu0 %5953
      %v5960 = vunpack.c.l.b16 %v5899
      %v5961 = vunpack.c.l.b16 %v5900
      %v5962 = vunpack.c.l.b16 %v5901
      %v5963 = vunpack.c.l.b16 %v5902
      %v5964 = vunpack.c.l.b16 %v5903
      %v5965 = vpack.c.b16 %v5961, %v5960
      %v5966 = vpack.c.b16 %v5963, %v5962
      %v5967 = vpack.c.b16 %v5964, %v5964
      %v5969 = vsel %vm4797, %v5965, 0
      %v5972 = vsel %vm4797, %v5966, 0
      %v5975 = vsel %vm4797, %v5967, 0
      %v5978 = vsel %vm4807, %v5920, 0
      %v5981 = vsel %vm4807, %v5921, 0
      %v5984 = vsel %vm4807, %v5922, 0
      %v5987 = vsel %vm4807, %v5923, 0
      %v5990 = vsel %vm4807, %v5924, 0
      %v5993 = vsel %vm4807, %v5925, 0
      %v5996 = vsel %vm4807, %v5926, 0
      %v5999 = vsel %vm4807, %v5927, 0
      %6001 = vmatprep.subr.bf16.mxu0 %v5905
      %6002 = vmatpush1.bf16.msra.mxu0 %v5904
      %6003 = vmatprep.subr.bf16.mxu0 %v5913
      %6004 = vmatpush1.bf16.msra.mxu0 %v5912
      %6005 = vmatprep.subr.bf16.mxu0 %v5981
      %6006 = vmatpush1.bf16.msra.mxu0 %v5978
      %6007 = vmatprep.subr.bf16.mxu0 0
      %6008 = vmatpush1.bf16.msra.mxu0 0
      %6009 = vmatprep.subr.bf16.mxu0 0
      %6010 = vmatpush1.bf16.msra.mxu0 0
      %6011 = vmatprep.subr.bf16.mxu0 0
      %6012 = vmatpush1.bf16.msra.mxu0 0
      %6013 = vmatprep.subr.bf16.mxu0 0
      %6014 = vmatpush1.bf16.msra.mxu0 0
      %6015 = vmatprep.subr.bf16.mxu0 0
      %6016 = vmatpush1.bf16.msra.mxu0 0
      %6017 = vmatprep.subr.bf16.mxu0 0
      %6018 = vmatpush1.bf16.msra.mxu0 0
      %6019 = vmatprep.subr.bf16.mxu0 0
      %6020 = vmatpush1.bf16.msra.mxu0 0
      %6021 = vmatprep.subr.bf16.mxu0 0
      %6022 = vmatpush1.bf16.msra.mxu0 0
      %6023 = vmatprep.subr.bf16.mxu0 0
      %6024 = vmatpush1.bf16.msra.mxu0 0
      %6025 = vmatprep.subr.bf16.mxu0 0
      %6026 = vmatpush1.bf16.msra.mxu0 0
      %6027 = vmatprep.subr.bf16.mxu0 0
      %6028 = vmatpush1.bf16.msra.mxu0 0
      %6029 = vmatprep.subr.bf16.mxu0 0
      %6030 = vmatpush1.bf16.msra.mxu0 0
      %6031 = vmatprep.subr.bf16.mxu0 0
      %6032 = vmatpush1.bf16.msra.mxu0 0
      %6033 = vmatprep.mubr.bf16.mxu0 0
      %6034 = vmatmul.mubr.bf16.gmra.mrb[0].mxu0 %v5969
      %v6035 = vpop.f32.mrb[0].mxu0
      %v6036 = vadd.f32 %v5937, %v6035
      %v6037 = vpop.f32.mrb[0].mxu0
      %v6038 = vadd.f32 %v5937, %v6037
      %v6039 = vpop.f32.mrb[0].mxu0
      %v6040 = vpop.f32.mrb[0].mxu0
      %6041 = vmatprep.mubr.bf16.mxu0 0
      %6042 = vmatmul.mubr.bf16.gmra.mrb[0].mxu0 %v5972
      %v6043 = vpop.f32.mrb[0].mxu0
      %v6044 = vpop.f32.mrb[0].mxu0
      %v6045 = vpop.f32.mrb[0].mxu0
      %v6046 = vpop.f32.mrb[0].mxu0
      %6047 = vmatprep.mubr.bf16.mxu0 0
      %6048 = vmatmul.mubr.bf16.gmra.mrb[0].mxu0 %v5975
      %v6049 = vpop.f32.mrb[0].mxu0
      %v6050 = vpop.f32.mrb[0].mxu0
      %v6051 = vpop.f32.mrb[0].mxu0
      %v6052 = vpop.f32.mrb[0].mxu0
      %6053 = vdwg.mxu0
      %6054 = vmatprep.subr.bf16.mxu0 %v5907
      %6055 = vmatpush1.bf16.msra.mxu0 %v5906
      %6056 = vmatprep.subr.bf16.mxu0 %v5915
      %6057 = vmatpush1.bf16.msra.mxu0 %v5914
      %6058 = vmatprep.subr.bf16.mxu0 %v5987
      %6059 = vmatpush1.bf16.msra.mxu0 %v5984
      %6060 = vmatprep.subr.bf16.mxu0 0
      %6061 = vmatpush1.bf16.msra.mxu0 0
      %6062 = vmatprep.subr.bf16.mxu0 0
      %6063 = vmatpush1.bf16.msra.mxu0 0
      %6064 = vmatprep.subr.bf16.mxu0 0
      %6065 = vmatpush1.bf16.msra.mxu0 0
      %6066 = vmatprep.subr.bf16.mxu0 0
      %6067 = vmatpush1.bf16.msra.mxu0 0
      %6068 = vmatprep.subr.bf16.mxu0 0
      %6069 = vmatpush1.bf16.msra.mxu0 0
      %6070 = vmatprep.subr.bf16.mxu0 0
      %6071 = vmatpush1.bf16.msra.mxu0 0
      %6072 = vmatprep.subr.bf16.mxu0 0
      %6073 = vmatpush1.bf16.msra.mxu0 0
      %6074 = vmatprep.subr.bf16.mxu0 0
      %6075 = vmatpush1.bf16.msra.mxu0 0
      %6076 = vmatprep.subr.bf16.mxu0 0
      %6077 = vmatpush1.bf16.msra.mxu0 0
      %6078 = vmatprep.subr.bf16.mxu0 0
      %6079 = vmatpush1.bf16.msra.mxu0 0
      %6080 = vmatprep.subr.bf16.mxu0 0
      %6081 = vmatpush1.bf16.msra.mxu0 0
      %6082 = vmatprep.subr.bf16.mxu0 0
      %6083 = vmatpush1.bf16.msra.mxu0 0
      %6084 = vmatprep.subr.bf16.mxu0 0
      %6085 = vmatpush1.bf16.msra.mxu0 0
      %6086 = vmatprep.mubr.bf16.mxu0 0
      %6087 = vmatmul.mubr.bf16.gmra.mrb[0].mxu0 %v5969
      %v6088 = vpop.f32.mrb[0].mxu0
      %v6089 = vadd.f32 %v5937, %v6088
      %v6090 = vpop.f32.mrb[0].mxu0
      %v6091 = vadd.f32 %v5937, %v6090
      %v6092 = vpop.f32.mrb[0].mxu0
      %v6093 = vpop.f32.mrb[0].mxu0
      %6094 = vmatprep.mubr.bf16.mxu0 0
      %6095 = vmatmul.mubr.bf16.gmra.mrb[0].mxu0 %v5972
      %v6096 = vpop.f32.mrb[0].mxu0
      %v6097 = vpop.f32.mrb[0].mxu0
      %v6098 = vpop.f32.mrb[0].mxu0
      %v6099 = vpop.f32.mrb[0].mxu0
      %6100 = vmatprep.mubr.bf16.mxu0 0
      %6101 = vmatmul.mubr.bf16.gmra.mrb[0].mxu0 %v5975
      %v6102 = vpop.f32.mrb[0].mxu0
      %v6103 = vpop.f32.mrb[0].mxu0
      %v6104 = vpop.f32.mrb[0].mxu0
      %v6105 = vpop.f32.mrb[0].mxu0
      %6106 = vdwg.mxu0
      %6107 = vmatprep.subr.bf16.mxu0 %v5909
      %6108 = vmatpush1.bf16.msra.mxu0 %v5908
      %6109 = vmatprep.subr.bf16.mxu0 %v5917
      %6110 = vmatpush1.bf16.msra.mxu0 %v5916
      %6111 = vmatprep.subr.bf16.mxu0 %v5993
      %6112 = vmatpush1.bf16.msra.mxu0 %v5990
      %6113 = vmatprep.subr.bf16.mxu0 0
      %6114 = vmatpush1.bf16.msra.mxu0 0
      %6115 = vmatprep.subr.bf16.mxu0 0
      %6116 = vmatpush1.bf16.msra.mxu0 0
      %6117 = vmatprep.subr.bf16.mxu0 0
      %6118 = vmatpush1.bf16.msra.mxu0 0
      %6119 = vmatprep.subr.bf16.mxu0 0
      %6120 = vmatpush1.bf16.msra.mxu0 0
      %6121 = vmatprep.subr.bf16.mxu0 0
      %6122 = vmatpush1.bf16.msra.mxu0 0
      %6123 = vmatprep.subr.bf16.mxu0 0
      %6124 = vmatpush1.bf16.msra.mxu0 0
      %6125 = vmatprep.subr.bf16.mxu0 0
      %6126 = vmatpush1.bf16.msra.mxu0 0
      %6127 = vmatprep.subr.bf16.mxu0 0
      %6128 = vmatpush1.bf16.msra.mxu0 0
      %6129 = vmatprep.subr.bf16.mxu0 0
      %6130 = vmatpush1.bf16.msra.mxu0 0
      %6131 = vmatprep.subr.bf16.mxu0 0
      %6132 = vmatpush1.bf16.msra.mxu0 0
      %6133 = vmatprep.subr.bf16.mxu0 0
      %6134 = vmatpush1.bf16.msra.mxu0 0
      %6135 = vmatprep.subr.bf16.mxu0 0
      %6136 = vmatpush1.bf16.msra.mxu0 0
      %6137 = vmatprep.subr.bf16.mxu0 0
      %6138 = vmatpush1.bf16.msra.mxu0 0
      %6139 = vmatprep.mubr.bf16.mxu0 0
      %6140 = vmatmul.mubr.bf16.gmra.mrb[0].mxu0 %v5969
      %v6141 = vpop.f32.mrb[0].mxu0
      %v6142 = vadd.f32 %v5937, %v6141
      %v6143 = vpop.f32.mrb[0].mxu0
      %v6144 = vadd.f32 %v5937, %v6143
      %v6145 = vpop.f32.mrb[0].mxu0
      %v6146 = vpop.f32.mrb[0].mxu0
      %6147 = vmatprep.mubr.bf16.mxu0 0
      %6148 = vmatmul.mubr.bf16.gmra.mrb[0].mxu0 %v5972
      %v6149 = vpop.f32.mrb[0].mxu0
      %v6150 = vpop.f32.mrb[0].mxu0
      %v6151 = vpop.f32.mrb[0].mxu0
      %v6152 = vpop.f32.mrb[0].mxu0
      %6153 = vmatprep.mubr.bf16.mxu0 0
      %6154 = vmatmul.mubr.bf16.gmra.mrb[0].mxu0 %v5975
      %v6155 = vpop.f32.mrb[0].mxu0
      %v6156 = vpop.f32.mrb[0].mxu0
      %v6157 = vpop.f32.mrb[0].mxu0
      %v6158 = vpop.f32.mrb[0].mxu0
      %6159 = vdwg.mxu0
      %6160 = vmatprep.subr.bf16.mxu0 %v5911
      %6161 = vmatpush1.bf16.msra.mxu0 %v5910
      %6162 = vmatprep.subr.bf16.mxu0 %v5919
      %6163 = vmatpush1.bf16.msra.mxu0 %v5918
      %6164 = vmatprep.subr.bf16.mxu0 %v5999
      %6165 = vmatpush1.bf16.msra.mxu0 %v5996
      %6166 = vmatprep.subr.bf16.mxu0 0
      %6167 = vmatpush1.bf16.msra.mxu0 0
      %6168 = vmatprep.subr.bf16.mxu0 0
      %6169 = vmatpush1.bf16.msra.mxu0 0
      %6170 = vmatprep.subr.bf16.mxu0 0
      %6171 = vmatpush1.bf16.msra.mxu0 0
      %6172 = vmatprep.subr.bf16.mxu0 0
      %6173 = vmatpush1.bf16.msra.mxu0 0
      %6174 = vmatprep.subr.bf16.mxu0 0
      %6175 = vmatpush1.bf16.msra.mxu0 0
      %6176 = vmatprep.subr.bf16.mxu0 0
      %6177 = vmatpush1.bf16.msra.mxu0 0
      %6178 = vmatprep.subr.bf16.mxu0 0
      %6179 = vmatpush1.bf16.msra.mxu0 0
      %6180 = vmatprep.subr.bf16.mxu0 0
      %6181 = vmatpush1.bf16.msra.mxu0 0
      %6182 = vmatprep.subr.bf16.mxu0 0
      %6183 = vmatpush1.bf16.msra.mxu0 0
      %6184 = vmatprep.subr.bf16.mxu0 0
      %6185 = vmatpush1.bf16.msra.mxu0 0
      %6186 = vmatprep.subr.bf16.mxu0 0
      %6187 = vmatpush1.bf16.msra.mxu0 0
      %6188 = vmatprep.subr.bf16.mxu0 0
      %6189 = vmatpush1.bf16.msra.mxu0 0
      %6190 = vmatprep.subr.bf16.mxu0 0
      %6191 = vmatpush1.bf16.msra.mxu0 0
      %6192 = vmatprep.mubr.bf16.mxu0 0
      %6193 = vmatmul.mubr.bf16.gmra.mrb[0].mxu0 %v5969
      %v6194 = vpop.f32.mrb[0].mxu0
      %v6195 = vadd.f32 %v5937, %v6194
      %v6196 = vpop.f32.mrb[0].mxu0
      %v6197 = vadd.f32 %v5937, %v6196
      %v6198 = vpop.f32.mrb[0].mxu0
      %v6199 = vpop.f32.mrb[0].mxu0
      %6200 = vmatprep.mubr.bf16.mxu0 0
      %6201 = vmatmul.mubr.bf16.gmra.mrb[0].mxu0 %v5972
      %v6202 = vpop.f32.mrb[0].mxu0
      %v6203 = vpop.f32.mrb[0].mxu0
      %v6204 = vpop.f32.mrb[0].mxu0
      %v6205 = vpop.f32.mrb[0].mxu0
      %6206 = vmatprep.mubr.bf16.mxu0 0
      %6207 = vmatmul.mubr.bf16.gmra.mrb[0].mxu0 %v5975
      %v6208 = vpop.f32.mrb[0].mxu0
      %v6209 = vpop.f32.mrb[0].mxu0
      %v6210 = vpop.f32.mrb[0].mxu0
      %v6211 = vpop.f32.mrb[0].mxu0
      %6212 = vdwg.mxu0
      %6213 = vst [vmem:[%s226] sm:$0xff] %v6036
      %6214 = vst [vmem:[%s226 + $0x8] sm:$0xff] %v6038
      %6215 = vst [vmem:[%s226 + $0x10] sm:$0xff] %v6089
      %6216 = vst [vmem:[%s226 + $0x18] sm:$0xff] %v6091
      %6217 = vst [vmem:[%s226 + $0x20] sm:$0xff] %v6142
      %6218 = vst [vmem:[%s226 + $0x28] sm:$0xff] %v6144
      %6219 = vst [vmem:[%s226 + $0x30] sm:$0xff] %v6195
      %6220 = vst [vmem:[%s226 + $0x38] sm:$0xff] %v6197
      %s6221 = smul.u32 8, %s16
      %p6222 = scmp.lt.s32.totalorder %s6221, 31
      %s6223 = scalar_select %p6222, %s6221, 31
      %s6224 = smul.addr %s6223, 8
      %s6225 = scalar_lea.vmem %s5, %s6224
      // Predicated region
      $region41: #{relu_pe_forward.1} parent=39 // pred_check
        %p6226 = pneg %p144
      $region42: #{relu_pe_forward.1} parent=39 // pred_check_branch
        %6228 = sbr.rel (%p6226) target = $region44
      $region43: #{relu_pe_forward.1} parent=39 // pred_region
        %s6229 = smul.u32 8, %s16
      $region44: #{relu_pe_forward.1} parent=39 // pred_fallthru
        _
    $region40: #{relu_pe_forward.1} parent=5 // pred_fallthru
      _
    %p6230 = scmp.le.s32.totalorder 2, %s11
    // Predicated region
    $region45: #{relu_pe_forward.1} parent=5 // pred_check
      %p6231 = pneg %p6230
    $region46: #{relu_pe_forward.1} parent=5 // pred_check_branch
      %6233 = sbr.rel (%p6231) target = $region48
    $region47: #{relu_pe_forward.1} parent=5 // pred_region
      %s6234 = ssub.s32 %s11, 2
      // Predicated region
      $region49: #{relu_pe_forward.1} parent=47 // pred_check
        %p6235 = pneg %p150
      $region50: #{relu_pe_forward.1} parent=47 // pred_check_branch
        %6237 = sbr.rel (%p6235) target = $region52
      $region51: #{relu_pe_forward.1} parent=47 // pred_region
        %s6238 = smul.u32 8, %s17
        %p6239 = scmp.lt.s32.totalorder %s6238, 31
        %s6240 = scalar_select %p6239, %s6238, 31
        %s6241 = smul.addr %s6240, 8
        %s6242 = scalar_lea.vmem %s5, %s6241
      $region52: #{relu_pe_forward.1} parent=47 // pred_fallthru
        _
    $region48: #{relu_pe_forward.1} parent=5 // pred_fallthru
      _
  $region6: #{relu_pe_forward.1} parent=0 // loop_footer
    %s15 = sadd.s32 1, %s11
  $region7: #{relu_pe_forward.1} parent=0 // loop_footer_branch
    %10 = sbr.rel target = $region3
  $region8: #{relu_pe_forward.1} parent=0 // loop_exit
    _

</llo_original>
